<compile_context>
chip_gen: v5e
topology: v5e:2x2
jax: 0.10.0
libtpu: 0.0.40
codegen_flags: <defaults>
</compile_context>

<pallas_src>
import math
import functools

import jax
import jax.numpy as jnp
from jax.experimental import pallas as pl
from jax.experimental.pallas import tpu as pltpu

EPS = 1e-5                      # PyTorch BatchNorm2d default eps
NEG_FILL = -100000000000.0      # value used by the task masking in forward()
LANE = 128                      # TPU lane width


def _round_up(x, m):
    return ((x + m - 1) // m) * m


def _k_layout(k):
    """Pad the folded K (= kh*kw*cin) and pick the per-step K block."""
    if k <= 512:
        kp = _round_up(k, LANE)
        return kp, kp                       # single MXU push, no K loop
    kp = _round_up(k, 256)                  # 256-deep blocks fill v6e/v7x MXU
    return kp, 256


# ----------------------- fused conv + BN (+residual) (+ReLU) kernel ---------

def _conv_bn_kernel(*refs, apply_relu, has_residual, inv_rows, n_k):
    a_ref, w_ref, g_ref, b_ref = refs[:4]
    pos = 4
    res_ref = None
    if has_residual:
        res_ref = refs[pos]
        pos += 1
    o_ref = refs[pos]
    pos += 1
    acc_ref = refs[pos] if n_k > 1 else None

    def epilogue(x):                         # x: (M, block_cout) f32
        # One-sweep batch statistics: sum and sum-of-squares.
        s1 = jnp.sum(x, axis=0, keepdims=True)
        s2 = jnp.sum(x * x, axis=0, keepdims=True)
        mean = s1 * inv_rows
        var = jnp.maximum(s2 * inv_rows - mean * mean, 0.0)
        y = (x - mean) * jax.lax.rsqrt(var + EPS) * g_ref[...] + b_ref[...]
        if has_residual:
            y = y + res_ref[...].astype(jnp.float32)
        if apply_relu:
            y = jnp.maximum(y, 0.0)
        o_ref[...] = y.astype(o_ref.dtype)   # bf16 store, lane-dense

    if n_k == 1:
        # Whole K fits one block: no accumulator scratch needed.
        epilogue(jnp.dot(a_ref[...], w_ref[...],
                         preferred_element_type=jnp.float32))
    else:
        k = pl.program_id(1)

        @pl.when(k == 0)
        def _init():
            acc_ref[...] = jnp.zeros_like(acc_ref)

        acc_ref[...] += jnp.dot(a_ref[...], w_ref[...],
                                preferred_element_type=jnp.float32)

        @pl.when(k == n_k - 1)
        def _final():
            epilogue(acc_ref[...])


def _im2col(x_nhwc, ksize, stride, pad, cin, k_pad):
    """(N,H,W,C>=cin) -> bf16 (N*Ho*Wo, k_pad) folded-K im2col (JAX glue)."""
    N, H, W, _ = x_nhwc.shape
    x = x_nhwc[..., :cin]                    # drop any lane padding
    if pad:
        x = jnp.pad(x, ((0, 0), (pad, pad), (pad, pad), (0, 0)))
    Ho = (H + 2 * pad - ksize) // stride + 1
    Wo = (W + 2 * pad - ksize) // stride + 1
    cols = []
    for ki in range(ksize):
        for kj in range(ksize):
            cols.append(
                x[:, ki:ki + stride * Ho:stride, kj:kj + stride * Wo:stride, :]
                .reshape(N * Ho * Wo, cin))
    a = jnp.concatenate(cols, axis=1)        # (M, kh*kw*cin)
    a = jnp.pad(a, ((0, 0), (0, k_pad - a.shape[1])))
    return a.astype(jnp.bfloat16), Ho, Wo


def conv_bn_act(x_nhwc, conv, *, stride, apply_relu, residual=None):
    """Fused conv (folded-K im2col matmul) + batch-stat BN [+residual] [+ReLU]."""
    ksize, pad, cin = conv["ksize"], conv["pad"], conv["cin"]
    K_p, block_k = conv["K_p"], conv["block_k"]
    N = x_nhwc.shape[0]

    a, Ho, Wo = _im2col(x_nhwc, ksize, stride, pad, cin, K_p)
    M = a.shape[0]
    cout_p = conv["w"].shape[1]
    block_cout = 256 if cout_p % 256 == 0 else LANE
    n_k = K_p // block_k
    n_c = cout_p // block_cout
    has_residual = residual is not None

    inputs = [a, conv["w"], conv["gamma"], conv["beta"]]
    in_specs = [
        pl.BlockSpec((M, block_k), lambda c, k: (0, k)),
        pl.BlockSpec((block_k, block_cout), lambda c, k: (k, c)),
        pl.BlockSpec((1, block_cout), lambda c, k: (0, c)),
        pl.BlockSpec((1, block_cout), lambda c, k: (0, c)),
    ]
    if has_residual:
        inputs.append(residual.reshape(M, cout_p).astype(jnp.bfloat16))
        in_specs.append(pl.BlockSpec((M, block_cout), lambda c, k: (0, c)))

    scratch = [] if n_k == 1 else [pltpu.VMEM((M, block_cout), jnp.float32)]

    # Explicit VMEM budget: double-buffered blocks + accumulator + headroom,
    # capped at v7x's 64 MiB physical VMEM.
    blk_bytes = (M * block_k * 2 + block_k * block_cout * 2
                 + 2 * block_cout * 4
                 + M * block_cout * 2 * (1 + int(has_residual)))
    footprint = 2 * blk_bytes + (M * block_cout * 4 if n_k > 1 else 0)
    vmem_limit = int(min(max(4 * footprint, 32 << 20), 64 << 20))

    out = pl.pallas_call(
        functools.partial(_conv_bn_kernel, apply_relu=apply_relu,
                          has_residual=has_residual, inv_rows=1.0 / M, n_k=n_k),
        out_shape=jax.ShapeDtypeStruct((M, cout_p), jnp.bfloat16),
        grid=(n_c, n_k),
        in_specs=in_specs,
        out_specs=pl.BlockSpec((M, block_cout), lambda c, k: (0, c)),
        scratch_shapes=scratch,
        compiler_params=pltpu.CompilerParams(
            dimension_semantics=("parallel", "arbitrary"),
            vmem_limit_bytes=vmem_limit),
    )(*inputs)
    return out.reshape(N, Ho, Wo, cout_p)


# ----------------------- fused avgpool + linear + task-mask kernel ----------

def _head_kernel(x_ref, w_ref, b_ref, o_ref, *, offset1, offset2):
    pooled = jnp.mean(x_ref[...].astype(jnp.float32), axis=1)   # (N, Cp)
    y = jnp.dot(pooled.astype(jnp.bfloat16), w_ref[...],
                preferred_element_type=jnp.float32) + b_ref[...]
    col = jax.lax.broadcasted_iota(jnp.int32, y.shape, 1)
    mask = jnp.zeros(y.shape, jnp.bool_)
    if offset1 > 0:
        mask = mask | (col < offset1)
    if offset2 < 100:                    # hard-coded 100 as in the reference
        mask = mask | ((col >= offset2) & (col < 100))
    o_ref[...] = jnp.where(mask, NEG_FILL, y)


def head_forward(x_pooled_in, w_t_p, bias_p, offset1, offset2, num_classes):
    N, HW, Cp = x_pooled_in.shape
    NCp = w_t_p.shape[1]
    out = pl.pallas_call(
        functools.partial(_head_kernel, offset1=offset1, offset2=offset2),
        out_shape=jax.ShapeDtypeStruct((N, NCp), jnp.float32),
        in_specs=[pl.BlockSpec((N, HW, Cp), lambda: (0, 0, 0)),
                  pl.BlockSpec((Cp, NCp), lambda: (0, 0)),
                  pl.BlockSpec((1, NCp), lambda: (0, 0))],
        out_specs=pl.BlockSpec((N, NCp), lambda: (0, 0)),
    )(x_pooled_in, w_t_p, bias_p)
    return out[:, :num_classes]


# ----------------------- parameters (pre-padded, pre-transposed) ------------

def _prep_conv_bn(key, cout, cin, ksize):
    fan_in = cin * ksize * ksize
    std = math.sqrt(2.0 / fan_in)
    w = jax.random.normal(key, (cout, cin, ksize, ksize), jnp.float32) * std
    K = ksize * ksize * cin
    K_p, block_k = _k_layout(K)
    cout_p = _round_up(cout, LANE)
    # (Cout,Cin,kh,kw) -> (kh*kw*Cin, Cout): same (ki,kj,c) order as _im2col.
    wt = jnp.transpose(w, (2, 3, 1, 0)).reshape(K, cout)
    wt = jnp.pad(wt, ((0, K_p - K), (0, cout_p - cout))).astype(jnp.bfloat16)
    gamma = jnp.pad(jnp.ones((cout,), jnp.float32),
                    (0, cout_p - cout)).reshape(1, cout_p)
    beta = jnp.zeros((1, cout_p), jnp.float32)
    return {"w": wt, "gamma": gamma, "beta": beta,
            "ksize": ksize, "pad": 1 if ksize == 3 else 0,
            "cin": cin, "K_p": K_p, "block_k": block_k}


def init_resnet_params(key, num_blocks, num_classes, nf):
    keys = jax.random.split(key, 64)
    ki = iter(range(64))

    params = {"conv1": _prep_conv_bn(keys[next(ki)], nf, 3, 3), "layers": []}

    in_planes = nf
    cfg = [(nf * 1, num_blocks[0], 1), (nf * 2, num_blocks[1], 2),
           (nf * 4, num_blocks[2], 2), (nf * 8, num_blocks[3], 2)]
    for planes, nb, first_stride in cfg:
        blocks = []
        for s in [first_stride] + [1] * (nb - 1):
            blk = {
                "stride": s,
                "conv1": _prep_conv_bn(keys[next(ki)], planes, in_planes, 3),
                "conv2": _prep_conv_bn(keys[next(ki)], planes, planes, 3),
                "shortcut": (_prep_conv_bn(keys[next(ki)], planes, in_planes, 1)
                             if (s != 1 or in_planes != planes) else None),
            }
            blocks.append(blk)
            in_planes = planes
        params["layers"].append(blocks)

    # Linear head: weight pre-transposed + padded once (no per-forward .T).
    feat = nf * 8
    feat_p = _round_up(feat, LANE)
    nc_p = _round_up(num_classes, LANE)
    bound = 1.0 / math.sqrt(feat)
    w = jax.random.uniform(keys[next(ki)], (num_classes, feat), jnp.float32,
                           -bound, bound)
    b = jax.random.uniform(keys[next(ki)], (num_classes,), jnp.float32,
                           -bound, bound)
    w_t = jnp.pad(w.T, ((0, feat_p - feat),
                        (0, nc_p - num_classes))).astype(jnp.bfloat16)
    b_p = jnp.pad(b, (0, nc_p - num_classes)).reshape(1, nc_p)
    params["head"] = {"w_t": w_t, "b": b_p}
    return params


# ----------------------- forward ---------------------------------------------

def basic_block_forward(x_nhwc, blk):
    s = blk["stride"]
    h = conv_bn_act(x_nhwc, blk["conv1"], stride=s, apply_relu=True)
    if blk["shortcut"] is not None:
        sc = conv_bn_act(x_nhwc, blk["shortcut"], stride=s, apply_relu=False)
    else:
        sc = x_nhwc
    # conv2 + bn2 + residual add + ReLU fused in one kernel.
    return conv_bn_act(h, blk["conv2"], stride=1, apply_relu=True, residual=sc)


def resnet_forward(x, params, task_id, num_classes):
    bsz = x.shape[0]
    x = x.reshape(bsz, 3, 32, 32)                           # x.view(bsz,3,32,32)
    x = jnp.transpose(x, (0, 2, 3, 1)).astype(jnp.float32)  # NCHW -> NHWC (C=3)

    out = conv_bn_act(x, params["conv1"], stride=1, apply_relu=True)
    for layer in params["layers"]:
        for blk in layer:
            out = basic_block_forward(out, blk)

    N, H, W, Cp = out.shape                                 # H = W = 4
    offset1 = int((task_id - 1) * 5)
    offset2 = int(task_id * 5)
    logits = head_forward(out.reshape(N, H * W, Cp), params["head"]["w_t"],
                          params["head"]["b"], offset1, offset2, num_classes)
    return logits


# ----------------------- main -------------------------------------------------

if __name__ == "__main__":
    num_blocks = [1, 1, 1, 1]       # small ResNet for a quick synthetic test
    num_classes = 100
    nf = 4
    task_id = 2                     # masks columns [0:5) and [10:100)

    key = jax.random.PRNGKey(0)
    pkey, xkey = jax.random.split(key)
    params = init_resnet_params(pkey, num_blocks, num_classes, nf)

    x = jax.random.normal(xkey, (2, 3, 32, 32), jnp.float32)

    logits = resnet_forward(x, params, task_id, num_classes)
    logits = jax.block_until_ready(logits)

    assert logits.shape == (2, num_classes)
    print("KERNEL_OK")
</pallas_src>

<mosaic_0001>
module attributes {stable_mosaic.version = 11 : i64} {
  func.func @_conv_bn_kernel(%arg0: i32, %arg1: i32, %arg2: memref<2048x128xbf16, #tpu.memory_space<vmem>>, %arg3: memref<128x128xbf16, #tpu.memory_space<vmem>>, %arg4: memref<1x128xf32, #tpu.memory_space<vmem>>, %arg5: memref<1x128xf32, #tpu.memory_space<vmem>>, %arg6: memref<2048x128xbf16, #tpu.memory_space<vmem>>) attributes {dimension_semantics = [#tpu.dimension_semantics<parallel>, #tpu.dimension_semantics<arbitrary>], iteration_bounds = array<i64: 1, 1>, scalar_prefetch = 0 : i64, scratch_operands = 0 : i64, tpu.core_type = #tpu.core_type<tc>, window_params = [{transform_indices = @transform_0, window_bounds = array<i64: 2048, 128>}, {transform_indices = @transform_1, window_bounds = array<i64: 128, 128>}, {transform_indices = @transform_2, window_bounds = array<i64: 1, 128>}, {transform_indices = @transform_3, window_bounds = array<i64: 1, 128>}, {transform_indices = @transform_4, window_bounds = array<i64: 2048, 128>}]} {
    %c0 = arith.constant 0 : index
    %c0_0 = arith.constant 0 : index
    %0 = vector.load %arg2[%c0, %c0_0] : memref<2048x128xbf16, #tpu.memory_space<vmem>>, vector<2048x128xbf16>
    %c0_1 = arith.constant 0 : index
    %c0_2 = arith.constant 0 : index
    %1 = vector.load %arg3[%c0_1, %c0_2] : memref<128x128xbf16, #tpu.memory_space<vmem>>, vector<128x128xbf16>
    %cst = arith.constant dense<0.000000e+00> : vector<2048x128xf32>
    %2 = tpu.matmul %0, %1, %cst {dimension_numbers = #tpu.dot_dimension_numbers<[1], [0], [0], [1], [0, 0, 1, 1], [], []>} : vector<2048x128xbf16>, vector<128x128xbf16>, vector<2048x128xf32> -> vector<2048x128xf32>
    %cst_3 = arith.constant dense<0.000000e+00> : vector<128xf32>
    %3 = vector.multi_reduction <add>, %2, %cst_3 [0] : vector<2048x128xf32> to vector<128xf32>
    %4 = vector.shape_cast %3 : vector<128xf32> to vector<1x128xf32>
    %5 = arith.mulf %2, %2 : vector<2048x128xf32>
    %cst_4 = arith.constant dense<0.000000e+00> : vector<128xf32>
    %6 = vector.multi_reduction <add>, %5, %cst_4 [0] : vector<2048x128xf32> to vector<128xf32>
    %7 = vector.shape_cast %6 : vector<128xf32> to vector<1x128xf32>
    %cst_5 = arith.constant 4.8828125E-4 : f32
    %8 = vector.broadcast %cst_5 : f32 to vector<1x128xf32>
    %9 = arith.mulf %4, %8 : vector<1x128xf32>
    %cst_6 = arith.constant 4.8828125E-4 : f32
    %10 = vector.broadcast %cst_6 : f32 to vector<1x128xf32>
    %11 = arith.mulf %7, %10 : vector<1x128xf32>
    %12 = arith.mulf %9, %9 : vector<1x128xf32>
    %13 = arith.subf %11, %12 : vector<1x128xf32>
    %cst_7 = arith.constant 0.000000e+00 : f32
    %14 = vector.broadcast %cst_7 : f32 to vector<1x128xf32>
    %15 = arith.maximumf %13, %14 : vector<1x128xf32>
    %16 = vector.broadcast %9 : vector<1x128xf32> to vector<2048x128xf32>
    %17 = arith.subf %2, %16 : vector<2048x128xf32>
    %cst_8 = arith.constant 9.99999974E-6 : f32
    %18 = vector.broadcast %cst_8 : f32 to vector<1x128xf32>
    %19 = arith.addf %15, %18 : vector<1x128xf32>
    %20 = math.rsqrt %19 : vector<1x128xf32>
    %21 = vector.broadcast %20 : vector<1x128xf32> to vector<2048x128xf32>
    %22 = arith.mulf %17, %21 : vector<2048x128xf32>
    %c0_9 = arith.constant 0 : index
    %c0_10 = arith.constant 0 : index
    %23 = vector.load %arg4[%c0_9, %c0_10] : memref<1x128xf32, #tpu.memory_space<vmem>>, vector<1x128xf32>
    %24 = vector.broadcast %23 : vector<1x128xf32> to vector<2048x128xf32>
    %25 = arith.mulf %22, %24 : vector<2048x128xf32>
    %c0_11 = arith.constant 0 : index
    %c0_12 = arith.constant 0 : index
    %26 = vector.load %arg5[%c0_11, %c0_12] : memref<1x128xf32, #tpu.memory_space<vmem>>, vector<1x128xf32>
    %27 = vector.broadcast %26 : vector<1x128xf32> to vector<2048x128xf32>
    %28 = arith.addf %25, %27 : vector<2048x128xf32>
    %cst_13 = arith.constant 0.000000e+00 : f32
    %29 = vector.broadcast %cst_13 : f32 to vector<2048x128xf32>
    %30 = arith.maximumf %28, %29 : vector<2048x128xf32>
    %31 = arith.truncf %30 : vector<2048x128xf32> to vector<2048x128xbf16>
    %c0_14 = arith.constant 0 : index
    %c0_15 = arith.constant 0 : index
    %32 = vector.load %arg6[%c0_14, %c0_15] : memref<2048x128xbf16, #tpu.memory_space<vmem>>, vector<2048x128xbf16>
    tpu.vector_store %arg6[%c0_14, %c0_15], %31 {strides = array<i32>} : memref<2048x128xbf16, #tpu.memory_space<vmem>>, vector<2048x128xbf16>,
    return
  }
  func.func @transform_0(%arg0: i32, %arg1: i32) -> (i32, i32) {
    %c0_i32 = arith.constant 0 : i32
    %c0_i32_0 = arith.constant 0 : i32
    return %c0_i32, %arg1 : i32, i32
  }
  func.func @transform_1(%arg0: i32, %arg1: i32) -> (i32, i32) {
    %c0_i32 = arith.constant 0 : i32
    return %arg1, %arg0 : i32, i32
  }
  func.func @transform_2(%arg0: i32, %arg1: i32) -> (i32, i32) {
    %c0_i32 = arith.constant 0 : i32
    %c0_i32_0 = arith.constant 0 : i32
    return %c0_i32, %arg0 : i32, i32
  }
  func.func @transform_3(%arg0: i32, %arg1: i32) -> (i32, i32) {
    %c0_i32 = arith.constant 0 : i32
    %c0_i32_0 = arith.constant 0 : i32
    return %c0_i32, %arg0 : i32, i32
  }
  func.func @transform_4(%arg0: i32, %arg1: i32) -> (i32, i32) {
    %c0_i32 = arith.constant 0 : i32
    %c0_i32_0 = arith.constant 0 : i32
    return %c0_i32, %arg0 : i32, i32
  }
}

</mosaic_0001>

<llo_original>
// kernel: tpu_custom_call.1
$region0: #{tpu_custom_call.1}
  #allocation0 [shape = 'u32[]', space=smem, size = 0x4, offset = 0x4, fixed_abs, tag = 'smem constant byte address 0x4 - core index']
  #allocation1 [shape = 'u32[72,128]{1,0:T(1,128)}', space=vmem, size = 0x9000, scoped, tag = 'internal scratch']
  %s0 = inlined_call_operand.hbm [shape: bf16[2048,128], index: 0, kind: input, shape index: {}]
  %s1 = inlined_call_operand.hbm [shape: bf16[128,128], index: 1, kind: input, shape index: {}]
  %s2 = inlined_call_operand.vmem [shape: f32[1,128], index: 2, kind: input, shape index: {}]
  %s3 = inlined_call_operand.vmem [shape: f32[1,128], index: 3, kind: input, shape index: {}]
  %s4 = inlined_call_operand.hbm [shape: bf16[2048,128], index: 4, kind: output, shape index: {}]
  %s5 = sld [smem:[#allocation0]]
  $region34: #{tpu_custom_call.1} parent=0
    _
  %s7 = ssub.s32 1, %s5
  %s8 = scalar_select 0, %s7, %s5
  $region1: #{tpu_custom_call.1} parent=0
    #allocation2 [shape = 'u8[524288]{0}', space=vmem, size = 0x80000, scoped, tag = 'input window, operand 0, single buffered']
    #allocation3 [shape = 's32[1]{0}', space=sflag, size = 0x4, scoped, tag = 'scoped memory for tpu_custom_call.1']
    #allocation4 [shape = 's32[1]{0}', space=sflag, size = 0x4, scoped, tag = 'scoped memory for tpu_custom_call.1']
    #allocation5 [shape = 'u8[32768]{0}', space=vmem, size = 0x8000, scoped, tag = 'input window, operand 1, single buffered']
    #allocation6 [shape = 's32[1]{0}', space=sflag, size = 0x4, scoped, tag = 'scoped memory for tpu_custom_call.1']
    #allocation7 [shape = 'u8[524288]{0}', space=vmem, size = 0x80000, scoped, tag = 'output window, operand 0, single buffered']
    %9 = vsyncpa [#allocation3], 0
    %10 = vsyncpa [#allocation6], 0
    %11 = vsyncpa [#allocation4], 0
    // Predicated region
    $region2: #{tpu_custom_call.1} parent=1 // pred_check
      _
    $region3: #{tpu_custom_call.1} parent=1 // pred_check_branch
      %13 = sbr.rel (0) target = $region5
    $region4: #{tpu_custom_call.1} parent=1 // pred_region
      %15 = vsyncadd [#allocation3], 0
      %s16 = sshll.u32 %s0, 4
      %s17 = int_to_ptr.hbm [resolvable:$true] %s16
      %s18 = sshll.u32 [#allocation2], 4
      %s19 = int_to_ptr.vmem [resolvable:$true] %s18
      %24 = dma.hbm_to_vmem [thread:$0]  %s17, 16384, %s19, [#allocation3], 64, 64, 4
    $region5: #{tpu_custom_call.1} parent=1 // pred_fallthru
      _
    // Predicated region
    $region6: #{tpu_custom_call.1} parent=1 // pred_check
      _
    $region7: #{tpu_custom_call.1} parent=1 // pred_check_branch
      %26 = sbr.rel (0) target = $region9
    $region8: #{tpu_custom_call.1} parent=1 // pred_region
      %28 = vsyncadd [#allocation6], 0
      %s29 = sshll.u32 %s1, 4
      %s30 = int_to_ptr.hbm [resolvable:$true] %s29
      %s31 = sshll.u32 [#allocation5], 4
      %s32 = int_to_ptr.vmem [resolvable:$true] %s31
      %37 = dma.hbm_to_vmem [thread:$0]  %s30, 1024, %s32, [#allocation6], 64, 64, 4
    $region9: #{tpu_custom_call.1} parent=1 // pred_fallthru
      _
    // Predicated region
    $region10: #{tpu_custom_call.1} parent=1 // pred_check
      _
    $region11: #{tpu_custom_call.1} parent=1 // pred_check_branch
      %39 = sbr.rel (0) target = $region13
    $region12: #{tpu_custom_call.1} parent=1 // pred_region
      _
    $region13: #{tpu_custom_call.1} parent=1 // pred_fallthru
      _
    // Predicated region
    $region14: #{tpu_custom_call.1} parent=1 // pred_check
      _
    $region15: #{tpu_custom_call.1} parent=1 // pred_check_branch
      %41 = sbr.rel (0) target = $region17
    $region16: #{tpu_custom_call.1} parent=1 // pred_region
      _
    $region17: #{tpu_custom_call.1} parent=1 // pred_fallthru
      _
    // Predicated region
    $region18: #{tpu_custom_call.1} parent=1 // pred_check
      _
    $region19: #{tpu_custom_call.1} parent=1 // pred_check_branch
      %43 = sbr.rel (0) target = $region21
    $region20: #{tpu_custom_call.1} parent=1 // pred_region
      %45 = dma.done [#allocation3], 16384
    $region21: #{tpu_custom_call.1} parent=1 // pred_fallthru
      _
    // Predicated region
    $region22: #{tpu_custom_call.1} parent=1 // pred_check
      _
    $region23: #{tpu_custom_call.1} parent=1 // pred_check_branch
      %47 = sbr.rel (0) target = $region25
    $region24: #{tpu_custom_call.1} parent=1 // pred_region
      %49 = dma.done [#allocation6], 1024
    $region25: #{tpu_custom_call.1} parent=1 // pred_fallthru
      _
    %v50 = vld [vmem:[#allocation2] sm:$0xf]
    %v51 = vld [vmem:[#allocation2 + $0x4] sm:$0xf]
    %v52 = vld [vmem:[#allocation2 + $0x8] sm:$0xf]
    %v53 = vld [vmem:[#allocation2 + $0xc] sm:$0xf]
    %v54 = vld [vmem:[#allocation2 + $0x10] sm:$0xf]
    %v55 = vld [vmem:[#allocation2 + $0x14] sm:$0xf]
    %v56 = vld [vmem:[#allocation2 + $0x18] sm:$0xf]
    %v57 = vld [vmem:[#allocation2 + $0x1c] sm:$0xf]
    %v58 = vld [vmem:[#allocation2 + $0x20] sm:$0xf]
    %v59 = vld [vmem:[#allocation2 + $0x24] sm:$0xf]
    %v60 = vld [vmem:[#allocation2 + $0x28] sm:$0xf]
    %v61 = vld [vmem:[#allocation2 + $0x2c] sm:$0xf]
    %v62 = vld [vmem:[#allocation2 + $0x30] sm:$0xf]
    %v63 = vld [vmem:[#allocation2 + $0x34] sm:$0xf]
    %v64 = vld [vmem:[#allocation2 + $0x38] sm:$0xf]
    %v65 = vld [vmem:[#allocation2 + $0x3c] sm:$0xf]
    %v66 = vld [vmem:[#allocation2 + $0x40] sm:$0xf]
    %v67 = vld [vmem:[#allocation2 + $0x44] sm:$0xf]
    %v68 = vld [vmem:[#allocation2 + $0x48] sm:$0xf]
    %v69 = vld [vmem:[#allocation2 + $0x4c] sm:$0xf]
    %v70 = vld [vmem:[#allocation2 + $0x50] sm:$0xf]
    %v71 = vld [vmem:[#allocation2 + $0x54] sm:$0xf]
    %v72 = vld [vmem:[#allocation2 + $0x58] sm:$0xf]
    %v73 = vld [vmem:[#allocation2 + $0x5c] sm:$0xf]
    %v74 = vld [vmem:[#allocation2 + $0x60] sm:$0xf]
    %v75 = vld [vmem:[#allocation2 + $0x64] sm:$0xf]
    %v76 = vld [vmem:[#allocation2 + $0x68] sm:$0xf]
    %v77 = vld [vmem:[#allocation2 + $0x6c] sm:$0xf]
    %v78 = vld [vmem:[#allocation2 + $0x70] sm:$0xf]
    %v79 = vld [vmem:[#allocation2 + $0x74] sm:$0xf]
    %v80 = vld [vmem:[#allocation2 + $0x78] sm:$0xf]
    %v81 = vld [vmem:[#allocation2 + $0x7c] sm:$0xf]
    %v82 = vld [vmem:[#allocation2 + $0x80] sm:$0xf]
    %v83 = vld [vmem:[#allocation2 + $0x84] sm:$0xf]
    %v84 = vld [vmem:[#allocation2 + $0x88] sm:$0xf]
    %v85 = vld [vmem:[#allocation2 + $0x8c] sm:$0xf]
    %v86 = vld [vmem:[#allocation2 + $0x90] sm:$0xf]
    %v87 = vld [vmem:[#allocation2 + $0x94] sm:$0xf]
    %v88 = vld [vmem:[#allocation2 + $0x98] sm:$0xf]
    %v89 = vld [vmem:[#allocation2 + $0x9c] sm:$0xf]
    %v90 = vld [vmem:[#allocation2 + $0xa0] sm:$0xf]
    %v91 = vld [vmem:[#allocation2 + $0xa4] sm:$0xf]
    %v92 = vld [vmem:[#allocation2 + $0xa8] sm:$0xf]
    %v93 = vld [vmem:[#allocation2 + $0xac] sm:$0xf]
    %v94 = vld [vmem:[#allocation2 + $0xb0] sm:$0xf]
    %v95 = vld [vmem:[#allocation2 + $0xb4] sm:$0xf]
    %v96 = vld [vmem:[#allocation2 + $0xb8] sm:$0xf]
    %v97 = vld [vmem:[#allocation2 + $0xbc] sm:$0xf]
    %v98 = vld [vmem:[#allocation2 + $0xc0] sm:$0xf]
    %v99 = vld [vmem:[#allocation2 + $0xc4] sm:$0xf]
    %v100 = vld [vmem:[#allocation2 + $0xc8] sm:$0xf]
    %v101 = vld [vmem:[#allocation2 + $0xcc] sm:$0xf]
    %v102 = vld [vmem:[#allocation2 + $0xd0] sm:$0xf]
    %v103 = vld [vmem:[#allocation2 + $0xd4] sm:$0xf]
    %v104 = vld [vmem:[#allocation2 + $0xd8] sm:$0xf]
    %v105 = vld [vmem:[#allocation2 + $0xdc] sm:$0xf]
    %v106 = vld [vmem:[#allocation2 + $0xe0] sm:$0xf]
    %v107 = vld [vmem:[#allocation2 + $0xe4] sm:$0xf]
    %v108 = vld [vmem:[#allocation2 + $0xe8] sm:$0xf]
    %v109 = vld [vmem:[#allocation2 + $0xec] sm:$0xf]
    %v110 = vld [vmem:[#allocation2 + $0xf0] sm:$0xf]
    %v111 = vld [vmem:[#allocation2 + $0xf4] sm:$0xf]
    %v112 = vld [vmem:[#allocation2 + $0xf8] sm:$0xf]
    %v113 = vld [vmem:[#allocation2 + $0xfc] sm:$0xf]
    %v114 = vld [vmem:[#allocation2 + $0x100] sm:$0xf]
    %v115 = vld [vmem:[#allocation2 + $0x104] sm:$0xf]
    %v116 = vld [vmem:[#allocation2 + $0x108] sm:$0xf]
    %v117 = vld [vmem:[#allocation2 + $0x10c] sm:$0xf]
    %v118 = vld [vmem:[#allocation2 + $0x110] sm:$0xf]
    %v119 = vld [vmem:[#allocation2 + $0x114] sm:$0xf]
    %v120 = vld [vmem:[#allocation2 + $0x118] sm:$0xf]
    %v121 = vld [vmem:[#allocation2 + $0x11c] sm:$0xf]
    %v122 = vld [vmem:[#allocation2 + $0x120] sm:$0xf]
    %v123 = vld [vmem:[#allocation2 + $0x124] sm:$0xf]
    %v124 = vld [vmem:[#allocation2 + $0x128] sm:$0xf]
    %v125 = vld [vmem:[#allocation2 + $0x12c] sm:$0xf]
    %v126 = vld [vmem:[#allocation2 + $0x130] sm:$0xf]
    %v127 = vld [vmem:[#allocation2 + $0x134] sm:$0xf]
    %v128 = vld [vmem:[#allocation2 + $0x138] sm:$0xf]
    %v129 = vld [vmem:[#allocation2 + $0x13c] sm:$0xf]
    %v130 = vld [vmem:[#allocation2 + $0x140] sm:$0xf]
    %v131 = vld [vmem:[#allocation2 + $0x144] sm:$0xf]
    %v132 = vld [vmem:[#allocation2 + $0x148] sm:$0xf]
    %v133 = vld [vmem:[#allocation2 + $0x14c] sm:$0xf]
    %v134 = vld [vmem:[#allocation2 + $0x150] sm:$0xf]
    %v135 = vld [vmem:[#allocation2 + $0x154] sm:$0xf]
    %v136 = vld [vmem:[#allocation2 + $0x158] sm:$0xf]
    %v137 = vld [vmem:[#allocation2 + $0x15c] sm:$0xf]
    %v138 = vld [vmem:[#allocation2 + $0x160] sm:$0xf]
    %v139 = vld [vmem:[#allocation2 + $0x164] sm:$0xf]
    %v140 = vld [vmem:[#allocation2 + $0x168] sm:$0xf]
    %v141 = vld [vmem:[#allocation2 + $0x16c] sm:$0xf]
    %v142 = vld [vmem:[#allocation2 + $0x170] sm:$0xf]
    %v143 = vld [vmem:[#allocation2 + $0x174] sm:$0xf]
    %v144 = vld [vmem:[#allocation2 + $0x178] sm:$0xf]
    %v145 = vld [vmem:[#allocation2 + $0x17c] sm:$0xf]
    %v146 = vld [vmem:[#allocation2 + $0x180] sm:$0xf]
    %v147 = vld [vmem:[#allocation2 + $0x184] sm:$0xf]
    %v148 = vld [vmem:[#allocation2 + $0x188] sm:$0xf]
    %v149 = vld [vmem:[#allocation2 + $0x18c] sm:$0xf]
    %v150 = vld [vmem:[#allocation2 + $0x190] sm:$0xf]
    %v151 = vld [vmem:[#allocation2 + $0x194] sm:$0xf]
    %v152 = vld [vmem:[#allocation2 + $0x198] sm:$0xf]
    %v153 = vld [vmem:[#allocation2 + $0x19c] sm:$0xf]
    %v154 = vld [vmem:[#allocation2 + $0x1a0] sm:$0xf]
    %v155 = vld [vmem:[#allocation2 + $0x1a4] sm:$0xf]
    %v156 = vld [vmem:[#allocation2 + $0x1a8] sm:$0xf]
    %v157 = vld [vmem:[#allocation2 + $0x1ac] sm:$0xf]
    %v158 = vld [vmem:[#allocation2 + $0x1b0] sm:$0xf]
    %v159 = vld [vmem:[#allocation2 + $0x1b4] sm:$0xf]
    %v160 = vld [vmem:[#allocation2 + $0x1b8] sm:$0xf]
    %v161 = vld [vmem:[#allocation2 + $0x1bc] sm:$0xf]
    %v162 = vld [vmem:[#allocation2 + $0x1c0] sm:$0xf]
    %v163 = vld [vmem:[#allocation2 + $0x1c4] sm:$0xf]
    %v164 = vld [vmem:[#allocation2 + $0x1c8] sm:$0xf]
    %v165 = vld [vmem:[#allocation2 + $0x1cc] sm:$0xf]
    %v166 = vld [vmem:[#allocation2 + $0x1d0] sm:$0xf]
    %v167 = vld [vmem:[#allocation2 + $0x1d4] sm:$0xf]
    %v168 = vld [vmem:[#allocation2 + $0x1d8] sm:$0xf]
    %v169 = vld [vmem:[#allocation2 + $0x1dc] sm:$0xf]
    %v170 = vld [vmem:[#allocation2 + $0x1e0] sm:$0xf]
    %v171 = vld [vmem:[#allocation2 + $0x1e4] sm:$0xf]
    %v172 = vld [vmem:[#allocation2 + $0x1e8] sm:$0xf]
    %v173 = vld [vmem:[#allocation2 + $0x1ec] sm:$0xf]
    %v174 = vld [vmem:[#allocation2 + $0x1f0] sm:$0xf]
    %v175 = vld [vmem:[#allocation2 + $0x1f4] sm:$0xf]
    %v176 = vld [vmem:[#allocation2 + $0x1f8] sm:$0xf]
    %v177 = vld [vmem:[#allocation2 + $0x1fc] sm:$0xf]
    %v178 = vld [vmem:[#allocation2 + $0x200] sm:$0xf]
    %v179 = vld [vmem:[#allocation2 + $0x204] sm:$0xf]
    %v180 = vld [vmem:[#allocation2 + $0x208] sm:$0xf]
    %v181 = vld [vmem:[#allocation2 + $0x20c] sm:$0xf]
    %v182 = vld [vmem:[#allocation2 + $0x210] sm:$0xf]
    %v183 = vld [vmem:[#allocation2 + $0x214] sm:$0xf]
    %v184 = vld [vmem:[#allocation2 + $0x218] sm:$0xf]
    %v185 = vld [vmem:[#allocation2 + $0x21c] sm:$0xf]
    %v186 = vld [vmem:[#allocation2 + $0x220] sm:$0xf]
    %v187 = vld [vmem:[#allocation2 + $0x224] sm:$0xf]
    %v188 = vld [vmem:[#allocation2 + $0x228] sm:$0xf]
    %v189 = vld [vmem:[#allocation2 + $0x22c] sm:$0xf]
    %v190 = vld [vmem:[#allocation2 + $0x230] sm:$0xf]
    %v191 = vld [vmem:[#allocation2 + $0x234] sm:$0xf]
    %v192 = vld [vmem:[#allocation2 + $0x238] sm:$0xf]
    %v193 = vld [vmem:[#allocation2 + $0x23c] sm:$0xf]
    %v194 = vld [vmem:[#allocation2 + $0x240] sm:$0xf]
    %v195 = vld [vmem:[#allocation2 + $0x244] sm:$0xf]
    %v196 = vld [vmem:[#allocation2 + $0x248] sm:$0xf]
    %v197 = vld [vmem:[#allocation2 + $0x24c] sm:$0xf]
    %v198 = vld [vmem:[#allocation2 + $0x250] sm:$0xf]
    %v199 = vld [vmem:[#allocation2 + $0x254] sm:$0xf]
    %v200 = vld [vmem:[#allocation2 + $0x258] sm:$0xf]
    %v201 = vld [vmem:[#allocation2 + $0x25c] sm:$0xf]
    %v202 = vld [vmem:[#allocation2 + $0x260] sm:$0xf]
    %v203 = vld [vmem:[#allocation2 + $0x264] sm:$0xf]
    %v204 = vld [vmem:[#allocation2 + $0x268] sm:$0xf]
    %v205 = vld [vmem:[#allocation2 + $0x26c] sm:$0xf]
    %v206 = vld [vmem:[#allocation2 + $0x270] sm:$0xf]
    %v207 = vld [vmem:[#allocation2 + $0x274] sm:$0xf]
    %v208 = vld [vmem:[#allocation2 + $0x278] sm:$0xf]
    %v209 = vld [vmem:[#allocation2 + $0x27c] sm:$0xf]
    %v210 = vld [vmem:[#allocation2 + $0x280] sm:$0xf]
    %v211 = vld [vmem:[#allocation2 + $0x284] sm:$0xf]
    %v212 = vld [vmem:[#allocation2 + $0x288] sm:$0xf]
    %v213 = vld [vmem:[#allocation2 + $0x28c] sm:$0xf]
    %v214 = vld [vmem:[#allocation2 + $0x290] sm:$0xf]
    %v215 = vld [vmem:[#allocation2 + $0x294] sm:$0xf]
    %v216 = vld [vmem:[#allocation2 + $0x298] sm:$0xf]
    %v217 = vld [vmem:[#allocation2 + $0x29c] sm:$0xf]
    %v218 = vld [vmem:[#allocation2 + $0x2a0] sm:$0xf]
    %v219 = vld [vmem:[#allocation2 + $0x2a4] sm:$0xf]
    %v220 = vld [vmem:[#allocation2 + $0x2a8] sm:$0xf]
    %v221 = vld [vmem:[#allocation2 + $0x2ac] sm:$0xf]
    %v222 = vld [vmem:[#allocation2 + $0x2b0] sm:$0xf]
    %v223 = vld [vmem:[#allocation2 + $0x2b4] sm:$0xf]
    %v224 = vld [vmem:[#allocation2 + $0x2b8] sm:$0xf]
    %v225 = vld [vmem:[#allocation2 + $0x2bc] sm:$0xf]
    %v226 = vld [vmem:[#allocation2 + $0x2c0] sm:$0xf]
    %v227 = vld [vmem:[#allocation2 + $0x2c4] sm:$0xf]
    %v228 = vld [vmem:[#allocation2 + $0x2c8] sm:$0xf]
    %v229 = vld [vmem:[#allocation2 + $0x2cc] sm:$0xf]
    %v230 = vld [vmem:[#allocation2 + $0x2d0] sm:$0xf]
    %v231 = vld [vmem:[#allocation2 + $0x2d4] sm:$0xf]
    %v232 = vld [vmem:[#allocation2 + $0x2d8] sm:$0xf]
    %v233 = vld [vmem:[#allocation2 + $0x2dc] sm:$0xf]
    %v234 = vld [vmem:[#allocation2 + $0x2e0] sm:$0xf]
    %v235 = vld [vmem:[#allocation2 + $0x2e4] sm:$0xf]
    %v236 = vld [vmem:[#allocation2 + $0x2e8] sm:$0xf]
    %v237 = vld [vmem:[#allocation2 + $0x2ec] sm:$0xf]
    %v238 = vld [vmem:[#allocation2 + $0x2f0] sm:$0xf]
    %v239 = vld [vmem:[#allocation2 + $0x2f4] sm:$0xf]
    %v240 = vld [vmem:[#allocation2 + $0x2f8] sm:$0xf]
    %v241 = vld [vmem:[#allocation2 + $0x2fc] sm:$0xf]
    %v242 = vld [vmem:[#allocation2 + $0x300] sm:$0xf]
    %v243 = vld [vmem:[#allocation2 + $0x304] sm:$0xf]
    %v244 = vld [vmem:[#allocation2 + $0x308] sm:$0xf]
    %v245 = vld [vmem:[#allocation2 + $0x30c] sm:$0xf]
    %v246 = vld [vmem:[#allocation2 + $0x310] sm:$0xf]
    %v247 = vld [vmem:[#allocation2 + $0x314] sm:$0xf]
    %v248 = vld [vmem:[#allocation2 + $0x318] sm:$0xf]
    %v249 = vld [vmem:[#allocation2 + $0x31c] sm:$0xf]
    %v250 = vld [vmem:[#allocation2 + $0x320] sm:$0xf]
    %v251 = vld [vmem:[#allocation2 + $0x324] sm:$0xf]
    %v252 = vld [vmem:[#allocation2 + $0x328] sm:$0xf]
    %v253 = vld [vmem:[#allocation2 + $0x32c] sm:$0xf]
    %v254 = vld [vmem:[#allocation2 + $0x330] sm:$0xf]
    %v255 = vld [vmem:[#allocation2 + $0x334] sm:$0xf]
    %v256 = vld [vmem:[#allocation2 + $0x338] sm:$0xf]
    %v257 = vld [vmem:[#allocation2 + $0x33c] sm:$0xf]
    %v258 = vld [vmem:[#allocation2 + $0x340] sm:$0xf]
    %v259 = vld [vmem:[#allocation2 + $0x344] sm:$0xf]
    %v260 = vld [vmem:[#allocation2 + $0x348] sm:$0xf]
    %v261 = vld [vmem:[#allocation2 + $0x34c] sm:$0xf]
    %v262 = vld [vmem:[#allocation2 + $0x350] sm:$0xf]
    %v263 = vld [vmem:[#allocation2 + $0x354] sm:$0xf]
    %v264 = vld [vmem:[#allocation2 + $0x358] sm:$0xf]
    %v265 = vld [vmem:[#allocation2 + $0x35c] sm:$0xf]
    %v266 = vld [vmem:[#allocation2 + $0x360] sm:$0xf]
    %v267 = vld [vmem:[#allocation2 + $0x364] sm:$0xf]
    %v268 = vld [vmem:[#allocation2 + $0x368] sm:$0xf]
    %v269 = vld [vmem:[#allocation2 + $0x36c] sm:$0xf]
    %v270 = vld [vmem:[#allocation2 + $0x370] sm:$0xf]
    %v271 = vld [vmem:[#allocation2 + $0x374] sm:$0xf]
    %v272 = vld [vmem:[#allocation2 + $0x378] sm:$0xf]
    %v273 = vld [vmem:[#allocation2 + $0x37c] sm:$0xf]
    %v274 = vld [vmem:[#allocation2 + $0x380] sm:$0xf]
    %v275 = vld [vmem:[#allocation2 + $0x384] sm:$0xf]
    %v276 = vld [vmem:[#allocation2 + $0x388] sm:$0xf]
    %v277 = vld [vmem:[#allocation2 + $0x38c] sm:$0xf]
    %v278 = vld [vmem:[#allocation2 + $0x390] sm:$0xf]
    %v279 = vld [vmem:[#allocation2 + $0x394] sm:$0xf]
    %v280 = vld [vmem:[#allocation2 + $0x398] sm:$0xf]
    %v281 = vld [vmem:[#allocation2 + $0x39c] sm:$0xf]
    %v282 = vld [vmem:[#allocation2 + $0x3a0] sm:$0xf]
    %v283 = vld [vmem:[#allocation2 + $0x3a4] sm:$0xf]
    %v284 = vld [vmem:[#allocation2 + $0x3a8] sm:$0xf]
    %v285 = vld [vmem:[#allocation2 + $0x3ac] sm:$0xf]
    %v286 = vld [vmem:[#allocation2 + $0x3b0] sm:$0xf]
    %v287 = vld [vmem:[#allocation2 + $0x3b4] sm:$0xf]
    %v288 = vld [vmem:[#allocation2 + $0x3b8] sm:$0xf]
    %v289 = vld [vmem:[#allocation2 + $0x3bc] sm:$0xf]
    %v290 = vld [vmem:[#allocation2 + $0x3c0] sm:$0xf]
    %v291 = vld [vmem:[#allocation2 + $0x3c4] sm:$0xf]
    %v292 = vld [vmem:[#allocation2 + $0x3c8] sm:$0xf]
    %v293 = vld [vmem:[#allocation2 + $0x3cc] sm:$0xf]
    %v294 = vld [vmem:[#allocation2 + $0x3d0] sm:$0xf]
    %v295 = vld [vmem:[#allocation2 + $0x3d4] sm:$0xf]
    %v296 = vld [vmem:[#allocation2 + $0x3d8] sm:$0xf]
    %v297 = vld [vmem:[#allocation2 + $0x3dc] sm:$0xf]
    %v298 = vld [vmem:[#allocation2 + $0x3e0] sm:$0xf]
    %v299 = vld [vmem:[#allocation2 + $0x3e4] sm:$0xf]
    %v300 = vld [vmem:[#allocation2 + $0x3e8] sm:$0xf]
    %v301 = vld [vmem:[#allocation2 + $0x3ec] sm:$0xf]
    %v302 = vld [vmem:[#allocation2 + $0x3f0] sm:$0xf]
    %v303 = vld [vmem:[#allocation2 + $0x3f4] sm:$0xf]
    %v304 = vld [vmem:[#allocation2 + $0x3f8] sm:$0xf]
    %v305 = vld [vmem:[#allocation2 + $0x3fc] sm:$0xf]
    %v306 = vld [vmem:[#allocation5] sm:$0xf]
    %v307 = vld [vmem:[#allocation5 + $0x4] sm:$0xf]
    %v308 = vld [vmem:[#allocation5 + $0x8] sm:$0xf]
    %v309 = vld [vmem:[#allocation5 + $0xc] sm:$0xf]
    %v310 = vld [vmem:[#allocation5 + $0x10] sm:$0xf]
    %v311 = vld [vmem:[#allocation5 + $0x14] sm:$0xf]
    %v312 = vld [vmem:[#allocation5 + $0x18] sm:$0xf]
    %v313 = vld [vmem:[#allocation5 + $0x1c] sm:$0xf]
    %v314 = vld [vmem:[#allocation5 + $0x20] sm:$0xf]
    %v315 = vld [vmem:[#allocation5 + $0x24] sm:$0xf]
    %v316 = vld [vmem:[#allocation5 + $0x28] sm:$0xf]
    %v317 = vld [vmem:[#allocation5 + $0x2c] sm:$0xf]
    %v318 = vld [vmem:[#allocation5 + $0x30] sm:$0xf]
    %v319 = vld [vmem:[#allocation5 + $0x34] sm:$0xf]
    %v320 = vld [vmem:[#allocation5 + $0x38] sm:$0xf]
    %v321 = vld [vmem:[#allocation5 + $0x3c] sm:$0xf]
    %v578 = vunpack.c.l.b16 %v50
    %v579 = vunpack.c.l.b16 %v51
    %v580 = vunpack.c.l.b16 %v52
    %v581 = vunpack.c.l.b16 %v53
    %v582 = vunpack.c.l.b16 %v54
    %v583 = vunpack.c.l.b16 %v55
    %v584 = vunpack.c.l.b16 %v56
    %v585 = vunpack.c.l.b16 %v57
    %v586 = vunpack.c.l.b16 %v58
    %v587 = vunpack.c.l.b16 %v59
    %v588 = vunpack.c.l.b16 %v60
    %v589 = vunpack.c.l.b16 %v61
    %v590 = vunpack.c.l.b16 %v62
    %v591 = vunpack.c.l.b16 %v63
    %v592 = vunpack.c.l.b16 %v64
    %v593 = vunpack.c.l.b16 %v65
    %v594 = vunpack.c.l.b16 %v66
    %v595 = vunpack.c.l.b16 %v67
    %v596 = vunpack.c.l.b16 %v68
    %v597 = vunpack.c.l.b16 %v69
    %v598 = vunpack.c.l.b16 %v70
    %v599 = vunpack.c.l.b16 %v71
    %v600 = vunpack.c.l.b16 %v72
    %v601 = vunpack.c.l.b16 %v73
    %v602 = vunpack.c.l.b16 %v74
    %v603 = vunpack.c.l.b16 %v75
    %v604 = vunpack.c.l.b16 %v76
    %v605 = vunpack.c.l.b16 %v77
    %v606 = vunpack.c.l.b16 %v78
    %v607 = vunpack.c.l.b16 %v79
    %v608 = vunpack.c.l.b16 %v80
    %v609 = vunpack.c.l.b16 %v81
    %v610 = vunpack.c.l.b16 %v82
    %v611 = vunpack.c.l.b16 %v83
    %v612 = vunpack.c.l.b16 %v84
    %v613 = vunpack.c.l.b16 %v85
    %v614 = vunpack.c.l.b16 %v86
    %v615 = vunpack.c.l.b16 %v87
    %v616 = vunpack.c.l.b16 %v88
    %v617 = vunpack.c.l.b16 %v89
    %v618 = vunpack.c.l.b16 %v90
    %v619 = vunpack.c.l.b16 %v91
    %v620 = vunpack.c.l.b16 %v92
    %v621 = vunpack.c.l.b16 %v93
    %v622 = vunpack.c.l.b16 %v94
    %v623 = vunpack.c.l.b16 %v95
    %v624 = vunpack.c.l.b16 %v96
    %v625 = vunpack.c.l.b16 %v97
    %v626 = vunpack.c.l.b16 %v98
    %v627 = vunpack.c.l.b16 %v99
    %v628 = vunpack.c.l.b16 %v100
    %v629 = vunpack.c.l.b16 %v101
    %v630 = vunpack.c.l.b16 %v102
    %v631 = vunpack.c.l.b16 %v103
    %v632 = vunpack.c.l.b16 %v104
    %v633 = vunpack.c.l.b16 %v105
    %v634 = vunpack.c.l.b16 %v106
    %v635 = vunpack.c.l.b16 %v107
    %v636 = vunpack.c.l.b16 %v108
    %v637 = vunpack.c.l.b16 %v109
    %v638 = vunpack.c.l.b16 %v110
    %v639 = vunpack.c.l.b16 %v111
    %v640 = vunpack.c.l.b16 %v112
    %v641 = vunpack.c.l.b16 %v113
    %v642 = vunpack.c.l.b16 %v114
    %v643 = vunpack.c.l.b16 %v115
    %v644 = vunpack.c.l.b16 %v116
    %v645 = vunpack.c.l.b16 %v117
    %v646 = vunpack.c.l.b16 %v118
    %v647 = vunpack.c.l.b16 %v119
    %v648 = vunpack.c.l.b16 %v120
    %v649 = vunpack.c.l.b16 %v121
    %v650 = vunpack.c.l.b16 %v122
    %v651 = vunpack.c.l.b16 %v123
    %v652 = vunpack.c.l.b16 %v124
    %v653 = vunpack.c.l.b16 %v125
    %v654 = vunpack.c.l.b16 %v126
    %v655 = vunpack.c.l.b16 %v127
    %v656 = vunpack.c.l.b16 %v128
    %v657 = vunpack.c.l.b16 %v129
    %v658 = vunpack.c.l.b16 %v130
    %v659 = vunpack.c.l.b16 %v131
    %v660 = vunpack.c.l.b16 %v132
    %v661 = vunpack.c.l.b16 %v133
    %v662 = vunpack.c.l.b16 %v134
    %v663 = vunpack.c.l.b16 %v135
    %v664 = vunpack.c.l.b16 %v136
    %v665 = vunpack.c.l.b16 %v137
    %v666 = vunpack.c.l.b16 %v138
    %v667 = vunpack.c.l.b16 %v139
    %v668 = vunpack.c.l.b16 %v140
    %v669 = vunpack.c.l.b16 %v141
    %v670 = vunpack.c.l.b16 %v142
    %v671 = vunpack.c.l.b16 %v143
    %v672 = vunpack.c.l.b16 %v144
    %v673 = vunpack.c.l.b16 %v145
    %v674 = vunpack.c.l.b16 %v146
    %v675 = vunpack.c.l.b16 %v147
    %v676 = vunpack.c.l.b16 %v148
    %v677 = vunpack.c.l.b16 %v149
    %v678 = vunpack.c.l.b16 %v150
    %v679 = vunpack.c.l.b16 %v151
    %v680 = vunpack.c.l.b16 %v152
    %v681 = vunpack.c.l.b16 %v153
    %v682 = vunpack.c.l.b16 %v154
    %v683 = vunpack.c.l.b16 %v155
    %v684 = vunpack.c.l.b16 %v156
    %v685 = vunpack.c.l.b16 %v157
    %v686 = vunpack.c.l.b16 %v158
    %v687 = vunpack.c.l.b16 %v159
    %v688 = vunpack.c.l.b16 %v160
    %v689 = vunpack.c.l.b16 %v161
    %v690 = vunpack.c.l.b16 %v162
    %v691 = vunpack.c.l.b16 %v163
    %v692 = vunpack.c.l.b16 %v164
    %v693 = vunpack.c.l.b16 %v165
    %v694 = vunpack.c.l.b16 %v166
    %v695 = vunpack.c.l.b16 %v167
    %v696 = vunpack.c.l.b16 %v168
    %v697 = vunpack.c.l.b16 %v169
    %v698 = vunpack.c.l.b16 %v170
    %v699 = vunpack.c.l.b16 %v171
    %v700 = vunpack.c.l.b16 %v172
    %v701 = vunpack.c.l.b16 %v173
    %v702 = vunpack.c.l.b16 %v174
    %v703 = vunpack.c.l.b16 %v175
    %v704 = vunpack.c.l.b16 %v176
    %v705 = vunpack.c.l.b16 %v177
    %v706 = vunpack.c.l.b16 %v178
    %v707 = vunpack.c.l.b16 %v179
    %v708 = vunpack.c.l.b16 %v180
    %v709 = vunpack.c.l.b16 %v181
    %v710 = vunpack.c.l.b16 %v182
    %v711 = vunpack.c.l.b16 %v183
    %v712 = vunpack.c.l.b16 %v184
    %v713 = vunpack.c.l.b16 %v185
    %v714 = vunpack.c.l.b16 %v186
    %v715 = vunpack.c.l.b16 %v187
    %v716 = vunpack.c.l.b16 %v188
    %v717 = vunpack.c.l.b16 %v189
    %v718 = vunpack.c.l.b16 %v190
    %v719 = vunpack.c.l.b16 %v191
    %v720 = vunpack.c.l.b16 %v192
    %v721 = vunpack.c.l.b16 %v193
    %v722 = vunpack.c.l.b16 %v194
    %v723 = vunpack.c.l.b16 %v195
    %v724 = vunpack.c.l.b16 %v196
    %v725 = vunpack.c.l.b16 %v197
    %v726 = vunpack.c.l.b16 %v198
    %v727 = vunpack.c.l.b16 %v199
    %v728 = vunpack.c.l.b16 %v200
    %v729 = vunpack.c.l.b16 %v201
    %v730 = vunpack.c.l.b16 %v202
    %v731 = vunpack.c.l.b16 %v203
    %v732 = vunpack.c.l.b16 %v204
    %v733 = vunpack.c.l.b16 %v205
    %v734 = vunpack.c.l.b16 %v206
    %v735 = vunpack.c.l.b16 %v207
    %v736 = vunpack.c.l.b16 %v208
    %v737 = vunpack.c.l.b16 %v209
    %v738 = vunpack.c.l.b16 %v210
    %v739 = vunpack.c.l.b16 %v211
    %v740 = vunpack.c.l.b16 %v212
    %v741 = vunpack.c.l.b16 %v213
    %v742 = vunpack.c.l.b16 %v214
    %v743 = vunpack.c.l.b16 %v215
    %v744 = vunpack.c.l.b16 %v216
    %v745 = vunpack.c.l.b16 %v217
    %v746 = vunpack.c.l.b16 %v218
    %v747 = vunpack.c.l.b16 %v219
    %v748 = vunpack.c.l.b16 %v220
    %v749 = vunpack.c.l.b16 %v221
    %v750 = vunpack.c.l.b16 %v222
    %v751 = vunpack.c.l.b16 %v223
    %v752 = vunpack.c.l.b16 %v224
    %v753 = vunpack.c.l.b16 %v225
    %v754 = vunpack.c.l.b16 %v226
    %v755 = vunpack.c.l.b16 %v227
    %v756 = vunpack.c.l.b16 %v228
    %v757 = vunpack.c.l.b16 %v229
    %v758 = vunpack.c.l.b16 %v230
    %v759 = vunpack.c.l.b16 %v231
    %v760 = vunpack.c.l.b16 %v232
    %v761 = vunpack.c.l.b16 %v233
    %v762 = vunpack.c.l.b16 %v234
    %v763 = vunpack.c.l.b16 %v235
    %v764 = vunpack.c.l.b16 %v236
    %v765 = vunpack.c.l.b16 %v237
    %v766 = vunpack.c.l.b16 %v238
    %v767 = vunpack.c.l.b16 %v239
    %v768 = vunpack.c.l.b16 %v240
    %v769 = vunpack.c.l.b16 %v241
    %v770 = vunpack.c.l.b16 %v242
    %v771 = vunpack.c.l.b16 %v243
    %v772 = vunpack.c.l.b16 %v244
    %v773 = vunpack.c.l.b16 %v245
    %v774 = vunpack.c.l.b16 %v246
    %v775 = vunpack.c.l.b16 %v247
    %v776 = vunpack.c.l.b16 %v248
    %v777 = vunpack.c.l.b16 %v249
    %v778 = vunpack.c.l.b16 %v250
    %v779 = vunpack.c.l.b16 %v251
    %v780 = vunpack.c.l.b16 %v252
    %v781 = vunpack.c.l.b16 %v253
    %v782 = vunpack.c.l.b16 %v254
    %v783 = vunpack.c.l.b16 %v255
    %v784 = vunpack.c.l.b16 %v256
    %v785 = vunpack.c.l.b16 %v257
    %v786 = vunpack.c.l.b16 %v258
    %v787 = vunpack.c.l.b16 %v259
    %v788 = vunpack.c.l.b16 %v260
    %v789 = vunpack.c.l.b16 %v261
    %v790 = vunpack.c.l.b16 %v262
    %v791 = vunpack.c.l.b16 %v263
    %v792 = vunpack.c.l.b16 %v264
    %v793 = vunpack.c.l.b16 %v265
    %v794 = vunpack.c.l.b16 %v266
    %v795 = vunpack.c.l.b16 %v267
    %v796 = vunpack.c.l.b16 %v268
    %v797 = vunpack.c.l.b16 %v269
    %v798 = vunpack.c.l.b16 %v270
    %v799 = vunpack.c.l.b16 %v271
    %v800 = vunpack.c.l.b16 %v272
    %v801 = vunpack.c.l.b16 %v273
    %v802 = vunpack.c.l.b16 %v274
    %v803 = vunpack.c.l.b16 %v275
    %v804 = vunpack.c.l.b16 %v276
    %v805 = vunpack.c.l.b16 %v277
    %v806 = vunpack.c.l.b16 %v278
    %v807 = vunpack.c.l.b16 %v279
    %v808 = vunpack.c.l.b16 %v280
    %v809 = vunpack.c.l.b16 %v281
    %v810 = vunpack.c.l.b16 %v282
    %v811 = vunpack.c.l.b16 %v283
    %v812 = vunpack.c.l.b16 %v284
    %v813 = vunpack.c.l.b16 %v285
    %v814 = vunpack.c.l.b16 %v286
    %v815 = vunpack.c.l.b16 %v287
    %v816 = vunpack.c.l.b16 %v288
    %v817 = vunpack.c.l.b16 %v289
    %v818 = vunpack.c.l.b16 %v290
    %v819 = vunpack.c.l.b16 %v291
    %v820 = vunpack.c.l.b16 %v292
    %v821 = vunpack.c.l.b16 %v293
    %v822 = vunpack.c.l.b16 %v294
    %v823 = vunpack.c.l.b16 %v295
    %v824 = vunpack.c.l.b16 %v296
    %v825 = vunpack.c.l.b16 %v297
    %v826 = vunpack.c.l.b16 %v298
    %v827 = vunpack.c.l.b16 %v299
    %v828 = vunpack.c.l.b16 %v300
    %v829 = vunpack.c.l.b16 %v301
    %v830 = vunpack.c.l.b16 %v302
    %v831 = vunpack.c.l.b16 %v303
    %v832 = vunpack.c.l.b16 %v304
    %v833 = vunpack.c.l.b16 %v305
    %v834 = vpack.c.b16 %v579, %v578
    %v835 = vpack.c.b16 %v581, %v580
    %v836 = vpack.c.b16 %v583, %v582
    %v837 = vpack.c.b16 %v585, %v584
    %v838 = vpack.c.b16 %v587, %v586
    %v839 = vpack.c.b16 %v589, %v588
    %v840 = vpack.c.b16 %v591, %v590
    %v841 = vpack.c.b16 %v593, %v592
    %v842 = vpack.c.b16 %v595, %v594
    %v843 = vpack.c.b16 %v597, %v596
    %v844 = vpack.c.b16 %v599, %v598
    %v845 = vpack.c.b16 %v601, %v600
    %v846 = vpack.c.b16 %v603, %v602
    %v847 = vpack.c.b16 %v605, %v604
    %v848 = vpack.c.b16 %v607, %v606
    %v849 = vpack.c.b16 %v609, %v608
    %v850 = vpack.c.b16 %v611, %v610
    %v851 = vpack.c.b16 %v613, %v612
    %v852 = vpack.c.b16 %v615, %v614
    %v853 = vpack.c.b16 %v617, %v616
    %v854 = vpack.c.b16 %v619, %v618
    %v855 = vpack.c.b16 %v621, %v620
    %v856 = vpack.c.b16 %v623, %v622
    %v857 = vpack.c.b16 %v625, %v624
    %v858 = vpack.c.b16 %v627, %v626
    %v859 = vpack.c.b16 %v629, %v628
    %v860 = vpack.c.b16 %v631, %v630
    %v861 = vpack.c.b16 %v633, %v632
    %v862 = vpack.c.b16 %v635, %v634
    %v863 = vpack.c.b16 %v637, %v636
    %v864 = vpack.c.b16 %v639, %v638
    %v865 = vpack.c.b16 %v641, %v640
    %v866 = vpack.c.b16 %v643, %v642
    %v867 = vpack.c.b16 %v645, %v644
    %v868 = vpack.c.b16 %v647, %v646
    %v869 = vpack.c.b16 %v649, %v648
    %v870 = vpack.c.b16 %v651, %v650
    %v871 = vpack.c.b16 %v653, %v652
    %v872 = vpack.c.b16 %v655, %v654
    %v873 = vpack.c.b16 %v657, %v656
    %v874 = vpack.c.b16 %v659, %v658
    %v875 = vpack.c.b16 %v661, %v660
    %v876 = vpack.c.b16 %v663, %v662
    %v877 = vpack.c.b16 %v665, %v664
    %v878 = vpack.c.b16 %v667, %v666
    %v879 = vpack.c.b16 %v669, %v668
    %v880 = vpack.c.b16 %v671, %v670
    %v881 = vpack.c.b16 %v673, %v672
    %v882 = vpack.c.b16 %v675, %v674
    %v883 = vpack.c.b16 %v677, %v676
    %v884 = vpack.c.b16 %v679, %v678
    %v885 = vpack.c.b16 %v681, %v680
    %v886 = vpack.c.b16 %v683, %v682
    %v887 = vpack.c.b16 %v685, %v684
    %v888 = vpack.c.b16 %v687, %v686
    %v889 = vpack.c.b16 %v689, %v688
    %v890 = vpack.c.b16 %v691, %v690
    %v891 = vpack.c.b16 %v693, %v692
    %v892 = vpack.c.b16 %v695, %v694
    %v893 = vpack.c.b16 %v697, %v696
    %v894 = vpack.c.b16 %v699, %v698
    %v895 = vpack.c.b16 %v701, %v700
    %v896 = vpack.c.b16 %v703, %v702
    %v897 = vpack.c.b16 %v705, %v704
    %v898 = vpack.c.b16 %v707, %v706
    %v899 = vpack.c.b16 %v709, %v708
    %v900 = vpack.c.b16 %v711, %v710
    %v901 = vpack.c.b16 %v713, %v712
    %v902 = vpack.c.b16 %v715, %v714
    %v903 = vpack.c.b16 %v717, %v716
    %v904 = vpack.c.b16 %v719, %v718
    %v905 = vpack.c.b16 %v721, %v720
    %v906 = vpack.c.b16 %v723, %v722
    %v907 = vpack.c.b16 %v725, %v724
    %v908 = vpack.c.b16 %v727, %v726
    %v909 = vpack.c.b16 %v729, %v728
    %v910 = vpack.c.b16 %v731, %v730
    %v911 = vpack.c.b16 %v733, %v732
    %v912 = vpack.c.b16 %v735, %v734
    %v913 = vpack.c.b16 %v737, %v736
    %v914 = vpack.c.b16 %v739, %v738
    %v915 = vpack.c.b16 %v741, %v740
    %v916 = vpack.c.b16 %v743, %v742
    %v917 = vpack.c.b16 %v745, %v744
    %v918 = vpack.c.b16 %v747, %v746
    %v919 = vpack.c.b16 %v749, %v748
    %v920 = vpack.c.b16 %v751, %v750
    %v921 = vpack.c.b16 %v753, %v752
    %v922 = vpack.c.b16 %v755, %v754
    %v923 = vpack.c.b16 %v757, %v756
    %v924 = vpack.c.b16 %v759, %v758
    %v925 = vpack.c.b16 %v761, %v760
    %v926 = vpack.c.b16 %v763, %v762
    %v927 = vpack.c.b16 %v765, %v764
    %v928 = vpack.c.b16 %v767, %v766
    %v929 = vpack.c.b16 %v769, %v768
    %v930 = vpack.c.b16 %v771, %v770
    %v931 = vpack.c.b16 %v773, %v772
    %v932 = vpack.c.b16 %v775, %v774
    %v933 = vpack.c.b16 %v777, %v776
    %v934 = vpack.c.b16 %v779, %v778
    %v935 = vpack.c.b16 %v781, %v780
    %v936 = vpack.c.b16 %v783, %v782
    %v937 = vpack.c.b16 %v785, %v784
    %v938 = vpack.c.b16 %v787, %v786
    %v939 = vpack.c.b16 %v789, %v788
    %v940 = vpack.c.b16 %v791, %v790
    %v941 = vpack.c.b16 %v793, %v792
    %v942 = vpack.c.b16 %v795, %v794
    %v943 = vpack.c.b16 %v797, %v796
    %v944 = vpack.c.b16 %v799, %v798
    %v945 = vpack.c.b16 %v801, %v800
    %v946 = vpack.c.b16 %v803, %v802
    %v947 = vpack.c.b16 %v805, %v804
    %v948 = vpack.c.b16 %v807, %v806
    %v949 = vpack.c.b16 %v809, %v808
    %v950 = vpack.c.b16 %v811, %v810
    %v951 = vpack.c.b16 %v813, %v812
    %v952 = vpack.c.b16 %v815, %v814
    %v953 = vpack.c.b16 %v817, %v816
    %v954 = vpack.c.b16 %v819, %v818
    %v955 = vpack.c.b16 %v821, %v820
    %v956 = vpack.c.b16 %v823, %v822
    %v957 = vpack.c.b16 %v825, %v824
    %v958 = vpack.c.b16 %v827, %v826
    %v959 = vpack.c.b16 %v829, %v828
    %v960 = vpack.c.b16 %v831, %v830
    %v961 = vpack.c.b16 %v833, %v832
    %v1106 = vunpack.c.l.b16 %v306
    %v1107 = vunpack.c.l.b16 %v307
    %v1108 = vunpack.c.l.b16 %v308
    %v1109 = vunpack.c.l.b16 %v309
    %v1110 = vunpack.c.l.b16 %v310
    %v1111 = vunpack.c.l.b16 %v311
    %v1112 = vunpack.c.l.b16 %v312
    %v1113 = vunpack.c.l.b16 %v313
    %v1114 = vunpack.c.l.b16 %v314
    %v1115 = vunpack.c.l.b16 %v315
    %v1116 = vunpack.c.l.b16 %v316
    %v1117 = vunpack.c.l.b16 %v317
    %v1118 = vunpack.c.l.b16 %v318
    %v1119 = vunpack.c.l.b16 %v319
    %v1120 = vunpack.c.l.b16 %v320
    %v1121 = vunpack.c.l.b16 %v321
    %v1122 = vpack.c.b16 %v1107, %v1106
    %v1123 = vpack.c.b16 %v1109, %v1108
    %v1124 = vpack.c.b16 %v1111, %v1110
    %v1125 = vpack.c.b16 %v1113, %v1112
    %v1126 = vpack.c.b16 %v1115, %v1114
    %v1127 = vpack.c.b16 %v1117, %v1116
    %v1128 = vpack.c.b16 %v1119, %v1118
    %v1129 = vpack.c.b16 %v1121, %v1120
    %1138 = vmatpush.bf16.msra.mxu0 %v1129
    %1139 = vmatpush.bf16.msra.mxu0 %v1128
    %1140 = vmatpush.bf16.msra.mxu0 %v1127
    %1141 = vmatpush.bf16.msra.mxu0 %v1126
    %1142 = vmatpush.bf16.msra.mxu0 %v1125
    %1143 = vmatpush.bf16.msra.mxu0 %v1124
    %1144 = vmatpush.bf16.msra.mxu0 %v1123
    %1145 = vmatpush.bf16.msra.mxu0 %v1122
    %1146 = vmatmul.bf16.gmra.mxu0 %v834
    %v1147 = vpop.f32.mrf.mxu0
    %v1148 = vadd.f32 0.0, %v1147
    %v1149 = vpop.f32.mrf.mxu0
    %v1150 = vadd.f32 0.0, %v1149
    %1151 = vmatmul.bf16.gmra.mxu0 %v835
    %v1152 = vpop.f32.mrf.mxu0
    %v1153 = vadd.f32 0.0, %v1152
    %v1154 = vpop.f32.mrf.mxu0
    %v1155 = vadd.f32 0.0, %v1154
    %1156 = vmatmul.bf16.gmra.mxu0 %v836
    %v1157 = vpop.f32.mrf.mxu0
    %v1158 = vadd.f32 0.0, %v1157
    %v1159 = vpop.f32.mrf.mxu0
    %v1160 = vadd.f32 0.0, %v1159
    %1161 = vmatmul.bf16.gmra.mxu0 %v837
    %v1162 = vpop.f32.mrf.mxu0
    %v1163 = vadd.f32 0.0, %v1162
    %v1164 = vpop.f32.mrf.mxu0
    %v1165 = vadd.f32 0.0, %v1164
    %1166 = vmatmul.bf16.gmra.mxu0 %v838
    %v1167 = vpop.f32.mrf.mxu0
    %v1168 = vadd.f32 0.0, %v1167
    %v1169 = vpop.f32.mrf.mxu0
    %v1170 = vadd.f32 0.0, %v1169
    %1171 = vmatmul.bf16.gmra.mxu0 %v839
    %v1172 = vpop.f32.mrf.mxu0
    %v1173 = vadd.f32 0.0, %v1172
    %v1174 = vpop.f32.mrf.mxu0
    %v1175 = vadd.f32 0.0, %v1174
    %1176 = vmatmul.bf16.gmra.mxu0 %v840
    %v1177 = vpop.f32.mrf.mxu0
    %v1178 = vadd.f32 0.0, %v1177
    %v1179 = vpop.f32.mrf.mxu0
    %v1180 = vadd.f32 0.0, %v1179
    %1181 = vmatmul.bf16.gmra.mxu0 %v841
    %v1182 = vpop.f32.mrf.mxu0
    %v1183 = vadd.f32 0.0, %v1182
    %v1184 = vpop.f32.mrf.mxu0
    %v1185 = vadd.f32 0.0, %v1184
    %1186 = vmatmul.bf16.gmra.mxu0 %v842
    %v1187 = vpop.f32.mrf.mxu0
    %v1188 = vadd.f32 0.0, %v1187
    %v1189 = vpop.f32.mrf.mxu0
    %v1190 = vadd.f32 0.0, %v1189
    %1191 = vmatmul.bf16.gmra.mxu0 %v843
    %v1192 = vpop.f32.mrf.mxu0
    %v1193 = vadd.f32 0.0, %v1192
    %v1194 = vpop.f32.mrf.mxu0
    %v1195 = vadd.f32 0.0, %v1194
    %1196 = vmatmul.bf16.gmra.mxu0 %v844
    %v1197 = vpop.f32.mrf.mxu0
    %v1198 = vadd.f32 0.0, %v1197
    %v1199 = vpop.f32.mrf.mxu0
    %v1200 = vadd.f32 0.0, %v1199
    %1201 = vmatmul.bf16.gmra.mxu0 %v845
    %v1202 = vpop.f32.mrf.mxu0
    %v1203 = vadd.f32 0.0, %v1202
    %v1204 = vpop.f32.mrf.mxu0
    %v1205 = vadd.f32 0.0, %v1204
    %1206 = vmatmul.bf16.gmra.mxu0 %v846
    %v1207 = vpop.f32.mrf.mxu0
    %v1208 = vadd.f32 0.0, %v1207
    %v1209 = vpop.f32.mrf.mxu0
    %v1210 = vadd.f32 0.0, %v1209
    %1211 = vmatmul.bf16.gmra.mxu0 %v847
    %v1212 = vpop.f32.mrf.mxu0
    %v1213 = vadd.f32 0.0, %v1212
    %v1214 = vpop.f32.mrf.mxu0
    %v1215 = vadd.f32 0.0, %v1214
    %1216 = vmatmul.bf16.gmra.mxu0 %v848
    %v1217 = vpop.f32.mrf.mxu0
    %v1218 = vadd.f32 0.0, %v1217
    %v1219 = vpop.f32.mrf.mxu0
    %v1220 = vadd.f32 0.0, %v1219
    %1221 = vmatmul.bf16.gmra.mxu0 %v849
    %v1222 = vpop.f32.mrf.mxu0
    %v1223 = vadd.f32 0.0, %v1222
    %v1224 = vpop.f32.mrf.mxu0
    %v1225 = vadd.f32 0.0, %v1224
    %1226 = vmatmul.bf16.gmra.mxu0 %v850
    %v1227 = vpop.f32.mrf.mxu0
    %v1228 = vadd.f32 0.0, %v1227
    %v1229 = vpop.f32.mrf.mxu0
    %v1230 = vadd.f32 0.0, %v1229
    %1231 = vmatmul.bf16.gmra.mxu0 %v851
    %v1232 = vpop.f32.mrf.mxu0
    %v1233 = vadd.f32 0.0, %v1232
    %v1234 = vpop.f32.mrf.mxu0
    %v1235 = vadd.f32 0.0, %v1234
    %1236 = vmatmul.bf16.gmra.mxu0 %v852
    %v1237 = vpop.f32.mrf.mxu0
    %v1238 = vadd.f32 0.0, %v1237
    %v1239 = vpop.f32.mrf.mxu0
    %v1240 = vadd.f32 0.0, %v1239
    %1241 = vmatmul.bf16.gmra.mxu0 %v853
    %v1242 = vpop.f32.mrf.mxu0
    %v1243 = vadd.f32 0.0, %v1242
    %v1244 = vpop.f32.mrf.mxu0
    %v1245 = vadd.f32 0.0, %v1244
    %1246 = vmatmul.bf16.gmra.mxu0 %v854
    %v1247 = vpop.f32.mrf.mxu0
    %v1248 = vadd.f32 0.0, %v1247
    %v1249 = vpop.f32.mrf.mxu0
    %v1250 = vadd.f32 0.0, %v1249
    %1251 = vmatmul.bf16.gmra.mxu0 %v855
    %v1252 = vpop.f32.mrf.mxu0
    %v1253 = vadd.f32 0.0, %v1252
    %v1254 = vpop.f32.mrf.mxu0
    %v1255 = vadd.f32 0.0, %v1254
    %1256 = vmatmul.bf16.gmra.mxu0 %v856
    %v1257 = vpop.f32.mrf.mxu0
    %v1258 = vadd.f32 0.0, %v1257
    %v1259 = vpop.f32.mrf.mxu0
    %v1260 = vadd.f32 0.0, %v1259
    %1261 = vmatmul.bf16.gmra.mxu0 %v857
    %v1262 = vpop.f32.mrf.mxu0
    %v1263 = vadd.f32 0.0, %v1262
    %v1264 = vpop.f32.mrf.mxu0
    %v1265 = vadd.f32 0.0, %v1264
    %1266 = vmatmul.bf16.gmra.mxu0 %v858
    %v1267 = vpop.f32.mrf.mxu0
    %v1268 = vadd.f32 0.0, %v1267
    %v1269 = vpop.f32.mrf.mxu0
    %v1270 = vadd.f32 0.0, %v1269
    %1271 = vmatmul.bf16.gmra.mxu0 %v859
    %v1272 = vpop.f32.mrf.mxu0
    %v1273 = vadd.f32 0.0, %v1272
    %v1274 = vpop.f32.mrf.mxu0
    %v1275 = vadd.f32 0.0, %v1274
    %1276 = vmatmul.bf16.gmra.mxu0 %v860
    %v1277 = vpop.f32.mrf.mxu0
    %v1278 = vadd.f32 0.0, %v1277
    %v1279 = vpop.f32.mrf.mxu0
    %v1280 = vadd.f32 0.0, %v1279
    %1281 = vmatmul.bf16.gmra.mxu0 %v861
    %v1282 = vpop.f32.mrf.mxu0
    %v1283 = vadd.f32 0.0, %v1282
    %v1284 = vpop.f32.mrf.mxu0
    %v1285 = vadd.f32 0.0, %v1284
    %1286 = vmatmul.bf16.gmra.mxu0 %v862
    %v1287 = vpop.f32.mrf.mxu0
    %v1288 = vadd.f32 0.0, %v1287
    %v1289 = vpop.f32.mrf.mxu0
    %v1290 = vadd.f32 0.0, %v1289
    %1291 = vmatmul.bf16.gmra.mxu0 %v863
    %v1292 = vpop.f32.mrf.mxu0
    %v1293 = vadd.f32 0.0, %v1292
    %v1294 = vpop.f32.mrf.mxu0
    %v1295 = vadd.f32 0.0, %v1294
    %1296 = vmatmul.bf16.gmra.mxu0 %v864
    %v1297 = vpop.f32.mrf.mxu0
    %v1298 = vadd.f32 0.0, %v1297
    %v1299 = vpop.f32.mrf.mxu0
    %v1300 = vadd.f32 0.0, %v1299
    %1301 = vmatmul.bf16.gmra.mxu0 %v865
    %v1302 = vpop.f32.mrf.mxu0
    %v1303 = vadd.f32 0.0, %v1302
    %v1304 = vpop.f32.mrf.mxu0
    %v1305 = vadd.f32 0.0, %v1304
    %1306 = vmatmul.bf16.gmra.mxu0 %v866
    %v1307 = vpop.f32.mrf.mxu0
    %v1308 = vadd.f32 0.0, %v1307
    %v1309 = vpop.f32.mrf.mxu0
    %v1310 = vadd.f32 0.0, %v1309
    %1311 = vmatmul.bf16.gmra.mxu0 %v867
    %v1312 = vpop.f32.mrf.mxu0
    %v1313 = vadd.f32 0.0, %v1312
    %v1314 = vpop.f32.mrf.mxu0
    %v1315 = vadd.f32 0.0, %v1314
    %1316 = vmatmul.bf16.gmra.mxu0 %v868
    %v1317 = vpop.f32.mrf.mxu0
    %v1318 = vadd.f32 0.0, %v1317
    %v1319 = vpop.f32.mrf.mxu0
    %v1320 = vadd.f32 0.0, %v1319
    %1321 = vmatmul.bf16.gmra.mxu0 %v869
    %v1322 = vpop.f32.mrf.mxu0
    %v1323 = vadd.f32 0.0, %v1322
    %v1324 = vpop.f32.mrf.mxu0
    %v1325 = vadd.f32 0.0, %v1324
    %1326 = vmatmul.bf16.gmra.mxu0 %v870
    %v1327 = vpop.f32.mrf.mxu0
    %v1328 = vadd.f32 0.0, %v1327
    %v1329 = vpop.f32.mrf.mxu0
    %v1330 = vadd.f32 0.0, %v1329
    %1331 = vmatmul.bf16.gmra.mxu0 %v871
    %v1332 = vpop.f32.mrf.mxu0
    %v1333 = vadd.f32 0.0, %v1332
    %v1334 = vpop.f32.mrf.mxu0
    %v1335 = vadd.f32 0.0, %v1334
    %1336 = vmatmul.bf16.gmra.mxu0 %v872
    %v1337 = vpop.f32.mrf.mxu0
    %v1338 = vadd.f32 0.0, %v1337
    %v1339 = vpop.f32.mrf.mxu0
    %v1340 = vadd.f32 0.0, %v1339
    %1341 = vmatmul.bf16.gmra.mxu0 %v873
    %v1342 = vpop.f32.mrf.mxu0
    %v1343 = vadd.f32 0.0, %v1342
    %v1344 = vpop.f32.mrf.mxu0
    %v1345 = vadd.f32 0.0, %v1344
    %1346 = vmatmul.bf16.gmra.mxu0 %v874
    %v1347 = vpop.f32.mrf.mxu0
    %v1348 = vadd.f32 0.0, %v1347
    %v1349 = vpop.f32.mrf.mxu0
    %v1350 = vadd.f32 0.0, %v1349
    %1351 = vmatmul.bf16.gmra.mxu0 %v875
    %v1352 = vpop.f32.mrf.mxu0
    %v1353 = vadd.f32 0.0, %v1352
    %v1354 = vpop.f32.mrf.mxu0
    %v1355 = vadd.f32 0.0, %v1354
    %1356 = vmatmul.bf16.gmra.mxu0 %v876
    %v1357 = vpop.f32.mrf.mxu0
    %v1358 = vadd.f32 0.0, %v1357
    %v1359 = vpop.f32.mrf.mxu0
    %v1360 = vadd.f32 0.0, %v1359
    %1361 = vmatmul.bf16.gmra.mxu0 %v877
    %v1362 = vpop.f32.mrf.mxu0
    %v1363 = vadd.f32 0.0, %v1362
    %v1364 = vpop.f32.mrf.mxu0
    %v1365 = vadd.f32 0.0, %v1364
    %1366 = vmatmul.bf16.gmra.mxu0 %v878
    %v1367 = vpop.f32.mrf.mxu0
    %v1368 = vadd.f32 0.0, %v1367
    %v1369 = vpop.f32.mrf.mxu0
    %v1370 = vadd.f32 0.0, %v1369
    %1371 = vmatmul.bf16.gmra.mxu0 %v879
    %v1372 = vpop.f32.mrf.mxu0
    %v1373 = vadd.f32 0.0, %v1372
    %v1374 = vpop.f32.mrf.mxu0
    %v1375 = vadd.f32 0.0, %v1374
    %1376 = vmatmul.bf16.gmra.mxu0 %v880
    %v1377 = vpop.f32.mrf.mxu0
    %v1378 = vadd.f32 0.0, %v1377
    %v1379 = vpop.f32.mrf.mxu0
    %v1380 = vadd.f32 0.0, %v1379
    %1381 = vmatmul.bf16.gmra.mxu0 %v881
    %v1382 = vpop.f32.mrf.mxu0
    %v1383 = vadd.f32 0.0, %v1382
    %v1384 = vpop.f32.mrf.mxu0
    %v1385 = vadd.f32 0.0, %v1384
    %1386 = vmatmul.bf16.gmra.mxu0 %v882
    %v1387 = vpop.f32.mrf.mxu0
    %v1388 = vadd.f32 0.0, %v1387
    %v1389 = vpop.f32.mrf.mxu0
    %v1390 = vadd.f32 0.0, %v1389
    %1391 = vmatmul.bf16.gmra.mxu0 %v883
    %v1392 = vpop.f32.mrf.mxu0
    %v1393 = vadd.f32 0.0, %v1392
    %v1394 = vpop.f32.mrf.mxu0
    %v1395 = vadd.f32 0.0, %v1394
    %1396 = vmatmul.bf16.gmra.mxu0 %v884
    %v1397 = vpop.f32.mrf.mxu0
    %v1398 = vadd.f32 0.0, %v1397
    %v1399 = vpop.f32.mrf.mxu0
    %v1400 = vadd.f32 0.0, %v1399
    %1401 = vmatmul.bf16.gmra.mxu0 %v885
    %v1402 = vpop.f32.mrf.mxu0
    %v1403 = vadd.f32 0.0, %v1402
    %v1404 = vpop.f32.mrf.mxu0
    %v1405 = vadd.f32 0.0, %v1404
    %1406 = vmatmul.bf16.gmra.mxu0 %v886
    %v1407 = vpop.f32.mrf.mxu0
    %v1408 = vadd.f32 0.0, %v1407
    %v1409 = vpop.f32.mrf.mxu0
    %v1410 = vadd.f32 0.0, %v1409
    %1411 = vmatmul.bf16.gmra.mxu0 %v887
    %v1412 = vpop.f32.mrf.mxu0
    %v1413 = vadd.f32 0.0, %v1412
    %v1414 = vpop.f32.mrf.mxu0
    %v1415 = vadd.f32 0.0, %v1414
    %1416 = vmatmul.bf16.gmra.mxu0 %v888
    %v1417 = vpop.f32.mrf.mxu0
    %v1418 = vadd.f32 0.0, %v1417
    %v1419 = vpop.f32.mrf.mxu0
    %v1420 = vadd.f32 0.0, %v1419
    %1421 = vmatmul.bf16.gmra.mxu0 %v889
    %v1422 = vpop.f32.mrf.mxu0
    %v1423 = vadd.f32 0.0, %v1422
    %v1424 = vpop.f32.mrf.mxu0
    %v1425 = vadd.f32 0.0, %v1424
    %1426 = vmatmul.bf16.gmra.mxu0 %v890
    %v1427 = vpop.f32.mrf.mxu0
    %v1428 = vadd.f32 0.0, %v1427
    %v1429 = vpop.f32.mrf.mxu0
    %v1430 = vadd.f32 0.0, %v1429
    %1431 = vmatmul.bf16.gmra.mxu0 %v891
    %v1432 = vpop.f32.mrf.mxu0
    %v1433 = vadd.f32 0.0, %v1432
    %v1434 = vpop.f32.mrf.mxu0
    %v1435 = vadd.f32 0.0, %v1434
    %1436 = vmatmul.bf16.gmra.mxu0 %v892
    %v1437 = vpop.f32.mrf.mxu0
    %v1438 = vadd.f32 0.0, %v1437
    %v1439 = vpop.f32.mrf.mxu0
    %v1440 = vadd.f32 0.0, %v1439
    %1441 = vmatmul.bf16.gmra.mxu0 %v893
    %v1442 = vpop.f32.mrf.mxu0
    %v1443 = vadd.f32 0.0, %v1442
    %v1444 = vpop.f32.mrf.mxu0
    %v1445 = vadd.f32 0.0, %v1444
    %1446 = vmatmul.bf16.gmra.mxu0 %v894
    %v1447 = vpop.f32.mrf.mxu0
    %v1448 = vadd.f32 0.0, %v1447
    %v1449 = vpop.f32.mrf.mxu0
    %v1450 = vadd.f32 0.0, %v1449
    %1451 = vmatmul.bf16.gmra.mxu0 %v895
    %v1452 = vpop.f32.mrf.mxu0
    %v1453 = vadd.f32 0.0, %v1452
    %v1454 = vpop.f32.mrf.mxu0
    %v1455 = vadd.f32 0.0, %v1454
    %1456 = vmatmul.bf16.gmra.mxu0 %v896
    %v1457 = vpop.f32.mrf.mxu0
    %v1458 = vadd.f32 0.0, %v1457
    %v1459 = vpop.f32.mrf.mxu0
    %v1460 = vadd.f32 0.0, %v1459
    %1461 = vmatmul.bf16.gmra.mxu0 %v897
    %v1462 = vpop.f32.mrf.mxu0
    %v1463 = vadd.f32 0.0, %v1462
    %v1464 = vpop.f32.mrf.mxu0
    %v1465 = vadd.f32 0.0, %v1464
    %1466 = vmatmul.bf16.gmra.mxu0 %v898
    %v1467 = vpop.f32.mrf.mxu0
    %v1468 = vadd.f32 0.0, %v1467
    %v1469 = vpop.f32.mrf.mxu0
    %v1470 = vadd.f32 0.0, %v1469
    %1471 = vmatmul.bf16.gmra.mxu0 %v899
    %v1472 = vpop.f32.mrf.mxu0
    %v1473 = vadd.f32 0.0, %v1472
    %v1474 = vpop.f32.mrf.mxu0
    %v1475 = vadd.f32 0.0, %v1474
    %1476 = vmatmul.bf16.gmra.mxu0 %v900
    %v1477 = vpop.f32.mrf.mxu0
    %v1478 = vadd.f32 0.0, %v1477
    %v1479 = vpop.f32.mrf.mxu0
    %v1480 = vadd.f32 0.0, %v1479
    %1481 = vmatmul.bf16.gmra.mxu0 %v901
    %v1482 = vpop.f32.mrf.mxu0
    %v1483 = vadd.f32 0.0, %v1482
    %v1484 = vpop.f32.mrf.mxu0
    %v1485 = vadd.f32 0.0, %v1484
    %1486 = vmatmul.bf16.gmra.mxu0 %v902
    %v1487 = vpop.f32.mrf.mxu0
    %v1488 = vadd.f32 0.0, %v1487
    %v1489 = vpop.f32.mrf.mxu0
    %v1490 = vadd.f32 0.0, %v1489
    %1491 = vmatmul.bf16.gmra.mxu0 %v903
    %v1492 = vpop.f32.mrf.mxu0
    %v1493 = vadd.f32 0.0, %v1492
    %v1494 = vpop.f32.mrf.mxu0
    %v1495 = vadd.f32 0.0, %v1494
    %1496 = vmatmul.bf16.gmra.mxu0 %v904
    %v1497 = vpop.f32.mrf.mxu0
    %v1498 = vadd.f32 0.0, %v1497
    %v1499 = vpop.f32.mrf.mxu0
    %v1500 = vadd.f32 0.0, %v1499
    %1501 = vmatmul.bf16.gmra.mxu0 %v905
    %v1502 = vpop.f32.mrf.mxu0
    %v1503 = vadd.f32 0.0, %v1502
    %v1504 = vpop.f32.mrf.mxu0
    %v1505 = vadd.f32 0.0, %v1504
    %1506 = vmatmul.bf16.gmra.mxu0 %v906
    %v1507 = vpop.f32.mrf.mxu0
    %v1508 = vadd.f32 0.0, %v1507
    %v1509 = vpop.f32.mrf.mxu0
    %v1510 = vadd.f32 0.0, %v1509
    %1511 = vmatmul.bf16.gmra.mxu0 %v907
    %v1512 = vpop.f32.mrf.mxu0
    %v1513 = vadd.f32 0.0, %v1512
    %v1514 = vpop.f32.mrf.mxu0
    %v1515 = vadd.f32 0.0, %v1514
    %1516 = vmatmul.bf16.gmra.mxu0 %v908
    %v1517 = vpop.f32.mrf.mxu0
    %v1518 = vadd.f32 0.0, %v1517
    %v1519 = vpop.f32.mrf.mxu0
    %v1520 = vadd.f32 0.0, %v1519
    %1521 = vmatmul.bf16.gmra.mxu0 %v909
    %v1522 = vpop.f32.mrf.mxu0
    %v1523 = vadd.f32 0.0, %v1522
    %v1524 = vpop.f32.mrf.mxu0
    %v1525 = vadd.f32 0.0, %v1524
    %1526 = vmatmul.bf16.gmra.mxu0 %v910
    %v1527 = vpop.f32.mrf.mxu0
    %v1528 = vadd.f32 0.0, %v1527
    %v1529 = vpop.f32.mrf.mxu0
    %v1530 = vadd.f32 0.0, %v1529
    %1531 = vmatmul.bf16.gmra.mxu0 %v911
    %v1532 = vpop.f32.mrf.mxu0
    %v1533 = vadd.f32 0.0, %v1532
    %v1534 = vpop.f32.mrf.mxu0
    %v1535 = vadd.f32 0.0, %v1534
    %1536 = vmatmul.bf16.gmra.mxu0 %v912
    %v1537 = vpop.f32.mrf.mxu0
    %v1538 = vadd.f32 0.0, %v1537
    %v1539 = vpop.f32.mrf.mxu0
    %v1540 = vadd.f32 0.0, %v1539
    %1541 = vmatmul.bf16.gmra.mxu0 %v913
    %v1542 = vpop.f32.mrf.mxu0
    %v1543 = vadd.f32 0.0, %v1542
    %v1544 = vpop.f32.mrf.mxu0
    %v1545 = vadd.f32 0.0, %v1544
    %1546 = vmatmul.bf16.gmra.mxu0 %v914
    %v1547 = vpop.f32.mrf.mxu0
    %v1548 = vadd.f32 0.0, %v1547
    %v1549 = vpop.f32.mrf.mxu0
    %v1550 = vadd.f32 0.0, %v1549
    %1551 = vmatmul.bf16.gmra.mxu0 %v915
    %v1552 = vpop.f32.mrf.mxu0
    %v1553 = vadd.f32 0.0, %v1552
    %v1554 = vpop.f32.mrf.mxu0
    %v1555 = vadd.f32 0.0, %v1554
    %1556 = vmatmul.bf16.gmra.mxu0 %v916
    %v1557 = vpop.f32.mrf.mxu0
    %v1558 = vadd.f32 0.0, %v1557
    %v1559 = vpop.f32.mrf.mxu0
    %v1560 = vadd.f32 0.0, %v1559
    %1561 = vmatmul.bf16.gmra.mxu0 %v917
    %v1562 = vpop.f32.mrf.mxu0
    %v1563 = vadd.f32 0.0, %v1562
    %v1564 = vpop.f32.mrf.mxu0
    %v1565 = vadd.f32 0.0, %v1564
    %1566 = vmatmul.bf16.gmra.mxu0 %v918
    %v1567 = vpop.f32.mrf.mxu0
    %v1568 = vadd.f32 0.0, %v1567
    %v1569 = vpop.f32.mrf.mxu0
    %v1570 = vadd.f32 0.0, %v1569
    %1571 = vmatmul.bf16.gmra.mxu0 %v919
    %v1572 = vpop.f32.mrf.mxu0
    %v1573 = vadd.f32 0.0, %v1572
    %v1574 = vpop.f32.mrf.mxu0
    %v1575 = vadd.f32 0.0, %v1574
    %1576 = vmatmul.bf16.gmra.mxu0 %v920
    %v1577 = vpop.f32.mrf.mxu0
    %v1578 = vadd.f32 0.0, %v1577
    %v1579 = vpop.f32.mrf.mxu0
    %v1580 = vadd.f32 0.0, %v1579
    %1581 = vmatmul.bf16.gmra.mxu0 %v921
    %v1582 = vpop.f32.mrf.mxu0
    %v1583 = vadd.f32 0.0, %v1582
    %v1584 = vpop.f32.mrf.mxu0
    %v1585 = vadd.f32 0.0, %v1584
    %1586 = vmatmul.bf16.gmra.mxu0 %v922
    %v1587 = vpop.f32.mrf.mxu0
    %v1588 = vadd.f32 0.0, %v1587
    %v1589 = vpop.f32.mrf.mxu0
    %v1590 = vadd.f32 0.0, %v1589
    %1591 = vmatmul.bf16.gmra.mxu0 %v923
    %v1592 = vpop.f32.mrf.mxu0
    %v1593 = vadd.f32 0.0, %v1592
    %v1594 = vpop.f32.mrf.mxu0
    %v1595 = vadd.f32 0.0, %v1594
    %1596 = vmatmul.bf16.gmra.mxu0 %v924
    %v1597 = vpop.f32.mrf.mxu0
    %v1598 = vadd.f32 0.0, %v1597
    %v1599 = vpop.f32.mrf.mxu0
    %v1600 = vadd.f32 0.0, %v1599
    %1601 = vmatmul.bf16.gmra.mxu0 %v925
    %v1602 = vpop.f32.mrf.mxu0
    %v1603 = vadd.f32 0.0, %v1602
    %v1604 = vpop.f32.mrf.mxu0
    %v1605 = vadd.f32 0.0, %v1604
    %1606 = vmatmul.bf16.gmra.mxu0 %v926
    %v1607 = vpop.f32.mrf.mxu0
    %v1608 = vadd.f32 0.0, %v1607
    %v1609 = vpop.f32.mrf.mxu0
    %v1610 = vadd.f32 0.0, %v1609
    %1611 = vmatmul.bf16.gmra.mxu0 %v927
    %v1612 = vpop.f32.mrf.mxu0
    %v1613 = vadd.f32 0.0, %v1612
    %v1614 = vpop.f32.mrf.mxu0
    %v1615 = vadd.f32 0.0, %v1614
    %1616 = vmatmul.bf16.gmra.mxu0 %v928
    %v1617 = vpop.f32.mrf.mxu0
    %v1618 = vadd.f32 0.0, %v1617
    %v1619 = vpop.f32.mrf.mxu0
    %v1620 = vadd.f32 0.0, %v1619
    %1621 = vmatmul.bf16.gmra.mxu0 %v929
    %v1622 = vpop.f32.mrf.mxu0
    %v1623 = vadd.f32 0.0, %v1622
    %v1624 = vpop.f32.mrf.mxu0
    %v1625 = vadd.f32 0.0, %v1624
    %1626 = vmatmul.bf16.gmra.mxu0 %v930
    %v1627 = vpop.f32.mrf.mxu0
    %v1628 = vadd.f32 0.0, %v1627
    %v1629 = vpop.f32.mrf.mxu0
    %v1630 = vadd.f32 0.0, %v1629
    %1631 = vmatmul.bf16.gmra.mxu0 %v931
    %v1632 = vpop.f32.mrf.mxu0
    %v1633 = vadd.f32 0.0, %v1632
    %v1634 = vpop.f32.mrf.mxu0
    %v1635 = vadd.f32 0.0, %v1634
    %1636 = vmatmul.bf16.gmra.mxu0 %v932
    %v1637 = vpop.f32.mrf.mxu0
    %v1638 = vadd.f32 0.0, %v1637
    %v1639 = vpop.f32.mrf.mxu0
    %v1640 = vadd.f32 0.0, %v1639
    %1641 = vmatmul.bf16.gmra.mxu0 %v933
    %v1642 = vpop.f32.mrf.mxu0
    %v1643 = vadd.f32 0.0, %v1642
    %v1644 = vpop.f32.mrf.mxu0
    %v1645 = vadd.f32 0.0, %v1644
    %1646 = vmatmul.bf16.gmra.mxu0 %v934
    %v1647 = vpop.f32.mrf.mxu0
    %v1648 = vadd.f32 0.0, %v1647
    %v1649 = vpop.f32.mrf.mxu0
    %v1650 = vadd.f32 0.0, %v1649
    %1651 = vmatmul.bf16.gmra.mxu0 %v935
    %v1652 = vpop.f32.mrf.mxu0
    %v1653 = vadd.f32 0.0, %v1652
    %v1654 = vpop.f32.mrf.mxu0
    %v1655 = vadd.f32 0.0, %v1654
    %1656 = vmatmul.bf16.gmra.mxu0 %v936
    %v1657 = vpop.f32.mrf.mxu0
    %v1658 = vadd.f32 0.0, %v1657
    %v1659 = vpop.f32.mrf.mxu0
    %v1660 = vadd.f32 0.0, %v1659
    %1661 = vmatmul.bf16.gmra.mxu0 %v937
    %v1662 = vpop.f32.mrf.mxu0
    %v1663 = vadd.f32 0.0, %v1662
    %v1664 = vpop.f32.mrf.mxu0
    %v1665 = vadd.f32 0.0, %v1664
    %1666 = vmatmul.bf16.gmra.mxu0 %v938
    %v1667 = vpop.f32.mrf.mxu0
    %v1668 = vadd.f32 0.0, %v1667
    %v1669 = vpop.f32.mrf.mxu0
    %v1670 = vadd.f32 0.0, %v1669
    %1671 = vmatmul.bf16.gmra.mxu0 %v939
    %v1672 = vpop.f32.mrf.mxu0
    %v1673 = vadd.f32 0.0, %v1672
    %v1674 = vpop.f32.mrf.mxu0
    %v1675 = vadd.f32 0.0, %v1674
    %1676 = vmatmul.bf16.gmra.mxu0 %v940
    %v1677 = vpop.f32.mrf.mxu0
    %v1678 = vadd.f32 0.0, %v1677
    %v1679 = vpop.f32.mrf.mxu0
    %v1680 = vadd.f32 0.0, %v1679
    %1681 = vmatmul.bf16.gmra.mxu0 %v941
    %v1682 = vpop.f32.mrf.mxu0
    %v1683 = vadd.f32 0.0, %v1682
    %v1684 = vpop.f32.mrf.mxu0
    %v1685 = vadd.f32 0.0, %v1684
    %1686 = vmatmul.bf16.gmra.mxu0 %v942
    %v1687 = vpop.f32.mrf.mxu0
    %v1688 = vadd.f32 0.0, %v1687
    %v1689 = vpop.f32.mrf.mxu0
    %v1690 = vadd.f32 0.0, %v1689
    %1691 = vmatmul.bf16.gmra.mxu0 %v943
    %v1692 = vpop.f32.mrf.mxu0
    %v1693 = vadd.f32 0.0, %v1692
    %v1694 = vpop.f32.mrf.mxu0
    %v1695 = vadd.f32 0.0, %v1694
    %1696 = vmatmul.bf16.gmra.mxu0 %v944
    %v1697 = vpop.f32.mrf.mxu0
    %v1698 = vadd.f32 0.0, %v1697
    %v1699 = vpop.f32.mrf.mxu0
    %v1700 = vadd.f32 0.0, %v1699
    %1701 = vmatmul.bf16.gmra.mxu0 %v945
    %v1702 = vpop.f32.mrf.mxu0
    %v1703 = vadd.f32 0.0, %v1702
    %v1704 = vpop.f32.mrf.mxu0
    %v1705 = vadd.f32 0.0, %v1704
    %1706 = vmatmul.bf16.gmra.mxu0 %v946
    %v1707 = vpop.f32.mrf.mxu0
    %v1708 = vadd.f32 0.0, %v1707
    %v1709 = vpop.f32.mrf.mxu0
    %v1710 = vadd.f32 0.0, %v1709
    %1711 = vmatmul.bf16.gmra.mxu0 %v947
    %v1712 = vpop.f32.mrf.mxu0
    %v1713 = vadd.f32 0.0, %v1712
    %v1714 = vpop.f32.mrf.mxu0
    %v1715 = vadd.f32 0.0, %v1714
    %1716 = vmatmul.bf16.gmra.mxu0 %v948
    %v1717 = vpop.f32.mrf.mxu0
    %v1718 = vadd.f32 0.0, %v1717
    %v1719 = vpop.f32.mrf.mxu0
    %v1720 = vadd.f32 0.0, %v1719
    %1721 = vmatmul.bf16.gmra.mxu0 %v949
    %v1722 = vpop.f32.mrf.mxu0
    %v1723 = vadd.f32 0.0, %v1722
    %v1724 = vpop.f32.mrf.mxu0
    %v1725 = vadd.f32 0.0, %v1724
    %1726 = vmatmul.bf16.gmra.mxu0 %v950
    %v1727 = vpop.f32.mrf.mxu0
    %v1728 = vadd.f32 0.0, %v1727
    %v1729 = vpop.f32.mrf.mxu0
    %v1730 = vadd.f32 0.0, %v1729
    %1731 = vmatmul.bf16.gmra.mxu0 %v951
    %v1732 = vpop.f32.mrf.mxu0
    %v1733 = vadd.f32 0.0, %v1732
    %v1734 = vpop.f32.mrf.mxu0
    %v1735 = vadd.f32 0.0, %v1734
    %1736 = vmatmul.bf16.gmra.mxu0 %v952
    %v1737 = vpop.f32.mrf.mxu0
    %v1738 = vadd.f32 0.0, %v1737
    %v1739 = vpop.f32.mrf.mxu0
    %v1740 = vadd.f32 0.0, %v1739
    %1741 = vmatmul.bf16.gmra.mxu0 %v953
    %v1742 = vpop.f32.mrf.mxu0
    %v1743 = vadd.f32 0.0, %v1742
    %v1744 = vpop.f32.mrf.mxu0
    %v1745 = vadd.f32 0.0, %v1744
    %1746 = vmatmul.bf16.gmra.mxu0 %v954
    %v1747 = vpop.f32.mrf.mxu0
    %v1748 = vadd.f32 0.0, %v1747
    %v1749 = vpop.f32.mrf.mxu0
    %v1750 = vadd.f32 0.0, %v1749
    %1751 = vmatmul.bf16.gmra.mxu0 %v955
    %v1752 = vpop.f32.mrf.mxu0
    %v1753 = vadd.f32 0.0, %v1752
    %v1754 = vpop.f32.mrf.mxu0
    %v1755 = vadd.f32 0.0, %v1754
    %1756 = vmatmul.bf16.gmra.mxu0 %v956
    %v1757 = vpop.f32.mrf.mxu0
    %v1758 = vadd.f32 0.0, %v1757
    %v1759 = vpop.f32.mrf.mxu0
    %v1760 = vadd.f32 0.0, %v1759
    %1761 = vmatmul.bf16.gmra.mxu0 %v957
    %v1762 = vpop.f32.mrf.mxu0
    %v1763 = vadd.f32 0.0, %v1762
    %v1764 = vpop.f32.mrf.mxu0
    %v1765 = vadd.f32 0.0, %v1764
    %1766 = vmatmul.bf16.gmra.mxu0 %v958
    %v1767 = vpop.f32.mrf.mxu0
    %v1768 = vadd.f32 0.0, %v1767
    %v1769 = vpop.f32.mrf.mxu0
    %v1770 = vadd.f32 0.0, %v1769
    %1771 = vmatmul.bf16.gmra.mxu0 %v959
    %v1772 = vpop.f32.mrf.mxu0
    %v1773 = vadd.f32 0.0, %v1772
    %v1774 = vpop.f32.mrf.mxu0
    %v1775 = vadd.f32 0.0, %v1774
    %1776 = vmatmul.bf16.gmra.mxu0 %v960
    %v1777 = vpop.f32.mrf.mxu0
    %v1778 = vadd.f32 0.0, %v1777
    %v1779 = vpop.f32.mrf.mxu0
    %v1780 = vadd.f32 0.0, %v1779
    %1781 = vmatmul.bf16.gmra.mxu0 %v961
    %v1782 = vpop.f32.mrf.mxu0
    %v1783 = vadd.f32 0.0, %v1782
    %v1784 = vpop.f32.mrf.mxu0
    %v1785 = vadd.f32 0.0, %v1784
    %1786 = vdwg.mxu0
    %v1787 = vadd.f32 %v1148, %v1150
    %v1788 = vadd.f32 %v1787, %v1153
    %v1789 = vadd.f32 %v1788, %v1155
    %v1790 = vadd.f32 %v1789, %v1158
    %v1791 = vadd.f32 %v1790, %v1160
    %v1792 = vadd.f32 %v1791, %v1163
    %v1793 = vadd.f32 %v1792, %v1165
    %v1794 = vadd.f32 %v1793, %v1168
    %v1795 = vadd.f32 %v1794, %v1170
    %v1796 = vadd.f32 %v1795, %v1173
    %v1797 = vadd.f32 %v1796, %v1175
    %v1798 = vadd.f32 %v1797, %v1178
    %v1799 = vadd.f32 %v1798, %v1180
    %v1800 = vadd.f32 %v1799, %v1183
    %v1801 = vadd.f32 %v1800, %v1185
    %v1802 = vadd.f32 %v1801, %v1188
    %v1803 = vadd.f32 %v1802, %v1190
    %v1804 = vadd.f32 %v1803, %v1193
    %v1805 = vadd.f32 %v1804, %v1195
    %v1806 = vadd.f32 %v1805, %v1198
    %v1807 = vadd.f32 %v1806, %v1200
    %v1808 = vadd.f32 %v1807, %v1203
    %v1809 = vadd.f32 %v1808, %v1205
    %v1810 = vadd.f32 %v1809, %v1208
    %v1811 = vadd.f32 %v1810, %v1210
    %v1812 = vadd.f32 %v1811, %v1213
    %v1813 = vadd.f32 %v1812, %v1215
    %v1814 = vadd.f32 %v1813, %v1218
    %v1815 = vadd.f32 %v1814, %v1220
    %v1816 = vadd.f32 %v1815, %v1223
    %v1817 = vadd.f32 %v1816, %v1225
    %v1818 = vadd.f32 %v1817, %v1228
    %v1819 = vadd.f32 %v1818, %v1230
    %v1820 = vadd.f32 %v1819, %v1233
    %v1821 = vadd.f32 %v1820, %v1235
    %v1822 = vadd.f32 %v1821, %v1238
    %v1823 = vadd.f32 %v1822, %v1240
    %v1824 = vadd.f32 %v1823, %v1243
    %v1825 = vadd.f32 %v1824, %v1245
    %v1826 = vadd.f32 %v1825, %v1248
    %v1827 = vadd.f32 %v1826, %v1250
    %v1828 = vadd.f32 %v1827, %v1253
    %v1829 = vadd.f32 %v1828, %v1255
    %v1830 = vadd.f32 %v1829, %v1258
    %v1831 = vadd.f32 %v1830, %v1260
    %v1832 = vadd.f32 %v1831, %v1263
    %v1833 = vadd.f32 %v1832, %v1265
    %v1834 = vadd.f32 %v1833, %v1268
    %v1835 = vadd.f32 %v1834, %v1270
    %v1836 = vadd.f32 %v1835, %v1273
    %v1837 = vadd.f32 %v1836, %v1275
    %v1838 = vadd.f32 %v1837, %v1278
    %v1839 = vadd.f32 %v1838, %v1280
    %v1840 = vadd.f32 %v1839, %v1283
    %v1841 = vadd.f32 %v1840, %v1285
    %v1842 = vadd.f32 %v1841, %v1288
    %v1843 = vadd.f32 %v1842, %v1290
    %v1844 = vadd.f32 %v1843, %v1293
    %v1845 = vadd.f32 %v1844, %v1295
    %v1846 = vadd.f32 %v1845, %v1298
    %v1847 = vadd.f32 %v1846, %v1300
    %v1848 = vadd.f32 %v1847, %v1303
    %v1849 = vadd.f32 %v1848, %v1305
    %v1850 = vadd.f32 %v1849, %v1308
    %v1851 = vadd.f32 %v1850, %v1310
    %v1852 = vadd.f32 %v1851, %v1313
    %v1853 = vadd.f32 %v1852, %v1315
    %v1854 = vadd.f32 %v1853, %v1318
    %v1855 = vadd.f32 %v1854, %v1320
    %v1856 = vadd.f32 %v1855, %v1323
    %v1857 = vadd.f32 %v1856, %v1325
    %v1858 = vadd.f32 %v1857, %v1328
    %v1859 = vadd.f32 %v1858, %v1330
    %v1860 = vadd.f32 %v1859, %v1333
    %v1861 = vadd.f32 %v1860, %v1335
    %v1862 = vadd.f32 %v1861, %v1338
    %v1863 = vadd.f32 %v1862, %v1340
    %v1864 = vadd.f32 %v1863, %v1343
    %v1865 = vadd.f32 %v1864, %v1345
    %v1866 = vadd.f32 %v1865, %v1348
    %v1867 = vadd.f32 %v1866, %v1350
    %v1868 = vadd.f32 %v1867, %v1353
    %v1869 = vadd.f32 %v1868, %v1355
    %v1870 = vadd.f32 %v1869, %v1358
    %v1871 = vadd.f32 %v1870, %v1360
    %v1872 = vadd.f32 %v1871, %v1363
    %v1873 = vadd.f32 %v1872, %v1365
    %v1874 = vadd.f32 %v1873, %v1368
    %v1875 = vadd.f32 %v1874, %v1370
    %v1876 = vadd.f32 %v1875, %v1373
    %v1877 = vadd.f32 %v1876, %v1375
    %v1878 = vadd.f32 %v1877, %v1378
    %v1879 = vadd.f32 %v1878, %v1380
    %v1880 = vadd.f32 %v1879, %v1383
    %v1881 = vadd.f32 %v1880, %v1385
    %v1882 = vadd.f32 %v1881, %v1388
    %v1883 = vadd.f32 %v1882, %v1390
    %v1884 = vadd.f32 %v1883, %v1393
    %v1885 = vadd.f32 %v1884, %v1395
    %v1886 = vadd.f32 %v1885, %v1398
    %v1887 = vadd.f32 %v1886, %v1400
    %v1888 = vadd.f32 %v1887, %v1403
    %v1889 = vadd.f32 %v1888, %v1405
    %v1890 = vadd.f32 %v1889, %v1408
    %v1891 = vadd.f32 %v1890, %v1410
    %v1892 = vadd.f32 %v1891, %v1413
    %v1893 = vadd.f32 %v1892, %v1415
    %v1894 = vadd.f32 %v1893, %v1418
    %v1895 = vadd.f32 %v1894, %v1420
    %v1896 = vadd.f32 %v1895, %v1423
    %v1897 = vadd.f32 %v1896, %v1425
    %v1898 = vadd.f32 %v1897, %v1428
    %v1899 = vadd.f32 %v1898, %v1430
    %v1900 = vadd.f32 %v1899, %v1433
    %v1901 = vadd.f32 %v1900, %v1435
    %v1902 = vadd.f32 %v1901, %v1438
    %v1903 = vadd.f32 %v1902, %v1440
    %v1904 = vadd.f32 %v1903, %v1443
    %v1905 = vadd.f32 %v1904, %v1445
    %v1906 = vadd.f32 %v1905, %v1448
    %v1907 = vadd.f32 %v1906, %v1450
    %v1908 = vadd.f32 %v1907, %v1453
    %v1909 = vadd.f32 %v1908, %v1455
    %v1910 = vadd.f32 %v1909, %v1458
    %v1911 = vadd.f32 %v1910, %v1460
    %v1912 = vadd.f32 %v1911, %v1463
    %v1913 = vadd.f32 %v1912, %v1465
    %v1914 = vadd.f32 %v1913, %v1468
    %v1915 = vadd.f32 %v1914, %v1470
    %v1916 = vadd.f32 %v1915, %v1473
    %v1917 = vadd.f32 %v1916, %v1475
    %v1918 = vadd.f32 %v1917, %v1478
    %v1919 = vadd.f32 %v1918, %v1480
    %v1920 = vadd.f32 %v1919, %v1483
    %v1921 = vadd.f32 %v1920, %v1485
    %v1922 = vadd.f32 %v1921, %v1488
    %v1923 = vadd.f32 %v1922, %v1490
    %v1924 = vadd.f32 %v1923, %v1493
    %v1925 = vadd.f32 %v1924, %v1495
    %v1926 = vadd.f32 %v1925, %v1498
    %v1927 = vadd.f32 %v1926, %v1500
    %v1928 = vadd.f32 %v1927, %v1503
    %v1929 = vadd.f32 %v1928, %v1505
    %v1930 = vadd.f32 %v1929, %v1508
    %v1931 = vadd.f32 %v1930, %v1510
    %v1932 = vadd.f32 %v1931, %v1513
    %v1933 = vadd.f32 %v1932, %v1515
    %v1934 = vadd.f32 %v1933, %v1518
    %v1935 = vadd.f32 %v1934, %v1520
    %v1936 = vadd.f32 %v1935, %v1523
    %v1937 = vadd.f32 %v1936, %v1525
    %v1938 = vadd.f32 %v1937, %v1528
    %v1939 = vadd.f32 %v1938, %v1530
    %v1940 = vadd.f32 %v1939, %v1533
    %v1941 = vadd.f32 %v1940, %v1535
    %v1942 = vadd.f32 %v1941, %v1538
    %v1943 = vadd.f32 %v1942, %v1540
    %v1944 = vadd.f32 %v1943, %v1543
    %v1945 = vadd.f32 %v1944, %v1545
    %v1946 = vadd.f32 %v1945, %v1548
    %v1947 = vadd.f32 %v1946, %v1550
    %v1948 = vadd.f32 %v1947, %v1553
    %v1949 = vadd.f32 %v1948, %v1555
    %v1950 = vadd.f32 %v1949, %v1558
    %v1951 = vadd.f32 %v1950, %v1560
    %v1952 = vadd.f32 %v1951, %v1563
    %v1953 = vadd.f32 %v1952, %v1565
    %v1954 = vadd.f32 %v1953, %v1568
    %v1955 = vadd.f32 %v1954, %v1570
    %v1956 = vadd.f32 %v1955, %v1573
    %v1957 = vadd.f32 %v1956, %v1575
    %v1958 = vadd.f32 %v1957, %v1578
    %v1959 = vadd.f32 %v1958, %v1580
    %v1960 = vadd.f32 %v1959, %v1583
    %v1961 = vadd.f32 %v1960, %v1585
    %v1962 = vadd.f32 %v1961, %v1588
    %v1963 = vadd.f32 %v1962, %v1590
    %v1964 = vadd.f32 %v1963, %v1593
    %v1965 = vadd.f32 %v1964, %v1595
    %v1966 = vadd.f32 %v1965, %v1598
    %v1967 = vadd.f32 %v1966, %v1600
    %v1968 = vadd.f32 %v1967, %v1603
    %v1969 = vadd.f32 %v1968, %v1605
    %v1970 = vadd.f32 %v1969, %v1608
    %v1971 = vadd.f32 %v1970, %v1610
    %v1972 = vadd.f32 %v1971, %v1613
    %v1973 = vadd.f32 %v1972, %v1615
    %v1974 = vadd.f32 %v1973, %v1618
    %v1975 = vadd.f32 %v1974, %v1620
    %v1976 = vadd.f32 %v1975, %v1623
    %v1977 = vadd.f32 %v1976, %v1625
    %v1978 = vadd.f32 %v1977, %v1628
    %v1979 = vadd.f32 %v1978, %v1630
    %v1980 = vadd.f32 %v1979, %v1633
    %v1981 = vadd.f32 %v1980, %v1635
    %v1982 = vadd.f32 %v1981, %v1638
    %v1983 = vadd.f32 %v1982, %v1640
    %v1984 = vadd.f32 %v1983, %v1643
    %v1985 = vadd.f32 %v1984, %v1645
    %v1986 = vadd.f32 %v1985, %v1648
    %v1987 = vadd.f32 %v1986, %v1650
    %v1988 = vadd.f32 %v1987, %v1653
    %v1989 = vadd.f32 %v1988, %v1655
    %v1990 = vadd.f32 %v1989, %v1658
    %v1991 = vadd.f32 %v1990, %v1660
    %v1992 = vadd.f32 %v1991, %v1663
    %v1993 = vadd.f32 %v1992, %v1665
    %v1994 = vadd.f32 %v1993, %v1668
    %v1995 = vadd.f32 %v1994, %v1670
    %v1996 = vadd.f32 %v1995, %v1673
    %v1997 = vadd.f32 %v1996, %v1675
    %v1998 = vadd.f32 %v1997, %v1678
    %v1999 = vadd.f32 %v1998, %v1680
    %v2000 = vadd.f32 %v1999, %v1683
    %v2001 = vadd.f32 %v2000, %v1685
    %v2002 = vadd.f32 %v2001, %v1688
    %v2003 = vadd.f32 %v2002, %v1690
    %v2004 = vadd.f32 %v2003, %v1693
    %v2005 = vadd.f32 %v2004, %v1695
    %v2006 = vadd.f32 %v2005, %v1698
    %v2007 = vadd.f32 %v2006, %v1700
    %v2008 = vadd.f32 %v2007, %v1703
    %v2009 = vadd.f32 %v2008, %v1705
    %v2010 = vadd.f32 %v2009, %v1708
    %v2011 = vadd.f32 %v2010, %v1710
    %v2012 = vadd.f32 %v2011, %v1713
    %v2013 = vadd.f32 %v2012, %v1715
    %v2014 = vadd.f32 %v2013, %v1718
    %v2015 = vadd.f32 %v2014, %v1720
    %v2016 = vadd.f32 %v2015, %v1723
    %v2017 = vadd.f32 %v2016, %v1725
    %v2018 = vadd.f32 %v2017, %v1728
    %v2019 = vadd.f32 %v2018, %v1730
    %v2020 = vadd.f32 %v2019, %v1733
    %v2021 = vadd.f32 %v2020, %v1735
    %v2022 = vadd.f32 %v2021, %v1738
    %v2023 = vadd.f32 %v2022, %v1740
    %v2024 = vadd.f32 %v2023, %v1743
    %v2025 = vadd.f32 %v2024, %v1745
    %v2026 = vadd.f32 %v2025, %v1748
    %v2027 = vadd.f32 %v2026, %v1750
    %v2028 = vadd.f32 %v2027, %v1753
    %v2029 = vadd.f32 %v2028, %v1755
    %v2030 = vadd.f32 %v2029, %v1758
    %v2031 = vadd.f32 %v2030, %v1760
    %v2032 = vadd.f32 %v2031, %v1763
    %v2033 = vadd.f32 %v2032, %v1765
    %v2034 = vadd.f32 %v2033, %v1768
    %v2035 = vadd.f32 %v2034, %v1770
    %v2036 = vadd.f32 %v2035, %v1773
    %v2037 = vadd.f32 %v2036, %v1775
    %v2038 = vadd.f32 %v2037, %v1778
    %v2039 = vadd.f32 %v2038, %v1780
    %v2040 = vadd.f32 %v2039, %v1783
    %v2041 = vadd.f32 %v2040, %v1785
    %v2042 = vrot.slane %v2041, 4
    %v2043 = vadd.f32 %v2041, %v2042
    %v2044 = vrot.slane %v2043, 2
    %v2045 = vadd.f32 %v2043, %v2044
    %v2046 = vrot.slane %v2045, 1
    %v2047 = vadd.f32 %v2045, %v2046
    %v2048 = vmul.f32 %v1148, %v1148
    %v2049 = vmul.f32 %v1150, %v1150
    %v2050 = vmul.f32 %v1153, %v1153
    %v2051 = vmul.f32 %v1155, %v1155
    %v2052 = vmul.f32 %v1158, %v1158
    %v2053 = vmul.f32 %v1160, %v1160
    %v2054 = vmul.f32 %v1163, %v1163
    %v2055 = vmul.f32 %v1165, %v1165
    %v2056 = vmul.f32 %v1168, %v1168
    %v2057 = vmul.f32 %v1170, %v1170
    %v2058 = vmul.f32 %v1173, %v1173
    %v2059 = vmul.f32 %v1175, %v1175
    %v2060 = vmul.f32 %v1178, %v1178
    %v2061 = vmul.f32 %v1180, %v1180
    %v2062 = vmul.f32 %v1183, %v1183
    %v2063 = vmul.f32 %v1185, %v1185
    %v2064 = vmul.f32 %v1188, %v1188
    %v2065 = vmul.f32 %v1190, %v1190
    %v2066 = vmul.f32 %v1193, %v1193
    %v2067 = vmul.f32 %v1195, %v1195
    %v2068 = vmul.f32 %v1198, %v1198
    %v2069 = vmul.f32 %v1200, %v1200
    %v2070 = vmul.f32 %v1203, %v1203
    %v2071 = vmul.f32 %v1205, %v1205
    %v2072 = vmul.f32 %v1208, %v1208
    %v2073 = vmul.f32 %v1210, %v1210
    %v2074 = vmul.f32 %v1213, %v1213
    %v2075 = vmul.f32 %v1215, %v1215
    %v2076 = vmul.f32 %v1218, %v1218
    %v2077 = vmul.f32 %v1220, %v1220
    %v2078 = vmul.f32 %v1223, %v1223
    %v2079 = vmul.f32 %v1225, %v1225
    %v2080 = vmul.f32 %v1228, %v1228
    %v2081 = vmul.f32 %v1230, %v1230
    %v2082 = vmul.f32 %v1233, %v1233
    %v2083 = vmul.f32 %v1235, %v1235
    %v2084 = vmul.f32 %v1238, %v1238
    %v2085 = vmul.f32 %v1240, %v1240
    %v2086 = vmul.f32 %v1243, %v1243
    %v2087 = vmul.f32 %v1245, %v1245
    %v2088 = vmul.f32 %v1248, %v1248
    %v2089 = vmul.f32 %v1250, %v1250
    %v2090 = vmul.f32 %v1253, %v1253
    %v2091 = vmul.f32 %v1255, %v1255
    %v2092 = vmul.f32 %v1258, %v1258
    %v2093 = vmul.f32 %v1260, %v1260
    %v2094 = vmul.f32 %v1263, %v1263
    %v2095 = vmul.f32 %v1265, %v1265
    %v2096 = vmul.f32 %v1268, %v1268
    %v2097 = vmul.f32 %v1270, %v1270
    %v2098 = vmul.f32 %v1273, %v1273
    %v2099 = vmul.f32 %v1275, %v1275
    %v2100 = vmul.f32 %v1278, %v1278
    %v2101 = vmul.f32 %v1280, %v1280
    %v2102 = vmul.f32 %v1283, %v1283
    %v2103 = vmul.f32 %v1285, %v1285
    %v2104 = vmul.f32 %v1288, %v1288
    %v2105 = vmul.f32 %v1290, %v1290
    %v2106 = vmul.f32 %v1293, %v1293
    %v2107 = vmul.f32 %v1295, %v1295
    %v2108 = vmul.f32 %v1298, %v1298
    %v2109 = vmul.f32 %v1300, %v1300
    %v2110 = vmul.f32 %v1303, %v1303
    %v2111 = vmul.f32 %v1305, %v1305
    %v2112 = vmul.f32 %v1308, %v1308
    %v2113 = vmul.f32 %v1310, %v1310
    %v2114 = vmul.f32 %v1313, %v1313
    %v2115 = vmul.f32 %v1315, %v1315
    %v2116 = vmul.f32 %v1318, %v1318
    %v2117 = vmul.f32 %v1320, %v1320
    %v2118 = vmul.f32 %v1323, %v1323
    %v2119 = vmul.f32 %v1325, %v1325
    %v2120 = vmul.f32 %v1328, %v1328
    %v2121 = vmul.f32 %v1330, %v1330
    %v2122 = vmul.f32 %v1333, %v1333
    %v2123 = vmul.f32 %v1335, %v1335
    %v2124 = vmul.f32 %v1338, %v1338
    %v2125 = vmul.f32 %v1340, %v1340
    %v2126 = vmul.f32 %v1343, %v1343
    %v2127 = vmul.f32 %v1345, %v1345
    %v2128 = vmul.f32 %v1348, %v1348
    %v2129 = vmul.f32 %v1350, %v1350
    %v2130 = vmul.f32 %v1353, %v1353
    %v2131 = vmul.f32 %v1355, %v1355
    %v2132 = vmul.f32 %v1358, %v1358
    %v2133 = vmul.f32 %v1360, %v1360
    %v2134 = vmul.f32 %v1363, %v1363
    %v2135 = vmul.f32 %v1365, %v1365
    %v2136 = vmul.f32 %v1368, %v1368
    %v2137 = vmul.f32 %v1370, %v1370
    %v2138 = vmul.f32 %v1373, %v1373
    %v2139 = vmul.f32 %v1375, %v1375
    %v2140 = vmul.f32 %v1378, %v1378
    %v2141 = vmul.f32 %v1380, %v1380
    %v2142 = vmul.f32 %v1383, %v1383
    %v2143 = vmul.f32 %v1385, %v1385
    %v2144 = vmul.f32 %v1388, %v1388
    %v2145 = vmul.f32 %v1390, %v1390
    %v2146 = vmul.f32 %v1393, %v1393
    %v2147 = vmul.f32 %v1395, %v1395
    %v2148 = vmul.f32 %v1398, %v1398
    %v2149 = vmul.f32 %v1400, %v1400
    %v2150 = vmul.f32 %v1403, %v1403
    %v2151 = vmul.f32 %v1405, %v1405
    %v2152 = vmul.f32 %v1408, %v1408
    %v2153 = vmul.f32 %v1410, %v1410
    %v2154 = vmul.f32 %v1413, %v1413
    %v2155 = vmul.f32 %v1415, %v1415
    %v2156 = vmul.f32 %v1418, %v1418
    %v2157 = vmul.f32 %v1420, %v1420
    %v2158 = vmul.f32 %v1423, %v1423
    %v2159 = vmul.f32 %v1425, %v1425
    %v2160 = vmul.f32 %v1428, %v1428
    %v2161 = vmul.f32 %v1430, %v1430
    %v2162 = vmul.f32 %v1433, %v1433
    %v2163 = vmul.f32 %v1435, %v1435
    %v2164 = vmul.f32 %v1438, %v1438
    %v2165 = vmul.f32 %v1440, %v1440
    %v2166 = vmul.f32 %v1443, %v1443
    %v2167 = vmul.f32 %v1445, %v1445
    %v2168 = vmul.f32 %v1448, %v1448
    %v2169 = vmul.f32 %v1450, %v1450
    %v2170 = vmul.f32 %v1453, %v1453
    %v2171 = vmul.f32 %v1455, %v1455
    %v2172 = vmul.f32 %v1458, %v1458
    %v2173 = vmul.f32 %v1460, %v1460
    %v2174 = vmul.f32 %v1463, %v1463
    %v2175 = vmul.f32 %v1465, %v1465
    %v2176 = vmul.f32 %v1468, %v1468
    %v2177 = vmul.f32 %v1470, %v1470
    %v2178 = vmul.f32 %v1473, %v1473
    %v2179 = vmul.f32 %v1475, %v1475
    %v2180 = vmul.f32 %v1478, %v1478
    %v2181 = vmul.f32 %v1480, %v1480
    %v2182 = vmul.f32 %v1483, %v1483
    %v2183 = vmul.f32 %v1485, %v1485
    %v2184 = vmul.f32 %v1488, %v1488
    %v2185 = vmul.f32 %v1490, %v1490
    %v2186 = vmul.f32 %v1493, %v1493
    %v2187 = vmul.f32 %v1495, %v1495
    %v2188 = vmul.f32 %v1498, %v1498
    %v2189 = vmul.f32 %v1500, %v1500
    %v2190 = vmul.f32 %v1503, %v1503
    %v2191 = vmul.f32 %v1505, %v1505
    %v2192 = vmul.f32 %v1508, %v1508
    %v2193 = vmul.f32 %v1510, %v1510
    %v2194 = vmul.f32 %v1513, %v1513
    %v2195 = vmul.f32 %v1515, %v1515
    %v2196 = vmul.f32 %v1518, %v1518
    %v2197 = vmul.f32 %v1520, %v1520
    %v2198 = vmul.f32 %v1523, %v1523
    %v2199 = vmul.f32 %v1525, %v1525
    %v2200 = vmul.f32 %v1528, %v1528
    %v2201 = vmul.f32 %v1530, %v1530
    %v2202 = vmul.f32 %v1533, %v1533
    %v2203 = vmul.f32 %v1535, %v1535
    %v2204 = vmul.f32 %v1538, %v1538
    %v2205 = vmul.f32 %v1540, %v1540
    %v2206 = vmul.f32 %v1543, %v1543
    %v2207 = vmul.f32 %v1545, %v1545
    %v2208 = vmul.f32 %v1548, %v1548
    %v2209 = vmul.f32 %v1550, %v1550
    %v2210 = vmul.f32 %v1553, %v1553
    %v2211 = vmul.f32 %v1555, %v1555
    %v2212 = vmul.f32 %v1558, %v1558
    %v2213 = vmul.f32 %v1560, %v1560
    %v2214 = vmul.f32 %v1563, %v1563
    %v2215 = vmul.f32 %v1565, %v1565
    %v2216 = vmul.f32 %v1568, %v1568
    %v2217 = vmul.f32 %v1570, %v1570
    %v2218 = vmul.f32 %v1573, %v1573
    %v2219 = vmul.f32 %v1575, %v1575
    %v2220 = vmul.f32 %v1578, %v1578
    %v2221 = vmul.f32 %v1580, %v1580
    %v2222 = vmul.f32 %v1583, %v1583
    %v2223 = vmul.f32 %v1585, %v1585
    %v2224 = vmul.f32 %v1588, %v1588
    %v2225 = vmul.f32 %v1590, %v1590
    %v2226 = vmul.f32 %v1593, %v1593
    %v2227 = vmul.f32 %v1595, %v1595
    %v2228 = vmul.f32 %v1598, %v1598
    %v2229 = vmul.f32 %v1600, %v1600
    %v2230 = vmul.f32 %v1603, %v1603
    %v2231 = vmul.f32 %v1605, %v1605
    %v2232 = vmul.f32 %v1608, %v1608
    %v2233 = vmul.f32 %v1610, %v1610
    %v2234 = vmul.f32 %v1613, %v1613
    %v2235 = vmul.f32 %v1615, %v1615
    %v2236 = vmul.f32 %v1618, %v1618
    %v2237 = vmul.f32 %v1620, %v1620
    %v2238 = vmul.f32 %v1623, %v1623
    %v2239 = vmul.f32 %v1625, %v1625
    %v2240 = vmul.f32 %v1628, %v1628
    %v2241 = vmul.f32 %v1630, %v1630
    %v2242 = vmul.f32 %v1633, %v1633
    %v2243 = vmul.f32 %v1635, %v1635
    %v2244 = vmul.f32 %v1638, %v1638
    %v2245 = vmul.f32 %v1640, %v1640
    %v2246 = vmul.f32 %v1643, %v1643
    %v2247 = vmul.f32 %v1645, %v1645
    %v2248 = vmul.f32 %v1648, %v1648
    %v2249 = vmul.f32 %v1650, %v1650
    %v2250 = vmul.f32 %v1653, %v1653
    %v2251 = vmul.f32 %v1655, %v1655
    %v2252 = vmul.f32 %v1658, %v1658
    %v2253 = vmul.f32 %v1660, %v1660
    %v2254 = vmul.f32 %v1663, %v1663
    %v2255 = vmul.f32 %v1665, %v1665
    %v2256 = vmul.f32 %v1668, %v1668
    %v2257 = vmul.f32 %v1670, %v1670
    %v2258 = vmul.f32 %v1673, %v1673
    %v2259 = vmul.f32 %v1675, %v1675
    %v2260 = vmul.f32 %v1678, %v1678
    %v2261 = vmul.f32 %v1680, %v1680
    %v2262 = vmul.f32 %v1683, %v1683
    %v2263 = vmul.f32 %v1685, %v1685
    %v2264 = vmul.f32 %v1688, %v1688
    %v2265 = vmul.f32 %v1690, %v1690
    %v2266 = vmul.f32 %v1693, %v1693
    %v2267 = vmul.f32 %v1695, %v1695
    %v2268 = vmul.f32 %v1698, %v1698
    %v2269 = vmul.f32 %v1700, %v1700
    %v2270 = vmul.f32 %v1703, %v1703
    %v2271 = vmul.f32 %v1705, %v1705
    %v2272 = vmul.f32 %v1708, %v1708
    %v2273 = vmul.f32 %v1710, %v1710
    %v2274 = vmul.f32 %v1713, %v1713
    %v2275 = vmul.f32 %v1715, %v1715
    %v2276 = vmul.f32 %v1718, %v1718
    %v2277 = vmul.f32 %v1720, %v1720
    %v2278 = vmul.f32 %v1723, %v1723
    %v2279 = vmul.f32 %v1725, %v1725
    %v2280 = vmul.f32 %v1728, %v1728
    %v2281 = vmul.f32 %v1730, %v1730
    %v2282 = vmul.f32 %v1733, %v1733
    %v2283 = vmul.f32 %v1735, %v1735
    %v2284 = vmul.f32 %v1738, %v1738
    %v2285 = vmul.f32 %v1740, %v1740
    %v2286 = vmul.f32 %v1743, %v1743
    %v2287 = vmul.f32 %v1745, %v1745
    %v2288 = vmul.f32 %v1748, %v1748
    %v2289 = vmul.f32 %v1750, %v1750
    %v2290 = vmul.f32 %v1753, %v1753
    %v2291 = vmul.f32 %v1755, %v1755
    %v2292 = vmul.f32 %v1758, %v1758
    %v2293 = vmul.f32 %v1760, %v1760
    %v2294 = vmul.f32 %v1763, %v1763
    %v2295 = vmul.f32 %v1765, %v1765
    %v2296 = vmul.f32 %v1768, %v1768
    %v2297 = vmul.f32 %v1770, %v1770
    %v2298 = vmul.f32 %v1773, %v1773
    %v2299 = vmul.f32 %v1775, %v1775
    %v2300 = vmul.f32 %v1778, %v1778
    %v2301 = vmul.f32 %v1780, %v1780
    %v2302 = vmul.f32 %v1783, %v1783
    %v2303 = vmul.f32 %v1785, %v1785
    %v2304 = vadd.f32 %v2048, %v2049
    %v2305 = vadd.f32 %v2304, %v2050
    %v2306 = vadd.f32 %v2305, %v2051
    %v2307 = vadd.f32 %v2306, %v2052
    %v2308 = vadd.f32 %v2307, %v2053
    %v2309 = vadd.f32 %v2308, %v2054
    %v2310 = vadd.f32 %v2309, %v2055
    %v2311 = vadd.f32 %v2310, %v2056
    %v2312 = vadd.f32 %v2311, %v2057
    %v2313 = vadd.f32 %v2312, %v2058
    %v2314 = vadd.f32 %v2313, %v2059
    %v2315 = vadd.f32 %v2314, %v2060
    %v2316 = vadd.f32 %v2315, %v2061
    %v2317 = vadd.f32 %v2316, %v2062
    %v2318 = vadd.f32 %v2317, %v2063
    %v2319 = vadd.f32 %v2318, %v2064
    %v2320 = vadd.f32 %v2319, %v2065
    %v2321 = vadd.f32 %v2320, %v2066
    %v2322 = vadd.f32 %v2321, %v2067
    %v2323 = vadd.f32 %v2322, %v2068
    %v2324 = vadd.f32 %v2323, %v2069
    %v2325 = vadd.f32 %v2324, %v2070
    %v2326 = vadd.f32 %v2325, %v2071
    %v2327 = vadd.f32 %v2326, %v2072
    %v2328 = vadd.f32 %v2327, %v2073
    %v2329 = vadd.f32 %v2328, %v2074
    %v2330 = vadd.f32 %v2329, %v2075
    %v2331 = vadd.f32 %v2330, %v2076
    %v2332 = vadd.f32 %v2331, %v2077
    %v2333 = vadd.f32 %v2332, %v2078
    %v2334 = vadd.f32 %v2333, %v2079
    %v2335 = vadd.f32 %v2334, %v2080
    %v2336 = vadd.f32 %v2335, %v2081
    %v2337 = vadd.f32 %v2336, %v2082
    %v2338 = vadd.f32 %v2337, %v2083
    %v2339 = vadd.f32 %v2338, %v2084
    %v2340 = vadd.f32 %v2339, %v2085
    %v2341 = vadd.f32 %v2340, %v2086
    %v2342 = vadd.f32 %v2341, %v2087
    %v2343 = vadd.f32 %v2342, %v2088
    %v2344 = vadd.f32 %v2343, %v2089
    %v2345 = vadd.f32 %v2344, %v2090
    %v2346 = vadd.f32 %v2345, %v2091
    %v2347 = vadd.f32 %v2346, %v2092
    %v2348 = vadd.f32 %v2347, %v2093
    %v2349 = vadd.f32 %v2348, %v2094
    %v2350 = vadd.f32 %v2349, %v2095
    %v2351 = vadd.f32 %v2350, %v2096
    %v2352 = vadd.f32 %v2351, %v2097
    %v2353 = vadd.f32 %v2352, %v2098
    %v2354 = vadd.f32 %v2353, %v2099
    %v2355 = vadd.f32 %v2354, %v2100
    %v2356 = vadd.f32 %v2355, %v2101
    %v2357 = vadd.f32 %v2356, %v2102
    %v2358 = vadd.f32 %v2357, %v2103
    %v2359 = vadd.f32 %v2358, %v2104
    %v2360 = vadd.f32 %v2359, %v2105
    %v2361 = vadd.f32 %v2360, %v2106
    %v2362 = vadd.f32 %v2361, %v2107
    %v2363 = vadd.f32 %v2362, %v2108
    %v2364 = vadd.f32 %v2363, %v2109
    %v2365 = vadd.f32 %v2364, %v2110
    %v2366 = vadd.f32 %v2365, %v2111
    %v2367 = vadd.f32 %v2366, %v2112
    %v2368 = vadd.f32 %v2367, %v2113
    %v2369 = vadd.f32 %v2368, %v2114
    %v2370 = vadd.f32 %v2369, %v2115
    %v2371 = vadd.f32 %v2370, %v2116
    %v2372 = vadd.f32 %v2371, %v2117
    %v2373 = vadd.f32 %v2372, %v2118
    %v2374 = vadd.f32 %v2373, %v2119
    %v2375 = vadd.f32 %v2374, %v2120
    %v2376 = vadd.f32 %v2375, %v2121
    %v2377 = vadd.f32 %v2376, %v2122
    %v2378 = vadd.f32 %v2377, %v2123
    %v2379 = vadd.f32 %v2378, %v2124
    %v2380 = vadd.f32 %v2379, %v2125
    %v2381 = vadd.f32 %v2380, %v2126
    %v2382 = vadd.f32 %v2381, %v2127
    %v2383 = vadd.f32 %v2382, %v2128
    %v2384 = vadd.f32 %v2383, %v2129
    %v2385 = vadd.f32 %v2384, %v2130
    %v2386 = vadd.f32 %v2385, %v2131
    %v2387 = vadd.f32 %v2386, %v2132
    %v2388 = vadd.f32 %v2387, %v2133
    %v2389 = vadd.f32 %v2388, %v2134
    %v2390 = vadd.f32 %v2389, %v2135
    %v2391 = vadd.f32 %v2390, %v2136
    %v2392 = vadd.f32 %v2391, %v2137
    %v2393 = vadd.f32 %v2392, %v2138
    %v2394 = vadd.f32 %v2393, %v2139
    %v2395 = vadd.f32 %v2394, %v2140
    %v2396 = vadd.f32 %v2395, %v2141
    %v2397 = vadd.f32 %v2396, %v2142
    %v2398 = vadd.f32 %v2397, %v2143
    %v2399 = vadd.f32 %v2398, %v2144
    %v2400 = vadd.f32 %v2399, %v2145
    %v2401 = vadd.f32 %v2400, %v2146
    %v2402 = vadd.f32 %v2401, %v2147
    %v2403 = vadd.f32 %v2402, %v2148
    %v2404 = vadd.f32 %v2403, %v2149
    %v2405 = vadd.f32 %v2404, %v2150
    %v2406 = vadd.f32 %v2405, %v2151
    %v2407 = vadd.f32 %v2406, %v2152
    %v2408 = vadd.f32 %v2407, %v2153
    %v2409 = vadd.f32 %v2408, %v2154
    %v2410 = vadd.f32 %v2409, %v2155
    %v2411 = vadd.f32 %v2410, %v2156
    %v2412 = vadd.f32 %v2411, %v2157
    %v2413 = vadd.f32 %v2412, %v2158
    %v2414 = vadd.f32 %v2413, %v2159
    %v2415 = vadd.f32 %v2414, %v2160
    %v2416 = vadd.f32 %v2415, %v2161
    %v2417 = vadd.f32 %v2416, %v2162
    %v2418 = vadd.f32 %v2417, %v2163
    %v2419 = vadd.f32 %v2418, %v2164
    %v2420 = vadd.f32 %v2419, %v2165
    %v2421 = vadd.f32 %v2420, %v2166
    %v2422 = vadd.f32 %v2421, %v2167
    %v2423 = vadd.f32 %v2422, %v2168
    %v2424 = vadd.f32 %v2423, %v2169
    %v2425 = vadd.f32 %v2424, %v2170
    %v2426 = vadd.f32 %v2425, %v2171
    %v2427 = vadd.f32 %v2426, %v2172
    %v2428 = vadd.f32 %v2427, %v2173
    %v2429 = vadd.f32 %v2428, %v2174
    %v2430 = vadd.f32 %v2429, %v2175
    %v2431 = vadd.f32 %v2430, %v2176
    %v2432 = vadd.f32 %v2431, %v2177
    %v2433 = vadd.f32 %v2432, %v2178
    %v2434 = vadd.f32 %v2433, %v2179
    %v2435 = vadd.f32 %v2434, %v2180
    %v2436 = vadd.f32 %v2435, %v2181
    %v2437 = vadd.f32 %v2436, %v2182
    %v2438 = vadd.f32 %v2437, %v2183
    %v2439 = vadd.f32 %v2438, %v2184
    %v2440 = vadd.f32 %v2439, %v2185
    %v2441 = vadd.f32 %v2440, %v2186
    %v2442 = vadd.f32 %v2441, %v2187
    %v2443 = vadd.f32 %v2442, %v2188
    %v2444 = vadd.f32 %v2443, %v2189
    %v2445 = vadd.f32 %v2444, %v2190
    %v2446 = vadd.f32 %v2445, %v2191
    %v2447 = vadd.f32 %v2446, %v2192
    %v2448 = vadd.f32 %v2447, %v2193
    %v2449 = vadd.f32 %v2448, %v2194
    %v2450 = vadd.f32 %v2449, %v2195
    %v2451 = vadd.f32 %v2450, %v2196
    %v2452 = vadd.f32 %v2451, %v2197
    %v2453 = vadd.f32 %v2452, %v2198
    %v2454 = vadd.f32 %v2453, %v2199
    %v2455 = vadd.f32 %v2454, %v2200
    %v2456 = vadd.f32 %v2455, %v2201
    %v2457 = vadd.f32 %v2456, %v2202
    %v2458 = vadd.f32 %v2457, %v2203
    %v2459 = vadd.f32 %v2458, %v2204
    %v2460 = vadd.f32 %v2459, %v2205
    %v2461 = vadd.f32 %v2460, %v2206
    %v2462 = vadd.f32 %v2461, %v2207
    %v2463 = vadd.f32 %v2462, %v2208
    %v2464 = vadd.f32 %v2463, %v2209
    %v2465 = vadd.f32 %v2464, %v2210
    %v2466 = vadd.f32 %v2465, %v2211
    %v2467 = vadd.f32 %v2466, %v2212
    %v2468 = vadd.f32 %v2467, %v2213
    %v2469 = vadd.f32 %v2468, %v2214
    %v2470 = vadd.f32 %v2469, %v2215
    %v2471 = vadd.f32 %v2470, %v2216
    %v2472 = vadd.f32 %v2471, %v2217
    %v2473 = vadd.f32 %v2472, %v2218
    %v2474 = vadd.f32 %v2473, %v2219
    %v2475 = vadd.f32 %v2474, %v2220
    %v2476 = vadd.f32 %v2475, %v2221
    %v2477 = vadd.f32 %v2476, %v2222
    %v2478 = vadd.f32 %v2477, %v2223
    %v2479 = vadd.f32 %v2478, %v2224
    %v2480 = vadd.f32 %v2479, %v2225
    %v2481 = vadd.f32 %v2480, %v2226
    %v2482 = vadd.f32 %v2481, %v2227
    %v2483 = vadd.f32 %v2482, %v2228
    %v2484 = vadd.f32 %v2483, %v2229
    %v2485 = vadd.f32 %v2484, %v2230
    %v2486 = vadd.f32 %v2485, %v2231
    %v2487 = vadd.f32 %v2486, %v2232
    %v2488 = vadd.f32 %v2487, %v2233
    %v2489 = vadd.f32 %v2488, %v2234
    %v2490 = vadd.f32 %v2489, %v2235
    %v2491 = vadd.f32 %v2490, %v2236
    %v2492 = vadd.f32 %v2491, %v2237
    %v2493 = vadd.f32 %v2492, %v2238
    %v2494 = vadd.f32 %v2493, %v2239
    %v2495 = vadd.f32 %v2494, %v2240
    %v2496 = vadd.f32 %v2495, %v2241
    %v2497 = vadd.f32 %v2496, %v2242
    %v2498 = vadd.f32 %v2497, %v2243
    %v2499 = vadd.f32 %v2498, %v2244
    %v2500 = vadd.f32 %v2499, %v2245
    %v2501 = vadd.f32 %v2500, %v2246
    %v2502 = vadd.f32 %v2501, %v2247
    %v2503 = vadd.f32 %v2502, %v2248
    %v2504 = vadd.f32 %v2503, %v2249
    %v2505 = vadd.f32 %v2504, %v2250
    %v2506 = vadd.f32 %v2505, %v2251
    %v2507 = vadd.f32 %v2506, %v2252
    %v2508 = vadd.f32 %v2507, %v2253
    %v2509 = vadd.f32 %v2508, %v2254
    %v2510 = vadd.f32 %v2509, %v2255
    %v2511 = vadd.f32 %v2510, %v2256
    %v2512 = vadd.f32 %v2511, %v2257
    %v2513 = vadd.f32 %v2512, %v2258
    %v2514 = vadd.f32 %v2513, %v2259
    %v2515 = vadd.f32 %v2514, %v2260
    %v2516 = vadd.f32 %v2515, %v2261
    %v2517 = vadd.f32 %v2516, %v2262
    %v2518 = vadd.f32 %v2517, %v2263
    %v2519 = vadd.f32 %v2518, %v2264
    %v2520 = vadd.f32 %v2519, %v2265
    %v2521 = vadd.f32 %v2520, %v2266
    %v2522 = vadd.f32 %v2521, %v2267
    %v2523 = vadd.f32 %v2522, %v2268
    %v2524 = vadd.f32 %v2523, %v2269
    %v2525 = vadd.f32 %v2524, %v2270
    %v2526 = vadd.f32 %v2525, %v2271
    %v2527 = vadd.f32 %v2526, %v2272
    %v2528 = vadd.f32 %v2527, %v2273
    %v2529 = vadd.f32 %v2528, %v2274
    %v2530 = vadd.f32 %v2529, %v2275
    %v2531 = vadd.f32 %v2530, %v2276
    %v2532 = vadd.f32 %v2531, %v2277
    %v2533 = vadd.f32 %v2532, %v2278
    %v2534 = vadd.f32 %v2533, %v2279
    %v2535 = vadd.f32 %v2534, %v2280
    %v2536 = vadd.f32 %v2535, %v2281
    %v2537 = vadd.f32 %v2536, %v2282
    %v2538 = vadd.f32 %v2537, %v2283
    %v2539 = vadd.f32 %v2538, %v2284
    %v2540 = vadd.f32 %v2539, %v2285
    %v2541 = vadd.f32 %v2540, %v2286
    %v2542 = vadd.f32 %v2541, %v2287
    %v2543 = vadd.f32 %v2542, %v2288
    %v2544 = vadd.f32 %v2543, %v2289
    %v2545 = vadd.f32 %v2544, %v2290
    %v2546 = vadd.f32 %v2545, %v2291
    %v2547 = vadd.f32 %v2546, %v2292
    %v2548 = vadd.f32 %v2547, %v2293
    %v2549 = vadd.f32 %v2548, %v2294
    %v2550 = vadd.f32 %v2549, %v2295
    %v2551 = vadd.f32 %v2550, %v2296
    %v2552 = vadd.f32 %v2551, %v2297
    %v2553 = vadd.f32 %v2552, %v2298
    %v2554 = vadd.f32 %v2553, %v2299
    %v2555 = vadd.f32 %v2554, %v2300
    %v2556 = vadd.f32 %v2555, %v2301
    %v2557 = vadd.f32 %v2556, %v2302
    %v2558 = vadd.f32 %v2557, %v2303
    %v2559 = vrot.slane %v2558, 4
    %v2560 = vadd.f32 %v2558, %v2559
    %v2561 = vrot.slane %v2560, 2
    %v2562 = vadd.f32 %v2560, %v2561
    %v2563 = vrot.slane %v2562, 1
    %v2564 = vadd.f32 %v2562, %v2563
    %v2565 = vmul.f32 %v2047, 0.00048828125
    %v2566 = vmul.f32 %v2564, 0.00048828125
    %v2567 = vmul.f32 %v2565, %v2565
    %v2568 = vsub.f32 %v2566, %v2567
    %v2569 = vmax.f32 %v2568, 0.0
    %v2570 = vsub.f32 %v1148, %v2565
    %v2571 = vsub.f32 %v1150, %v2565
    %v2572 = vsub.f32 %v1153, %v2565
    %v2573 = vsub.f32 %v1155, %v2565
    %v2574 = vsub.f32 %v1158, %v2565
    %v2575 = vsub.f32 %v1160, %v2565
    %v2576 = vsub.f32 %v1163, %v2565
    %v2577 = vsub.f32 %v1165, %v2565
    %v2578 = vsub.f32 %v1168, %v2565
    %v2579 = vsub.f32 %v1170, %v2565
    %v2580 = vsub.f32 %v1173, %v2565
    %v2581 = vsub.f32 %v1175, %v2565
    %v2582 = vsub.f32 %v1178, %v2565
    %v2583 = vsub.f32 %v1180, %v2565
    %v2584 = vsub.f32 %v1183, %v2565
    %v2585 = vsub.f32 %v1185, %v2565
    %v2586 = vsub.f32 %v1188, %v2565
    %v2587 = vsub.f32 %v1190, %v2565
    %v2588 = vsub.f32 %v1193, %v2565
    %v2589 = vsub.f32 %v1195, %v2565
    %v2590 = vsub.f32 %v1198, %v2565
    %v2591 = vsub.f32 %v1200, %v2565
    %v2592 = vsub.f32 %v1203, %v2565
    %v2593 = vsub.f32 %v1205, %v2565
    %v2594 = vsub.f32 %v1208, %v2565
    %v2595 = vsub.f32 %v1210, %v2565
    %v2596 = vsub.f32 %v1213, %v2565
    %v2597 = vsub.f32 %v1215, %v2565
    %v2598 = vsub.f32 %v1218, %v2565
    %v2599 = vsub.f32 %v1220, %v2565
    %v2600 = vsub.f32 %v1223, %v2565
    %v2601 = vsub.f32 %v1225, %v2565
    %v2602 = vsub.f32 %v1228, %v2565
    %v2603 = vsub.f32 %v1230, %v2565
    %v2604 = vsub.f32 %v1233, %v2565
    %v2605 = vsub.f32 %v1235, %v2565
    %v2606 = vsub.f32 %v1238, %v2565
    %v2607 = vsub.f32 %v1240, %v2565
    %v2608 = vsub.f32 %v1243, %v2565
    %v2609 = vsub.f32 %v1245, %v2565
    %v2610 = vsub.f32 %v1248, %v2565
    %v2611 = vsub.f32 %v1250, %v2565
    %v2612 = vsub.f32 %v1253, %v2565
    %v2613 = vsub.f32 %v1255, %v2565
    %v2614 = vsub.f32 %v1258, %v2565
    %v2615 = vsub.f32 %v1260, %v2565
    %v2616 = vsub.f32 %v1263, %v2565
    %v2617 = vsub.f32 %v1265, %v2565
    %v2618 = vsub.f32 %v1268, %v2565
    %v2619 = vsub.f32 %v1270, %v2565
    %v2620 = vsub.f32 %v1273, %v2565
    %v2621 = vsub.f32 %v1275, %v2565
    %v2622 = vsub.f32 %v1278, %v2565
    %v2623 = vsub.f32 %v1280, %v2565
    %v2624 = vsub.f32 %v1283, %v2565
    %v2625 = vsub.f32 %v1285, %v2565
    %v2626 = vsub.f32 %v1288, %v2565
    %v2627 = vsub.f32 %v1290, %v2565
    %v2628 = vsub.f32 %v1293, %v2565
    %v2629 = vsub.f32 %v1295, %v2565
    %v2630 = vsub.f32 %v1298, %v2565
    %v2631 = vsub.f32 %v1300, %v2565
    %v2632 = vsub.f32 %v1303, %v2565
    %v2633 = vsub.f32 %v1305, %v2565
    %v2634 = vsub.f32 %v1308, %v2565
    %v2635 = vsub.f32 %v1310, %v2565
    %v2636 = vsub.f32 %v1313, %v2565
    %v2637 = vsub.f32 %v1315, %v2565
    %v2638 = vsub.f32 %v1318, %v2565
    %v2639 = vsub.f32 %v1320, %v2565
    %v2640 = vsub.f32 %v1323, %v2565
    %v2641 = vsub.f32 %v1325, %v2565
    %v2642 = vsub.f32 %v1328, %v2565
    %v2643 = vsub.f32 %v1330, %v2565
    %v2644 = vsub.f32 %v1333, %v2565
    %v2645 = vsub.f32 %v1335, %v2565
    %v2646 = vsub.f32 %v1338, %v2565
    %v2647 = vsub.f32 %v1340, %v2565
    %v2648 = vsub.f32 %v1343, %v2565
    %v2649 = vsub.f32 %v1345, %v2565
    %v2650 = vsub.f32 %v1348, %v2565
    %v2651 = vsub.f32 %v1350, %v2565
    %v2652 = vsub.f32 %v1353, %v2565
    %v2653 = vsub.f32 %v1355, %v2565
    %v2654 = vsub.f32 %v1358, %v2565
    %v2655 = vsub.f32 %v1360, %v2565
    %v2656 = vsub.f32 %v1363, %v2565
    %v2657 = vsub.f32 %v1365, %v2565
    %v2658 = vsub.f32 %v1368, %v2565
    %v2659 = vsub.f32 %v1370, %v2565
    %v2660 = vsub.f32 %v1373, %v2565
    %v2661 = vsub.f32 %v1375, %v2565
    %v2662 = vsub.f32 %v1378, %v2565
    %v2663 = vsub.f32 %v1380, %v2565
    %v2664 = vsub.f32 %v1383, %v2565
    %v2665 = vsub.f32 %v1385, %v2565
    %v2666 = vsub.f32 %v1388, %v2565
    %v2667 = vsub.f32 %v1390, %v2565
    %v2668 = vsub.f32 %v1393, %v2565
    %v2669 = vsub.f32 %v1395, %v2565
    %v2670 = vsub.f32 %v1398, %v2565
    %v2671 = vsub.f32 %v1400, %v2565
    %v2672 = vsub.f32 %v1403, %v2565
    %v2673 = vsub.f32 %v1405, %v2565
    %v2674 = vsub.f32 %v1408, %v2565
    %v2675 = vsub.f32 %v1410, %v2565
    %v2676 = vsub.f32 %v1413, %v2565
    %v2677 = vsub.f32 %v1415, %v2565
    %v2678 = vsub.f32 %v1418, %v2565
    %v2679 = vsub.f32 %v1420, %v2565
    %v2680 = vsub.f32 %v1423, %v2565
    %v2681 = vsub.f32 %v1425, %v2565
    %v2682 = vsub.f32 %v1428, %v2565
    %v2683 = vsub.f32 %v1430, %v2565
    %v2684 = vsub.f32 %v1433, %v2565
    %v2685 = vsub.f32 %v1435, %v2565
    %v2686 = vsub.f32 %v1438, %v2565
    %v2687 = vsub.f32 %v1440, %v2565
    %v2688 = vsub.f32 %v1443, %v2565
    %v2689 = vsub.f32 %v1445, %v2565
    %v2690 = vsub.f32 %v1448, %v2565
    %v2691 = vsub.f32 %v1450, %v2565
    %v2692 = vsub.f32 %v1453, %v2565
    %v2693 = vsub.f32 %v1455, %v2565
    %v2694 = vsub.f32 %v1458, %v2565
    %v2695 = vsub.f32 %v1460, %v2565
    %v2696 = vsub.f32 %v1463, %v2565
    %v2697 = vsub.f32 %v1465, %v2565
    %v2698 = vsub.f32 %v1468, %v2565
    %v2699 = vsub.f32 %v1470, %v2565
    %v2700 = vsub.f32 %v1473, %v2565
    %v2701 = vsub.f32 %v1475, %v2565
    %v2702 = vsub.f32 %v1478, %v2565
    %v2703 = vsub.f32 %v1480, %v2565
    %v2704 = vsub.f32 %v1483, %v2565
    %v2705 = vsub.f32 %v1485, %v2565
    %v2706 = vsub.f32 %v1488, %v2565
    %v2707 = vsub.f32 %v1490, %v2565
    %v2708 = vsub.f32 %v1493, %v2565
    %v2709 = vsub.f32 %v1495, %v2565
    %v2710 = vsub.f32 %v1498, %v2565
    %v2711 = vsub.f32 %v1500, %v2565
    %v2712 = vsub.f32 %v1503, %v2565
    %v2713 = vsub.f32 %v1505, %v2565
    %v2714 = vsub.f32 %v1508, %v2565
    %v2715 = vsub.f32 %v1510, %v2565
    %v2716 = vsub.f32 %v1513, %v2565
    %v2717 = vsub.f32 %v1515, %v2565
    %v2718 = vsub.f32 %v1518, %v2565
    %v2719 = vsub.f32 %v1520, %v2565
    %v2720 = vsub.f32 %v1523, %v2565
    %v2721 = vsub.f32 %v1525, %v2565
    %v2722 = vsub.f32 %v1528, %v2565
    %v2723 = vsub.f32 %v1530, %v2565
    %v2724 = vsub.f32 %v1533, %v2565
    %v2725 = vsub.f32 %v1535, %v2565
    %v2726 = vsub.f32 %v1538, %v2565
    %v2727 = vsub.f32 %v1540, %v2565
    %v2728 = vsub.f32 %v1543, %v2565
    %v2729 = vsub.f32 %v1545, %v2565
    %v2730 = vsub.f32 %v1548, %v2565
    %v2731 = vsub.f32 %v1550, %v2565
    %v2732 = vsub.f32 %v1553, %v2565
    %v2733 = vsub.f32 %v1555, %v2565
    %v2734 = vsub.f32 %v1558, %v2565
    %v2735 = vsub.f32 %v1560, %v2565
    %v2736 = vsub.f32 %v1563, %v2565
    %v2737 = vsub.f32 %v1565, %v2565
    %v2738 = vsub.f32 %v1568, %v2565
    %v2739 = vsub.f32 %v1570, %v2565
    %v2740 = vsub.f32 %v1573, %v2565
    %v2741 = vsub.f32 %v1575, %v2565
    %v2742 = vsub.f32 %v1578, %v2565
    %v2743 = vsub.f32 %v1580, %v2565
    %v2744 = vsub.f32 %v1583, %v2565
    %v2745 = vsub.f32 %v1585, %v2565
    %v2746 = vsub.f32 %v1588, %v2565
    %v2747 = vsub.f32 %v1590, %v2565
    %v2748 = vsub.f32 %v1593, %v2565
    %v2749 = vsub.f32 %v1595, %v2565
    %v2750 = vsub.f32 %v1598, %v2565
    %v2751 = vsub.f32 %v1600, %v2565
    %v2752 = vsub.f32 %v1603, %v2565
    %v2753 = vsub.f32 %v1605, %v2565
    %v2754 = vsub.f32 %v1608, %v2565
    %v2755 = vsub.f32 %v1610, %v2565
    %v2756 = vsub.f32 %v1613, %v2565
    %v2757 = vsub.f32 %v1615, %v2565
    %v2758 = vsub.f32 %v1618, %v2565
    %v2759 = vsub.f32 %v1620, %v2565
    %v2760 = vsub.f32 %v1623, %v2565
    %v2761 = vsub.f32 %v1625, %v2565
    %v2762 = vsub.f32 %v1628, %v2565
    %v2763 = vsub.f32 %v1630, %v2565
    %v2764 = vsub.f32 %v1633, %v2565
    %v2765 = vsub.f32 %v1635, %v2565
    %v2766 = vsub.f32 %v1638, %v2565
    %v2767 = vsub.f32 %v1640, %v2565
    %v2768 = vsub.f32 %v1643, %v2565
    %v2769 = vsub.f32 %v1645, %v2565
    %v2770 = vsub.f32 %v1648, %v2565
    %v2771 = vsub.f32 %v1650, %v2565
    %v2772 = vsub.f32 %v1653, %v2565
    %v2773 = vsub.f32 %v1655, %v2565
    %v2774 = vsub.f32 %v1658, %v2565
    %v2775 = vsub.f32 %v1660, %v2565
    %v2776 = vsub.f32 %v1663, %v2565
    %v2777 = vsub.f32 %v1665, %v2565
    %v2778 = vsub.f32 %v1668, %v2565
    %v2779 = vsub.f32 %v1670, %v2565
    %v2780 = vsub.f32 %v1673, %v2565
    %v2781 = vsub.f32 %v1675, %v2565
    %v2782 = vsub.f32 %v1678, %v2565
    %v2783 = vsub.f32 %v1680, %v2565
    %v2784 = vsub.f32 %v1683, %v2565
    %v2785 = vsub.f32 %v1685, %v2565
    %v2786 = vsub.f32 %v1688, %v2565
    %v2787 = vsub.f32 %v1690, %v2565
    %v2788 = vsub.f32 %v1693, %v2565
    %v2789 = vsub.f32 %v1695, %v2565
    %v2790 = vsub.f32 %v1698, %v2565
    %v2791 = vsub.f32 %v1700, %v2565
    %v2792 = vsub.f32 %v1703, %v2565
    %v2793 = vsub.f32 %v1705, %v2565
    %v2794 = vsub.f32 %v1708, %v2565
    %v2795 = vsub.f32 %v1710, %v2565
    %v2796 = vsub.f32 %v1713, %v2565
    %v2797 = vsub.f32 %v1715, %v2565
    %v2798 = vsub.f32 %v1718, %v2565
    %v2799 = vsub.f32 %v1720, %v2565
    %v2800 = vsub.f32 %v1723, %v2565
    %v2801 = vsub.f32 %v1725, %v2565
    %v2802 = vsub.f32 %v1728, %v2565
    %v2803 = vsub.f32 %v1730, %v2565
    %v2804 = vsub.f32 %v1733, %v2565
    %v2805 = vsub.f32 %v1735, %v2565
    %v2806 = vsub.f32 %v1738, %v2565
    %v2807 = vsub.f32 %v1740, %v2565
    %v2808 = vsub.f32 %v1743, %v2565
    %v2809 = vsub.f32 %v1745, %v2565
    %v2810 = vsub.f32 %v1748, %v2565
    %v2811 = vsub.f32 %v1750, %v2565
    %v2812 = vsub.f32 %v1753, %v2565
    %v2813 = vsub.f32 %v1755, %v2565
    %v2814 = vsub.f32 %v1758, %v2565
    %v2815 = vsub.f32 %v1760, %v2565
    %v2816 = vsub.f32 %v1763, %v2565
    %v2817 = vsub.f32 %v1765, %v2565
    %v2818 = vsub.f32 %v1768, %v2565
    %v2819 = vsub.f32 %v1770, %v2565
    %v2820 = vsub.f32 %v1773, %v2565
    %v2821 = vsub.f32 %v1775, %v2565
    %v2822 = vsub.f32 %v1778, %v2565
    %v2823 = vsub.f32 %v1780, %v2565
    %v2824 = vsub.f32 %v1783, %v2565
    %v2825 = vsub.f32 %v1785, %v2565
    %v2826 = vadd.f32 %v2569, 1e-05
    %v2827 = vrsqrt.pop %v2826
    %v2828 = vmul.f32 %v2827, %v2826
    %v2829 = vmul.f32 %v2828, %v2827
    %v2830 = vmul.f32 0.5, %v2829
    %v2831 = vsub.f32 1.5, %v2830
    %v2832 = vmul.f32 %v2827, %v2831
    %vm2833 = vweird.f32 %v2826
    %vm2834 = vweird.f32 %v2827
    %vm2835 = vmor %vm2833, %vm2834
    %v2836 = vsel %vm2835, %v2827, %v2832
    %v2837 = vmul.f32 %v2570, %v2836
    %v2838 = vmul.f32 %v2571, %v2836
    %v2839 = vmul.f32 %v2572, %v2836
    %v2840 = vmul.f32 %v2573, %v2836
    %v2841 = vmul.f32 %v2574, %v2836
    %v2842 = vmul.f32 %v2575, %v2836
    %v2843 = vmul.f32 %v2576, %v2836
    %v2844 = vmul.f32 %v2577, %v2836
    %v2845 = vmul.f32 %v2578, %v2836
    %v2846 = vmul.f32 %v2579, %v2836
    %v2847 = vmul.f32 %v2580, %v2836
    %v2848 = vmul.f32 %v2581, %v2836
    %v2849 = vmul.f32 %v2582, %v2836
    %v2850 = vmul.f32 %v2583, %v2836
    %v2851 = vmul.f32 %v2584, %v2836
    %v2852 = vmul.f32 %v2585, %v2836
    %v2853 = vmul.f32 %v2586, %v2836
    %v2854 = vmul.f32 %v2587, %v2836
    %v2855 = vmul.f32 %v2588, %v2836
    %v2856 = vmul.f32 %v2589, %v2836
    %v2857 = vmul.f32 %v2590, %v2836
    %v2858 = vmul.f32 %v2591, %v2836
    %v2859 = vmul.f32 %v2592, %v2836
    %v2860 = vmul.f32 %v2593, %v2836
    %v2861 = vmul.f32 %v2594, %v2836
    %v2862 = vmul.f32 %v2595, %v2836
    %v2863 = vmul.f32 %v2596, %v2836
    %v2864 = vmul.f32 %v2597, %v2836
    %v2865 = vmul.f32 %v2598, %v2836
    %v2866 = vmul.f32 %v2599, %v2836
    %v2867 = vmul.f32 %v2600, %v2836
    %v2868 = vmul.f32 %v2601, %v2836
    %v2869 = vmul.f32 %v2602, %v2836
    %v2870 = vmul.f32 %v2603, %v2836
    %v2871 = vmul.f32 %v2604, %v2836
    %v2872 = vmul.f32 %v2605, %v2836
    %v2873 = vmul.f32 %v2606, %v2836
    %v2874 = vmul.f32 %v2607, %v2836
    %v2875 = vmul.f32 %v2608, %v2836
    %v2876 = vmul.f32 %v2609, %v2836
    %v2877 = vmul.f32 %v2610, %v2836
    %v2878 = vmul.f32 %v2611, %v2836
    %v2879 = vmul.f32 %v2612, %v2836
    %v2880 = vmul.f32 %v2613, %v2836
    %v2881 = vmul.f32 %v2614, %v2836
    %v2882 = vmul.f32 %v2615, %v2836
    %v2883 = vmul.f32 %v2616, %v2836
    %v2884 = vmul.f32 %v2617, %v2836
    %v2885 = vmul.f32 %v2618, %v2836
    %v2886 = vmul.f32 %v2619, %v2836
    %v2887 = vmul.f32 %v2620, %v2836
    %v2888 = vmul.f32 %v2621, %v2836
    %v2889 = vmul.f32 %v2622, %v2836
    %v2890 = vmul.f32 %v2623, %v2836
    %v2891 = vmul.f32 %v2624, %v2836
    %v2892 = vmul.f32 %v2625, %v2836
    %v2893 = vmul.f32 %v2626, %v2836
    %v2894 = vmul.f32 %v2627, %v2836
    %v2895 = vmul.f32 %v2628, %v2836
    %v2896 = vmul.f32 %v2629, %v2836
    %v2897 = vmul.f32 %v2630, %v2836
    %v2898 = vmul.f32 %v2631, %v2836
    %v2899 = vmul.f32 %v2632, %v2836
    %v2900 = vmul.f32 %v2633, %v2836
    %v2901 = vmul.f32 %v2634, %v2836
    %v2902 = vmul.f32 %v2635, %v2836
    %v2903 = vmul.f32 %v2636, %v2836
    %v2904 = vmul.f32 %v2637, %v2836
    %v2905 = vmul.f32 %v2638, %v2836
    %v2906 = vmul.f32 %v2639, %v2836
    %v2907 = vmul.f32 %v2640, %v2836
    %v2908 = vmul.f32 %v2641, %v2836
    %v2909 = vmul.f32 %v2642, %v2836
    %v2910 = vmul.f32 %v2643, %v2836
    %v2911 = vmul.f32 %v2644, %v2836
    %v2912 = vmul.f32 %v2645, %v2836
    %v2913 = vmul.f32 %v2646, %v2836
    %v2914 = vmul.f32 %v2647, %v2836
    %v2915 = vmul.f32 %v2648, %v2836
    %v2916 = vmul.f32 %v2649, %v2836
    %v2917 = vmul.f32 %v2650, %v2836
    %v2918 = vmul.f32 %v2651, %v2836
    %v2919 = vmul.f32 %v2652, %v2836
    %v2920 = vmul.f32 %v2653, %v2836
    %v2921 = vmul.f32 %v2654, %v2836
    %v2922 = vmul.f32 %v2655, %v2836
    %v2923 = vmul.f32 %v2656, %v2836
    %v2924 = vmul.f32 %v2657, %v2836
    %v2925 = vmul.f32 %v2658, %v2836
    %v2926 = vmul.f32 %v2659, %v2836
    %v2927 = vmul.f32 %v2660, %v2836
    %v2928 = vmul.f32 %v2661, %v2836
    %v2929 = vmul.f32 %v2662, %v2836
    %v2930 = vmul.f32 %v2663, %v2836
    %v2931 = vmul.f32 %v2664, %v2836
    %v2932 = vmul.f32 %v2665, %v2836
    %v2933 = vmul.f32 %v2666, %v2836
    %v2934 = vmul.f32 %v2667, %v2836
    %v2935 = vmul.f32 %v2668, %v2836
    %v2936 = vmul.f32 %v2669, %v2836
    %v2937 = vmul.f32 %v2670, %v2836
    %v2938 = vmul.f32 %v2671, %v2836
    %v2939 = vmul.f32 %v2672, %v2836
    %v2940 = vmul.f32 %v2673, %v2836
    %v2941 = vmul.f32 %v2674, %v2836
    %v2942 = vmul.f32 %v2675, %v2836
    %v2943 = vmul.f32 %v2676, %v2836
    %v2944 = vmul.f32 %v2677, %v2836
    %v2945 = vmul.f32 %v2678, %v2836
    %v2946 = vmul.f32 %v2679, %v2836
    %v2947 = vmul.f32 %v2680, %v2836
    %v2948 = vmul.f32 %v2681, %v2836
    %v2949 = vmul.f32 %v2682, %v2836
    %v2950 = vmul.f32 %v2683, %v2836
    %v2951 = vmul.f32 %v2684, %v2836
    %v2952 = vmul.f32 %v2685, %v2836
    %v2953 = vmul.f32 %v2686, %v2836
    %v2954 = vmul.f32 %v2687, %v2836
    %v2955 = vmul.f32 %v2688, %v2836
    %v2956 = vmul.f32 %v2689, %v2836
    %v2957 = vmul.f32 %v2690, %v2836
    %v2958 = vmul.f32 %v2691, %v2836
    %v2959 = vmul.f32 %v2692, %v2836
    %v2960 = vmul.f32 %v2693, %v2836
    %v2961 = vmul.f32 %v2694, %v2836
    %v2962 = vmul.f32 %v2695, %v2836
    %v2963 = vmul.f32 %v2696, %v2836
    %v2964 = vmul.f32 %v2697, %v2836
    %v2965 = vmul.f32 %v2698, %v2836
    %v2966 = vmul.f32 %v2699, %v2836
    %v2967 = vmul.f32 %v2700, %v2836
    %v2968 = vmul.f32 %v2701, %v2836
    %v2969 = vmul.f32 %v2702, %v2836
    %v2970 = vmul.f32 %v2703, %v2836
    %v2971 = vmul.f32 %v2704, %v2836
    %v2972 = vmul.f32 %v2705, %v2836
    %v2973 = vmul.f32 %v2706, %v2836
    %v2974 = vmul.f32 %v2707, %v2836
    %v2975 = vmul.f32 %v2708, %v2836
    %v2976 = vmul.f32 %v2709, %v2836
    %v2977 = vmul.f32 %v2710, %v2836
    %v2978 = vmul.f32 %v2711, %v2836
    %v2979 = vmul.f32 %v2712, %v2836
    %v2980 = vmul.f32 %v2713, %v2836
    %v2981 = vmul.f32 %v2714, %v2836
    %v2982 = vmul.f32 %v2715, %v2836
    %v2983 = vmul.f32 %v2716, %v2836
    %v2984 = vmul.f32 %v2717, %v2836
    %v2985 = vmul.f32 %v2718, %v2836
    %v2986 = vmul.f32 %v2719, %v2836
    %v2987 = vmul.f32 %v2720, %v2836
    %v2988 = vmul.f32 %v2721, %v2836
    %v2989 = vmul.f32 %v2722, %v2836
    %v2990 = vmul.f32 %v2723, %v2836
    %v2991 = vmul.f32 %v2724, %v2836
    %v2992 = vmul.f32 %v2725, %v2836
    %v2993 = vmul.f32 %v2726, %v2836
    %v2994 = vmul.f32 %v2727, %v2836
    %v2995 = vmul.f32 %v2728, %v2836
    %v2996 = vmul.f32 %v2729, %v2836
    %v2997 = vmul.f32 %v2730, %v2836
    %v2998 = vmul.f32 %v2731, %v2836
    %v2999 = vmul.f32 %v2732, %v2836
    %v3000 = vmul.f32 %v2733, %v2836
    %v3001 = vmul.f32 %v2734, %v2836
    %v3002 = vmul.f32 %v2735, %v2836
    %v3003 = vmul.f32 %v2736, %v2836
    %v3004 = vmul.f32 %v2737, %v2836
    %v3005 = vmul.f32 %v2738, %v2836
    %v3006 = vmul.f32 %v2739, %v2836
    %v3007 = vmul.f32 %v2740, %v2836
    %v3008 = vmul.f32 %v2741, %v2836
    %v3009 = vmul.f32 %v2742, %v2836
    %v3010 = vmul.f32 %v2743, %v2836
    %v3011 = vmul.f32 %v2744, %v2836
    %v3012 = vmul.f32 %v2745, %v2836
    %v3013 = vmul.f32 %v2746, %v2836
    %v3014 = vmul.f32 %v2747, %v2836
    %v3015 = vmul.f32 %v2748, %v2836
    %v3016 = vmul.f32 %v2749, %v2836
    %v3017 = vmul.f32 %v2750, %v2836
    %v3018 = vmul.f32 %v2751, %v2836
    %v3019 = vmul.f32 %v2752, %v2836
    %v3020 = vmul.f32 %v2753, %v2836
    %v3021 = vmul.f32 %v2754, %v2836
    %v3022 = vmul.f32 %v2755, %v2836
    %v3023 = vmul.f32 %v2756, %v2836
    %v3024 = vmul.f32 %v2757, %v2836
    %v3025 = vmul.f32 %v2758, %v2836
    %v3026 = vmul.f32 %v2759, %v2836
    %v3027 = vmul.f32 %v2760, %v2836
    %v3028 = vmul.f32 %v2761, %v2836
    %v3029 = vmul.f32 %v2762, %v2836
    %v3030 = vmul.f32 %v2763, %v2836
    %v3031 = vmul.f32 %v2764, %v2836
    %v3032 = vmul.f32 %v2765, %v2836
    %v3033 = vmul.f32 %v2766, %v2836
    %v3034 = vmul.f32 %v2767, %v2836
    %v3035 = vmul.f32 %v2768, %v2836
    %v3036 = vmul.f32 %v2769, %v2836
    %v3037 = vmul.f32 %v2770, %v2836
    %v3038 = vmul.f32 %v2771, %v2836
    %v3039 = vmul.f32 %v2772, %v2836
    %v3040 = vmul.f32 %v2773, %v2836
    %v3041 = vmul.f32 %v2774, %v2836
    %v3042 = vmul.f32 %v2775, %v2836
    %v3043 = vmul.f32 %v2776, %v2836
    %v3044 = vmul.f32 %v2777, %v2836
    %v3045 = vmul.f32 %v2778, %v2836
    %v3046 = vmul.f32 %v2779, %v2836
    %v3047 = vmul.f32 %v2780, %v2836
    %v3048 = vmul.f32 %v2781, %v2836
    %v3049 = vmul.f32 %v2782, %v2836
    %v3050 = vmul.f32 %v2783, %v2836
    %v3051 = vmul.f32 %v2784, %v2836
    %v3052 = vmul.f32 %v2785, %v2836
    %v3053 = vmul.f32 %v2786, %v2836
    %v3054 = vmul.f32 %v2787, %v2836
    %v3055 = vmul.f32 %v2788, %v2836
    %v3056 = vmul.f32 %v2789, %v2836
    %v3057 = vmul.f32 %v2790, %v2836
    %v3058 = vmul.f32 %v2791, %v2836
    %v3059 = vmul.f32 %v2792, %v2836
    %v3060 = vmul.f32 %v2793, %v2836
    %v3061 = vmul.f32 %v2794, %v2836
    %v3062 = vmul.f32 %v2795, %v2836
    %v3063 = vmul.f32 %v2796, %v2836
    %v3064 = vmul.f32 %v2797, %v2836
    %v3065 = vmul.f32 %v2798, %v2836
    %v3066 = vmul.f32 %v2799, %v2836
    %v3067 = vmul.f32 %v2800, %v2836
    %v3068 = vmul.f32 %v2801, %v2836
    %v3069 = vmul.f32 %v2802, %v2836
    %v3070 = vmul.f32 %v2803, %v2836
    %v3071 = vmul.f32 %v2804, %v2836
    %v3072 = vmul.f32 %v2805, %v2836
    %v3073 = vmul.f32 %v2806, %v2836
    %v3074 = vmul.f32 %v2807, %v2836
    %v3075 = vmul.f32 %v2808, %v2836
    %v3076 = vmul.f32 %v2809, %v2836
    %v3077 = vmul.f32 %v2810, %v2836
    %v3078 = vmul.f32 %v2811, %v2836
    %v3079 = vmul.f32 %v2812, %v2836
    %v3080 = vmul.f32 %v2813, %v2836
    %v3081 = vmul.f32 %v2814, %v2836
    %v3082 = vmul.f32 %v2815, %v2836
    %v3083 = vmul.f32 %v2816, %v2836
    %v3084 = vmul.f32 %v2817, %v2836
    %v3085 = vmul.f32 %v2818, %v2836
    %v3086 = vmul.f32 %v2819, %v2836
    %v3087 = vmul.f32 %v2820, %v2836
    %v3088 = vmul.f32 %v2821, %v2836
    %v3089 = vmul.f32 %v2822, %v2836
    %v3090 = vmul.f32 %v2823, %v2836
    %v3091 = vmul.f32 %v2824, %v2836
    %v3092 = vmul.f32 %v2825, %v2836
    %v3093 = vld [vmem:[%s2] sm:$0x1]
    %v3095 = vperm.slane %v3093, 0
    %v3097 = vmul.f32 %v2837, %v3095
    %v3098 = vmul.f32 %v2838, %v3095
    %v3099 = vmul.f32 %v2839, %v3095
    %v3100 = vmul.f32 %v2840, %v3095
    %v3101 = vmul.f32 %v2841, %v3095
    %v3102 = vmul.f32 %v2842, %v3095
    %v3103 = vmul.f32 %v2843, %v3095
    %v3104 = vmul.f32 %v2844, %v3095
    %v3105 = vmul.f32 %v2845, %v3095
    %v3106 = vmul.f32 %v2846, %v3095
    %v3107 = vmul.f32 %v2847, %v3095
    %v3108 = vmul.f32 %v2848, %v3095
    %v3109 = vmul.f32 %v2849, %v3095
    %v3110 = vmul.f32 %v2850, %v3095
    %v3111 = vmul.f32 %v2851, %v3095
    %v3112 = vmul.f32 %v2852, %v3095
    %v3113 = vmul.f32 %v2853, %v3095
    %v3114 = vmul.f32 %v2854, %v3095
    %v3115 = vmul.f32 %v2855, %v3095
    %v3116 = vmul.f32 %v2856, %v3095
    %v3117 = vmul.f32 %v2857, %v3095
    %v3118 = vmul.f32 %v2858, %v3095
    %v3119 = vmul.f32 %v2859, %v3095
    %v3120 = vmul.f32 %v2860, %v3095
    %v3121 = vmul.f32 %v2861, %v3095
    %v3122 = vmul.f32 %v2862, %v3095
    %v3123 = vmul.f32 %v2863, %v3095
    %v3124 = vmul.f32 %v2864, %v3095
    %v3125 = vmul.f32 %v2865, %v3095
    %v3126 = vmul.f32 %v2866, %v3095
    %v3127 = vmul.f32 %v2867, %v3095
    %v3128 = vmul.f32 %v2868, %v3095
    %v3129 = vmul.f32 %v2869, %v3095
    %v3130 = vmul.f32 %v2870, %v3095
    %v3131 = vmul.f32 %v2871, %v3095
    %v3132 = vmul.f32 %v2872, %v3095
    %v3133 = vmul.f32 %v2873, %v3095
    %v3134 = vmul.f32 %v2874, %v3095
    %v3135 = vmul.f32 %v2875, %v3095
    %v3136 = vmul.f32 %v2876, %v3095
    %v3137 = vmul.f32 %v2877, %v3095
    %v3138 = vmul.f32 %v2878, %v3095
    %v3139 = vmul.f32 %v2879, %v3095
    %v3140 = vmul.f32 %v2880, %v3095
    %v3141 = vmul.f32 %v2881, %v3095
    %v3142 = vmul.f32 %v2882, %v3095
    %v3143 = vmul.f32 %v2883, %v3095
    %v3144 = vmul.f32 %v2884, %v3095
    %v3145 = vmul.f32 %v2885, %v3095
    %v3146 = vmul.f32 %v2886, %v3095
    %v3147 = vmul.f32 %v2887, %v3095
    %v3148 = vmul.f32 %v2888, %v3095
    %v3149 = vmul.f32 %v2889, %v3095
    %v3150 = vmul.f32 %v2890, %v3095
    %v3151 = vmul.f32 %v2891, %v3095
    %v3152 = vmul.f32 %v2892, %v3095
    %v3153 = vmul.f32 %v2893, %v3095
    %v3154 = vmul.f32 %v2894, %v3095
    %v3155 = vmul.f32 %v2895, %v3095
    %v3156 = vmul.f32 %v2896, %v3095
    %v3157 = vmul.f32 %v2897, %v3095
    %v3158 = vmul.f32 %v2898, %v3095
    %v3159 = vmul.f32 %v2899, %v3095
    %v3160 = vmul.f32 %v2900, %v3095
    %v3161 = vmul.f32 %v2901, %v3095
    %v3162 = vmul.f32 %v2902, %v3095
    %v3163 = vmul.f32 %v2903, %v3095
    %v3164 = vmul.f32 %v2904, %v3095
    %v3165 = vmul.f32 %v2905, %v3095
    %v3166 = vmul.f32 %v2906, %v3095
    %v3167 = vmul.f32 %v2907, %v3095
    %v3168 = vmul.f32 %v2908, %v3095
    %v3169 = vmul.f32 %v2909, %v3095
    %v3170 = vmul.f32 %v2910, %v3095
    %v3171 = vmul.f32 %v2911, %v3095
    %v3172 = vmul.f32 %v2912, %v3095
    %v3173 = vmul.f32 %v2913, %v3095
    %v3174 = vmul.f32 %v2914, %v3095
    %v3175 = vmul.f32 %v2915, %v3095
    %v3176 = vmul.f32 %v2916, %v3095
    %v3177 = vmul.f32 %v2917, %v3095
    %v3178 = vmul.f32 %v2918, %v3095
    %v3179 = vmul.f32 %v2919, %v3095
    %v3180 = vmul.f32 %v2920, %v3095
    %v3181 = vmul.f32 %v2921, %v3095
    %v3182 = vmul.f32 %v2922, %v3095
    %v3183 = vmul.f32 %v2923, %v3095
    %v3184 = vmul.f32 %v2924, %v3095
    %v3185 = vmul.f32 %v2925, %v3095
    %v3186 = vmul.f32 %v2926, %v3095
    %v3187 = vmul.f32 %v2927, %v3095
    %v3188 = vmul.f32 %v2928, %v3095
    %v3189 = vmul.f32 %v2929, %v3095
    %v3190 = vmul.f32 %v2930, %v3095
    %v3191 = vmul.f32 %v2931, %v3095
    %v3192 = vmul.f32 %v2932, %v3095
    %v3193 = vmul.f32 %v2933, %v3095
    %v3194 = vmul.f32 %v2934, %v3095
    %v3195 = vmul.f32 %v2935, %v3095
    %v3196 = vmul.f32 %v2936, %v3095
    %v3197 = vmul.f32 %v2937, %v3095
    %v3198 = vmul.f32 %v2938, %v3095
    %v3199 = vmul.f32 %v2939, %v3095
    %v3200 = vmul.f32 %v2940, %v3095
    %v3201 = vmul.f32 %v2941, %v3095
    %v3202 = vmul.f32 %v2942, %v3095
    %v3203 = vmul.f32 %v2943, %v3095
    %v3204 = vmul.f32 %v2944, %v3095
    %v3205 = vmul.f32 %v2945, %v3095
    %v3206 = vmul.f32 %v2946, %v3095
    %v3207 = vmul.f32 %v2947, %v3095
    %v3208 = vmul.f32 %v2948, %v3095
    %v3209 = vmul.f32 %v2949, %v3095
    %v3210 = vmul.f32 %v2950, %v3095
    %v3211 = vmul.f32 %v2951, %v3095
    %v3212 = vmul.f32 %v2952, %v3095
    %v3213 = vmul.f32 %v2953, %v3095
    %v3214 = vmul.f32 %v2954, %v3095
    %v3215 = vmul.f32 %v2955, %v3095
    %v3216 = vmul.f32 %v2956, %v3095
    %v3217 = vmul.f32 %v2957, %v3095
    %v3218 = vmul.f32 %v2958, %v3095
    %v3219 = vmul.f32 %v2959, %v3095
    %v3220 = vmul.f32 %v2960, %v3095
    %v3221 = vmul.f32 %v2961, %v3095
    %v3222 = vmul.f32 %v2962, %v3095
    %v3223 = vmul.f32 %v2963, %v3095
    %v3224 = vmul.f32 %v2964, %v3095
    %v3225 = vmul.f32 %v2965, %v3095
    %v3226 = vmul.f32 %v2966, %v3095
    %v3227 = vmul.f32 %v2967, %v3095
    %v3228 = vmul.f32 %v2968, %v3095
    %v3229 = vmul.f32 %v2969, %v3095
    %v3230 = vmul.f32 %v2970, %v3095
    %v3231 = vmul.f32 %v2971, %v3095
    %v3232 = vmul.f32 %v2972, %v3095
    %v3233 = vmul.f32 %v2973, %v3095
    %v3234 = vmul.f32 %v2974, %v3095
    %v3235 = vmul.f32 %v2975, %v3095
    %v3236 = vmul.f32 %v2976, %v3095
    %v3237 = vmul.f32 %v2977, %v3095
    %v3238 = vmul.f32 %v2978, %v3095
    %v3239 = vmul.f32 %v2979, %v3095
    %v3240 = vmul.f32 %v2980, %v3095
    %v3241 = vmul.f32 %v2981, %v3095
    %v3242 = vmul.f32 %v2982, %v3095
    %v3243 = vmul.f32 %v2983, %v3095
    %v3244 = vmul.f32 %v2984, %v3095
    %v3245 = vmul.f32 %v2985, %v3095
    %v3246 = vmul.f32 %v2986, %v3095
    %v3247 = vmul.f32 %v2987, %v3095
    %v3248 = vmul.f32 %v2988, %v3095
    %v3249 = vmul.f32 %v2989, %v3095
    %v3250 = vmul.f32 %v2990, %v3095
    %v3251 = vmul.f32 %v2991, %v3095
    %v3252 = vmul.f32 %v2992, %v3095
    %v3253 = vmul.f32 %v2993, %v3095
    %v3254 = vmul.f32 %v2994, %v3095
    %v3255 = vmul.f32 %v2995, %v3095
    %v3256 = vmul.f32 %v2996, %v3095
    %v3257 = vmul.f32 %v2997, %v3095
    %v3258 = vmul.f32 %v2998, %v3095
    %v3259 = vmul.f32 %v2999, %v3095
    %v3260 = vmul.f32 %v3000, %v3095
    %v3261 = vmul.f32 %v3001, %v3095
    %v3262 = vmul.f32 %v3002, %v3095
    %v3263 = vmul.f32 %v3003, %v3095
    %v3264 = vmul.f32 %v3004, %v3095
    %v3265 = vmul.f32 %v3005, %v3095
    %v3266 = vmul.f32 %v3006, %v3095
    %v3267 = vmul.f32 %v3007, %v3095
    %v3268 = vmul.f32 %v3008, %v3095
    %v3269 = vmul.f32 %v3009, %v3095
    %v3270 = vmul.f32 %v3010, %v3095
    %v3271 = vmul.f32 %v3011, %v3095
    %v3272 = vmul.f32 %v3012, %v3095
    %v3273 = vmul.f32 %v3013, %v3095
    %v3274 = vmul.f32 %v3014, %v3095
    %v3275 = vmul.f32 %v3015, %v3095
    %v3276 = vmul.f32 %v3016, %v3095
    %v3277 = vmul.f32 %v3017, %v3095
    %v3278 = vmul.f32 %v3018, %v3095
    %v3279 = vmul.f32 %v3019, %v3095
    %v3280 = vmul.f32 %v3020, %v3095
    %v3281 = vmul.f32 %v3021, %v3095
    %v3282 = vmul.f32 %v3022, %v3095
    %v3283 = vmul.f32 %v3023, %v3095
    %v3284 = vmul.f32 %v3024, %v3095
    %v3285 = vmul.f32 %v3025, %v3095
    %v3286 = vmul.f32 %v3026, %v3095
    %v3287 = vmul.f32 %v3027, %v3095
    %v3288 = vmul.f32 %v3028, %v3095
    %v3289 = vmul.f32 %v3029, %v3095
    %v3290 = vmul.f32 %v3030, %v3095
    %v3291 = vmul.f32 %v3031, %v3095
    %v3292 = vmul.f32 %v3032, %v3095
    %v3293 = vmul.f32 %v3033, %v3095
    %v3294 = vmul.f32 %v3034, %v3095
    %v3295 = vmul.f32 %v3035, %v3095
    %v3296 = vmul.f32 %v3036, %v3095
    %v3297 = vmul.f32 %v3037, %v3095
    %v3298 = vmul.f32 %v3038, %v3095
    %v3299 = vmul.f32 %v3039, %v3095
    %v3300 = vmul.f32 %v3040, %v3095
    %v3301 = vmul.f32 %v3041, %v3095
    %v3302 = vmul.f32 %v3042, %v3095
    %v3303 = vmul.f32 %v3043, %v3095
    %v3304 = vmul.f32 %v3044, %v3095
    %v3305 = vmul.f32 %v3045, %v3095
    %v3306 = vmul.f32 %v3046, %v3095
    %v3307 = vmul.f32 %v3047, %v3095
    %v3308 = vmul.f32 %v3048, %v3095
    %v3309 = vmul.f32 %v3049, %v3095
    %v3310 = vmul.f32 %v3050, %v3095
    %v3311 = vmul.f32 %v3051, %v3095
    %v3312 = vmul.f32 %v3052, %v3095
    %v3313 = vmul.f32 %v3053, %v3095
    %v3314 = vmul.f32 %v3054, %v3095
    %v3315 = vmul.f32 %v3055, %v3095
    %v3316 = vmul.f32 %v3056, %v3095
    %v3317 = vmul.f32 %v3057, %v3095
    %v3318 = vmul.f32 %v3058, %v3095
    %v3319 = vmul.f32 %v3059, %v3095
    %v3320 = vmul.f32 %v3060, %v3095
    %v3321 = vmul.f32 %v3061, %v3095
    %v3322 = vmul.f32 %v3062, %v3095
    %v3323 = vmul.f32 %v3063, %v3095
    %v3324 = vmul.f32 %v3064, %v3095
    %v3325 = vmul.f32 %v3065, %v3095
    %v3326 = vmul.f32 %v3066, %v3095
    %v3327 = vmul.f32 %v3067, %v3095
    %v3328 = vmul.f32 %v3068, %v3095
    %v3329 = vmul.f32 %v3069, %v3095
    %v3330 = vmul.f32 %v3070, %v3095
    %v3331 = vmul.f32 %v3071, %v3095
    %v3332 = vmul.f32 %v3072, %v3095
    %v3333 = vmul.f32 %v3073, %v3095
    %v3334 = vmul.f32 %v3074, %v3095
    %v3335 = vmul.f32 %v3075, %v3095
    %v3336 = vmul.f32 %v3076, %v3095
    %v3337 = vmul.f32 %v3077, %v3095
    %v3338 = vmul.f32 %v3078, %v3095
    %v3339 = vmul.f32 %v3079, %v3095
    %v3340 = vmul.f32 %v3080, %v3095
    %v3341 = vmul.f32 %v3081, %v3095
    %v3342 = vmul.f32 %v3082, %v3095
    %v3343 = vmul.f32 %v3083, %v3095
    %v3344 = vmul.f32 %v3084, %v3095
    %v3345 = vmul.f32 %v3085, %v3095
    %v3346 = vmul.f32 %v3086, %v3095
    %v3347 = vmul.f32 %v3087, %v3095
    %v3348 = vmul.f32 %v3088, %v3095
    %v3349 = vmul.f32 %v3089, %v3095
    %v3350 = vmul.f32 %v3090, %v3095
    %v3351 = vmul.f32 %v3091, %v3095
    %v3352 = vmul.f32 %v3092, %v3095
    %v3353 = vld [vmem:[%s3] sm:$0x1]
    %v3355 = vperm.slane %v3353, 0
    %v3357 = vadd.f32 %v3097, %v3355
    %v3358 = vadd.f32 %v3098, %v3355
    %v3359 = vadd.f32 %v3099, %v3355
    %v3360 = vadd.f32 %v3100, %v3355
    %v3361 = vadd.f32 %v3101, %v3355
    %v3362 = vadd.f32 %v3102, %v3355
    %v3363 = vadd.f32 %v3103, %v3355
    %v3364 = vadd.f32 %v3104, %v3355
    %v3365 = vadd.f32 %v3105, %v3355
    %v3366 = vadd.f32 %v3106, %v3355
    %v3367 = vadd.f32 %v3107, %v3355
    %v3368 = vadd.f32 %v3108, %v3355
    %v3369 = vadd.f32 %v3109, %v3355
    %v3370 = vadd.f32 %v3110, %v3355
    %v3371 = vadd.f32 %v3111, %v3355
    %v3372 = vadd.f32 %v3112, %v3355
    %v3373 = vadd.f32 %v3113, %v3355
    %v3374 = vadd.f32 %v3114, %v3355
    %v3375 = vadd.f32 %v3115, %v3355
    %v3376 = vadd.f32 %v3116, %v3355
    %v3377 = vadd.f32 %v3117, %v3355
    %v3378 = vadd.f32 %v3118, %v3355
    %v3379 = vadd.f32 %v3119, %v3355
    %v3380 = vadd.f32 %v3120, %v3355
    %v3381 = vadd.f32 %v3121, %v3355
    %v3382 = vadd.f32 %v3122, %v3355
    %v3383 = vadd.f32 %v3123, %v3355
    %v3384 = vadd.f32 %v3124, %v3355
    %v3385 = vadd.f32 %v3125, %v3355
    %v3386 = vadd.f32 %v3126, %v3355
    %v3387 = vadd.f32 %v3127, %v3355
    %v3388 = vadd.f32 %v3128, %v3355
    %v3389 = vadd.f32 %v3129, %v3355
    %v3390 = vadd.f32 %v3130, %v3355
    %v3391 = vadd.f32 %v3131, %v3355
    %v3392 = vadd.f32 %v3132, %v3355
    %v3393 = vadd.f32 %v3133, %v3355
    %v3394 = vadd.f32 %v3134, %v3355
    %v3395 = vadd.f32 %v3135, %v3355
    %v3396 = vadd.f32 %v3136, %v3355
    %v3397 = vadd.f32 %v3137, %v3355
    %v3398 = vadd.f32 %v3138, %v3355
    %v3399 = vadd.f32 %v3139, %v3355
    %v3400 = vadd.f32 %v3140, %v3355
    %v3401 = vadd.f32 %v3141, %v3355
    %v3402 = vadd.f32 %v3142, %v3355
    %v3403 = vadd.f32 %v3143, %v3355
    %v3404 = vadd.f32 %v3144, %v3355
    %v3405 = vadd.f32 %v3145, %v3355
    %v3406 = vadd.f32 %v3146, %v3355
    %v3407 = vadd.f32 %v3147, %v3355
    %v3408 = vadd.f32 %v3148, %v3355
    %v3409 = vadd.f32 %v3149, %v3355
    %v3410 = vadd.f32 %v3150, %v3355
    %v3411 = vadd.f32 %v3151, %v3355
    %v3412 = vadd.f32 %v3152, %v3355
    %v3413 = vadd.f32 %v3153, %v3355
    %v3414 = vadd.f32 %v3154, %v3355
    %v3415 = vadd.f32 %v3155, %v3355
    %v3416 = vadd.f32 %v3156, %v3355
    %v3417 = vadd.f32 %v3157, %v3355
    %v3418 = vadd.f32 %v3158, %v3355
    %v3419 = vadd.f32 %v3159, %v3355
    %v3420 = vadd.f32 %v3160, %v3355
    %v3421 = vadd.f32 %v3161, %v3355
    %v3422 = vadd.f32 %v3162, %v3355
    %v3423 = vadd.f32 %v3163, %v3355
    %v3424 = vadd.f32 %v3164, %v3355
    %v3425 = vadd.f32 %v3165, %v3355
    %v3426 = vadd.f32 %v3166, %v3355
    %v3427 = vadd.f32 %v3167, %v3355
    %v3428 = vadd.f32 %v3168, %v3355
    %v3429 = vadd.f32 %v3169, %v3355
    %v3430 = vadd.f32 %v3170, %v3355
    %v3431 = vadd.f32 %v3171, %v3355
    %v3432 = vadd.f32 %v3172, %v3355
    %v3433 = vadd.f32 %v3173, %v3355
    %v3434 = vadd.f32 %v3174, %v3355
    %v3435 = vadd.f32 %v3175, %v3355
    %v3436 = vadd.f32 %v3176, %v3355
    %v3437 = vadd.f32 %v3177, %v3355
    %v3438 = vadd.f32 %v3178, %v3355
    %v3439 = vadd.f32 %v3179, %v3355
    %v3440 = vadd.f32 %v3180, %v3355
    %v3441 = vadd.f32 %v3181, %v3355
    %v3442 = vadd.f32 %v3182, %v3355
    %v3443 = vadd.f32 %v3183, %v3355
    %v3444 = vadd.f32 %v3184, %v3355
    %v3445 = vadd.f32 %v3185, %v3355
    %v3446 = vadd.f32 %v3186, %v3355
    %v3447 = vadd.f32 %v3187, %v3355
    %v3448 = vadd.f32 %v3188, %v3355
    %v3449 = vadd.f32 %v3189, %v3355
    %v3450 = vadd.f32 %v3190, %v3355
    %v3451 = vadd.f32 %v3191, %v3355
    %v3452 = vadd.f32 %v3192, %v3355
    %v3453 = vadd.f32 %v3193, %v3355
    %v3454 = vadd.f32 %v3194, %v3355
    %v3455 = vadd.f32 %v3195, %v3355
    %v3456 = vadd.f32 %v3196, %v3355
    %v3457 = vadd.f32 %v3197, %v3355
    %v3458 = vadd.f32 %v3198, %v3355
    %v3459 = vadd.f32 %v3199, %v3355
    %v3460 = vadd.f32 %v3200, %v3355
    %v3461 = vadd.f32 %v3201, %v3355
    %v3462 = vadd.f32 %v3202, %v3355
    %v3463 = vadd.f32 %v3203, %v3355
    %v3464 = vadd.f32 %v3204, %v3355
    %v3465 = vadd.f32 %v3205, %v3355
    %v3466 = vadd.f32 %v3206, %v3355
    %v3467 = vadd.f32 %v3207, %v3355
    %v3468 = vadd.f32 %v3208, %v3355
    %v3469 = vadd.f32 %v3209, %v3355
    %v3470 = vadd.f32 %v3210, %v3355
    %v3471 = vadd.f32 %v3211, %v3355
    %v3472 = vadd.f32 %v3212, %v3355
    %v3473 = vadd.f32 %v3213, %v3355
    %v3474 = vadd.f32 %v3214, %v3355
    %v3475 = vadd.f32 %v3215, %v3355
    %v3476 = vadd.f32 %v3216, %v3355
    %v3477 = vadd.f32 %v3217, %v3355
    %v3478 = vadd.f32 %v3218, %v3355
    %v3479 = vadd.f32 %v3219, %v3355
    %v3480 = vadd.f32 %v3220, %v3355
    %v3481 = vadd.f32 %v3221, %v3355
    %v3482 = vadd.f32 %v3222, %v3355
    %v3483 = vadd.f32 %v3223, %v3355
    %v3484 = vadd.f32 %v3224, %v3355
    %v3485 = vadd.f32 %v3225, %v3355
    %v3486 = vadd.f32 %v3226, %v3355
    %v3487 = vadd.f32 %v3227, %v3355
    %v3488 = vadd.f32 %v3228, %v3355
    %v3489 = vadd.f32 %v3229, %v3355
    %v3490 = vadd.f32 %v3230, %v3355
    %v3491 = vadd.f32 %v3231, %v3355
    %v3492 = vadd.f32 %v3232, %v3355
    %v3493 = vadd.f32 %v3233, %v3355
    %v3494 = vadd.f32 %v3234, %v3355
    %v3495 = vadd.f32 %v3235, %v3355
    %v3496 = vadd.f32 %v3236, %v3355
    %v3497 = vadd.f32 %v3237, %v3355
    %v3498 = vadd.f32 %v3238, %v3355
    %v3499 = vadd.f32 %v3239, %v3355
    %v3500 = vadd.f32 %v3240, %v3355
    %v3501 = vadd.f32 %v3241, %v3355
    %v3502 = vadd.f32 %v3242, %v3355
    %v3503 = vadd.f32 %v3243, %v3355
    %v3504 = vadd.f32 %v3244, %v3355
    %v3505 = vadd.f32 %v3245, %v3355
    %v3506 = vadd.f32 %v3246, %v3355
    %v3507 = vadd.f32 %v3247, %v3355
    %v3508 = vadd.f32 %v3248, %v3355
    %v3509 = vadd.f32 %v3249, %v3355
    %v3510 = vadd.f32 %v3250, %v3355
    %v3511 = vadd.f32 %v3251, %v3355
    %v3512 = vadd.f32 %v3252, %v3355
    %v3513 = vadd.f32 %v3253, %v3355
    %v3514 = vadd.f32 %v3254, %v3355
    %v3515 = vadd.f32 %v3255, %v3355
    %v3516 = vadd.f32 %v3256, %v3355
    %v3517 = vadd.f32 %v3257, %v3355
    %v3518 = vadd.f32 %v3258, %v3355
    %v3519 = vadd.f32 %v3259, %v3355
    %v3520 = vadd.f32 %v3260, %v3355
    %v3521 = vadd.f32 %v3261, %v3355
    %v3522 = vadd.f32 %v3262, %v3355
    %v3523 = vadd.f32 %v3263, %v3355
    %v3524 = vadd.f32 %v3264, %v3355
    %v3525 = vadd.f32 %v3265, %v3355
    %v3526 = vadd.f32 %v3266, %v3355
    %v3527 = vadd.f32 %v3267, %v3355
    %v3528 = vadd.f32 %v3268, %v3355
    %v3529 = vadd.f32 %v3269, %v3355
    %v3530 = vadd.f32 %v3270, %v3355
    %v3531 = vadd.f32 %v3271, %v3355
    %v3532 = vadd.f32 %v3272, %v3355
    %v3533 = vadd.f32 %v3273, %v3355
    %v3534 = vadd.f32 %v3274, %v3355
    %v3535 = vadd.f32 %v3275, %v3355
    %v3536 = vadd.f32 %v3276, %v3355
    %v3537 = vadd.f32 %v3277, %v3355
    %v3538 = vadd.f32 %v3278, %v3355
    %v3539 = vadd.f32 %v3279, %v3355
    %v3540 = vadd.f32 %v3280, %v3355
    %v3541 = vadd.f32 %v3281, %v3355
    %v3542 = vadd.f32 %v3282, %v3355
    %v3543 = vadd.f32 %v3283, %v3355
    %v3544 = vadd.f32 %v3284, %v3355
    %v3545 = vadd.f32 %v3285, %v3355
    %v3546 = vadd.f32 %v3286, %v3355
    %v3547 = vadd.f32 %v3287, %v3355
    %v3548 = vadd.f32 %v3288, %v3355
    %v3549 = vadd.f32 %v3289, %v3355
    %v3550 = vadd.f32 %v3290, %v3355
    %v3551 = vadd.f32 %v3291, %v3355
    %v3552 = vadd.f32 %v3292, %v3355
    %v3553 = vadd.f32 %v3293, %v3355
    %v3554 = vadd.f32 %v3294, %v3355
    %v3555 = vadd.f32 %v3295, %v3355
    %v3556 = vadd.f32 %v3296, %v3355
    %v3557 = vadd.f32 %v3297, %v3355
    %v3558 = vadd.f32 %v3298, %v3355
    %v3559 = vadd.f32 %v3299, %v3355
    %v3560 = vadd.f32 %v3300, %v3355
    %v3561 = vadd.f32 %v3301, %v3355
    %v3562 = vadd.f32 %v3302, %v3355
    %v3563 = vadd.f32 %v3303, %v3355
    %v3564 = vadd.f32 %v3304, %v3355
    %v3565 = vadd.f32 %v3305, %v3355
    %v3566 = vadd.f32 %v3306, %v3355
    %v3567 = vadd.f32 %v3307, %v3355
    %v3568 = vadd.f32 %v3308, %v3355
    %v3569 = vadd.f32 %v3309, %v3355
    %v3570 = vadd.f32 %v3310, %v3355
    %v3571 = vadd.f32 %v3311, %v3355
    %v3572 = vadd.f32 %v3312, %v3355
    %v3573 = vadd.f32 %v3313, %v3355
    %v3574 = vadd.f32 %v3314, %v3355
    %v3575 = vadd.f32 %v3315, %v3355
    %v3576 = vadd.f32 %v3316, %v3355
    %v3577 = vadd.f32 %v3317, %v3355
    %v3578 = vadd.f32 %v3318, %v3355
    %v3579 = vadd.f32 %v3319, %v3355
    %v3580 = vadd.f32 %v3320, %v3355
    %v3581 = vadd.f32 %v3321, %v3355
    %v3582 = vadd.f32 %v3322, %v3355
    %v3583 = vadd.f32 %v3323, %v3355
    %v3584 = vadd.f32 %v3324, %v3355
    %v3585 = vadd.f32 %v3325, %v3355
    %v3586 = vadd.f32 %v3326, %v3355
    %v3587 = vadd.f32 %v3327, %v3355
    %v3588 = vadd.f32 %v3328, %v3355
    %v3589 = vadd.f32 %v3329, %v3355
    %v3590 = vadd.f32 %v3330, %v3355
    %v3591 = vadd.f32 %v3331, %v3355
    %v3592 = vadd.f32 %v3332, %v3355
    %v3593 = vadd.f32 %v3333, %v3355
    %v3594 = vadd.f32 %v3334, %v3355
    %v3595 = vadd.f32 %v3335, %v3355
    %v3596 = vadd.f32 %v3336, %v3355
    %v3597 = vadd.f32 %v3337, %v3355
    %v3598 = vadd.f32 %v3338, %v3355
    %v3599 = vadd.f32 %v3339, %v3355
    %v3600 = vadd.f32 %v3340, %v3355
    %v3601 = vadd.f32 %v3341, %v3355
    %v3602 = vadd.f32 %v3342, %v3355
    %v3603 = vadd.f32 %v3343, %v3355
    %v3604 = vadd.f32 %v3344, %v3355
    %v3605 = vadd.f32 %v3345, %v3355
    %v3606 = vadd.f32 %v3346, %v3355
    %v3607 = vadd.f32 %v3347, %v3355
    %v3608 = vadd.f32 %v3348, %v3355
    %v3609 = vadd.f32 %v3349, %v3355
    %v3610 = vadd.f32 %v3350, %v3355
    %v3611 = vadd.f32 %v3351, %v3355
    %v3612 = vadd.f32 %v3352, %v3355
    %v3613 = vmax.f32 %v3357, 0.0
    %v3614 = vmax.f32 %v3358, 0.0
    %v3615 = vmax.f32 %v3359, 0.0
    %v3616 = vmax.f32 %v3360, 0.0
    %v3617 = vmax.f32 %v3361, 0.0
    %v3618 = vmax.f32 %v3362, 0.0
    %v3619 = vmax.f32 %v3363, 0.0
    %v3620 = vmax.f32 %v3364, 0.0
    %v3621 = vmax.f32 %v3365, 0.0
    %v3622 = vmax.f32 %v3366, 0.0
    %v3623 = vmax.f32 %v3367, 0.0
    %v3624 = vmax.f32 %v3368, 0.0
    %v3625 = vmax.f32 %v3369, 0.0
    %v3626 = vmax.f32 %v3370, 0.0
    %v3627 = vmax.f32 %v3371, 0.0
    %v3628 = vmax.f32 %v3372, 0.0
    %v3629 = vmax.f32 %v3373, 0.0
    %v3630 = vmax.f32 %v3374, 0.0
    %v3631 = vmax.f32 %v3375, 0.0
    %v3632 = vmax.f32 %v3376, 0.0
    %v3633 = vmax.f32 %v3377, 0.0
    %v3634 = vmax.f32 %v3378, 0.0
    %v3635 = vmax.f32 %v3379, 0.0
    %v3636 = vmax.f32 %v3380, 0.0
    %v3637 = vmax.f32 %v3381, 0.0
    %v3638 = vmax.f32 %v3382, 0.0
    %v3639 = vmax.f32 %v3383, 0.0
    %v3640 = vmax.f32 %v3384, 0.0
    %v3641 = vmax.f32 %v3385, 0.0
    %v3642 = vmax.f32 %v3386, 0.0
    %v3643 = vmax.f32 %v3387, 0.0
    %v3644 = vmax.f32 %v3388, 0.0
    %v3645 = vmax.f32 %v3389, 0.0
    %v3646 = vmax.f32 %v3390, 0.0
    %v3647 = vmax.f32 %v3391, 0.0
    %v3648 = vmax.f32 %v3392, 0.0
    %v3649 = vmax.f32 %v3393, 0.0
    %v3650 = vmax.f32 %v3394, 0.0
    %v3651 = vmax.f32 %v3395, 0.0
    %v3652 = vmax.f32 %v3396, 0.0
    %v3653 = vmax.f32 %v3397, 0.0
    %v3654 = vmax.f32 %v3398, 0.0
    %v3655 = vmax.f32 %v3399, 0.0
    %v3656 = vmax.f32 %v3400, 0.0
    %v3657 = vmax.f32 %v3401, 0.0
    %v3658 = vmax.f32 %v3402, 0.0
    %v3659 = vmax.f32 %v3403, 0.0
    %v3660 = vmax.f32 %v3404, 0.0
    %v3661 = vmax.f32 %v3405, 0.0
    %v3662 = vmax.f32 %v3406, 0.0
    %v3663 = vmax.f32 %v3407, 0.0
    %v3664 = vmax.f32 %v3408, 0.0
    %v3665 = vmax.f32 %v3409, 0.0
    %v3666 = vmax.f32 %v3410, 0.0
    %v3667 = vmax.f32 %v3411, 0.0
    %v3668 = vmax.f32 %v3412, 0.0
    %v3669 = vmax.f32 %v3413, 0.0
    %v3670 = vmax.f32 %v3414, 0.0
    %v3671 = vmax.f32 %v3415, 0.0
    %v3672 = vmax.f32 %v3416, 0.0
    %v3673 = vmax.f32 %v3417, 0.0
    %v3674 = vmax.f32 %v3418, 0.0
    %v3675 = vmax.f32 %v3419, 0.0
    %v3676 = vmax.f32 %v3420, 0.0
    %v3677 = vmax.f32 %v3421, 0.0
    %v3678 = vmax.f32 %v3422, 0.0
    %v3679 = vmax.f32 %v3423, 0.0
    %v3680 = vmax.f32 %v3424, 0.0
    %v3681 = vmax.f32 %v3425, 0.0
    %v3682 = vmax.f32 %v3426, 0.0
    %v3683 = vmax.f32 %v3427, 0.0
    %v3684 = vmax.f32 %v3428, 0.0
    %v3685 = vmax.f32 %v3429, 0.0
    %v3686 = vmax.f32 %v3430, 0.0
    %v3687 = vmax.f32 %v3431, 0.0
    %v3688 = vmax.f32 %v3432, 0.0
    %v3689 = vmax.f32 %v3433, 0.0
    %v3690 = vmax.f32 %v3434, 0.0
    %v3691 = vmax.f32 %v3435, 0.0
    %v3692 = vmax.f32 %v3436, 0.0
    %v3693 = vmax.f32 %v3437, 0.0
    %v3694 = vmax.f32 %v3438, 0.0
    %v3695 = vmax.f32 %v3439, 0.0
    %v3696 = vmax.f32 %v3440, 0.0
    %v3697 = vmax.f32 %v3441, 0.0
    %v3698 = vmax.f32 %v3442, 0.0
    %v3699 = vmax.f32 %v3443, 0.0
    %v3700 = vmax.f32 %v3444, 0.0
    %v3701 = vmax.f32 %v3445, 0.0
    %v3702 = vmax.f32 %v3446, 0.0
    %v3703 = vmax.f32 %v3447, 0.0
    %v3704 = vmax.f32 %v3448, 0.0
    %v3705 = vmax.f32 %v3449, 0.0
    %v3706 = vmax.f32 %v3450, 0.0
    %v3707 = vmax.f32 %v3451, 0.0
    %v3708 = vmax.f32 %v3452, 0.0
    %v3709 = vmax.f32 %v3453, 0.0
    %v3710 = vmax.f32 %v3454, 0.0
    %v3711 = vmax.f32 %v3455, 0.0
    %v3712 = vmax.f32 %v3456, 0.0
    %v3713 = vmax.f32 %v3457, 0.0
    %v3714 = vmax.f32 %v3458, 0.0
    %v3715 = vmax.f32 %v3459, 0.0
    %v3716 = vmax.f32 %v3460, 0.0
    %v3717 = vmax.f32 %v3461, 0.0
    %v3718 = vmax.f32 %v3462, 0.0
    %v3719 = vmax.f32 %v3463, 0.0
    %v3720 = vmax.f32 %v3464, 0.0
    %v3721 = vmax.f32 %v3465, 0.0
    %v3722 = vmax.f32 %v3466, 0.0
    %v3723 = vmax.f32 %v3467, 0.0
    %v3724 = vmax.f32 %v3468, 0.0
    %v3725 = vmax.f32 %v3469, 0.0
    %v3726 = vmax.f32 %v3470, 0.0
    %v3727 = vmax.f32 %v3471, 0.0
    %v3728 = vmax.f32 %v3472, 0.0
    %v3729 = vmax.f32 %v3473, 0.0
    %v3730 = vmax.f32 %v3474, 0.0
    %v3731 = vmax.f32 %v3475, 0.0
    %v3732 = vmax.f32 %v3476, 0.0
    %v3733 = vmax.f32 %v3477, 0.0
    %v3734 = vmax.f32 %v3478, 0.0
    %v3735 = vmax.f32 %v3479, 0.0
    %v3736 = vmax.f32 %v3480, 0.0
    %v3737 = vmax.f32 %v3481, 0.0
    %v3738 = vmax.f32 %v3482, 0.0
    %v3739 = vmax.f32 %v3483, 0.0
    %v3740 = vmax.f32 %v3484, 0.0
    %v3741 = vmax.f32 %v3485, 0.0
    %v3742 = vmax.f32 %v3486, 0.0
    %v3743 = vmax.f32 %v3487, 0.0
    %v3744 = vmax.f32 %v3488, 0.0
    %v3745 = vmax.f32 %v3489, 0.0
    %v3746 = vmax.f32 %v3490, 0.0
    %v3747 = vmax.f32 %v3491, 0.0
    %v3748 = vmax.f32 %v3492, 0.0
    %v3749 = vmax.f32 %v3493, 0.0
    %v3750 = vmax.f32 %v3494, 0.0
    %v3751 = vmax.f32 %v3495, 0.0
    %v3752 = vmax.f32 %v3496, 0.0
    %v3753 = vmax.f32 %v3497, 0.0
    %v3754 = vmax.f32 %v3498, 0.0
    %v3755 = vmax.f32 %v3499, 0.0
    %v3756 = vmax.f32 %v3500, 0.0
    %v3757 = vmax.f32 %v3501, 0.0
    %v3758 = vmax.f32 %v3502, 0.0
    %v3759 = vmax.f32 %v3503, 0.0
    %v3760 = vmax.f32 %v3504, 0.0
    %v3761 = vmax.f32 %v3505, 0.0
    %v3762 = vmax.f32 %v3506, 0.0
    %v3763 = vmax.f32 %v3507, 0.0
    %v3764 = vmax.f32 %v3508, 0.0
    %v3765 = vmax.f32 %v3509, 0.0
    %v3766 = vmax.f32 %v3510, 0.0
    %v3767 = vmax.f32 %v3511, 0.0
    %v3768 = vmax.f32 %v3512, 0.0
    %v3769 = vmax.f32 %v3513, 0.0
    %v3770 = vmax.f32 %v3514, 0.0
    %v3771 = vmax.f32 %v3515, 0.0
    %v3772 = vmax.f32 %v3516, 0.0
    %v3773 = vmax.f32 %v3517, 0.0
    %v3774 = vmax.f32 %v3518, 0.0
    %v3775 = vmax.f32 %v3519, 0.0
    %v3776 = vmax.f32 %v3520, 0.0
    %v3777 = vmax.f32 %v3521, 0.0
    %v3778 = vmax.f32 %v3522, 0.0
    %v3779 = vmax.f32 %v3523, 0.0
    %v3780 = vmax.f32 %v3524, 0.0
    %v3781 = vmax.f32 %v3525, 0.0
    %v3782 = vmax.f32 %v3526, 0.0
    %v3783 = vmax.f32 %v3527, 0.0
    %v3784 = vmax.f32 %v3528, 0.0
    %v3785 = vmax.f32 %v3529, 0.0
    %v3786 = vmax.f32 %v3530, 0.0
    %v3787 = vmax.f32 %v3531, 0.0
    %v3788 = vmax.f32 %v3532, 0.0
    %v3789 = vmax.f32 %v3533, 0.0
    %v3790 = vmax.f32 %v3534, 0.0
    %v3791 = vmax.f32 %v3535, 0.0
    %v3792 = vmax.f32 %v3536, 0.0
    %v3793 = vmax.f32 %v3537, 0.0
    %v3794 = vmax.f32 %v3538, 0.0
    %v3795 = vmax.f32 %v3539, 0.0
    %v3796 = vmax.f32 %v3540, 0.0
    %v3797 = vmax.f32 %v3541, 0.0
    %v3798 = vmax.f32 %v3542, 0.0
    %v3799 = vmax.f32 %v3543, 0.0
    %v3800 = vmax.f32 %v3544, 0.0
    %v3801 = vmax.f32 %v3545, 0.0
    %v3802 = vmax.f32 %v3546, 0.0
    %v3803 = vmax.f32 %v3547, 0.0
    %v3804 = vmax.f32 %v3548, 0.0
    %v3805 = vmax.f32 %v3549, 0.0
    %v3806 = vmax.f32 %v3550, 0.0
    %v3807 = vmax.f32 %v3551, 0.0
    %v3808 = vmax.f32 %v3552, 0.0
    %v3809 = vmax.f32 %v3553, 0.0
    %v3810 = vmax.f32 %v3554, 0.0
    %v3811 = vmax.f32 %v3555, 0.0
    %v3812 = vmax.f32 %v3556, 0.0
    %v3813 = vmax.f32 %v3557, 0.0
    %v3814 = vmax.f32 %v3558, 0.0
    %v3815 = vmax.f32 %v3559, 0.0
    %v3816 = vmax.f32 %v3560, 0.0
    %v3817 = vmax.f32 %v3561, 0.0
    %v3818 = vmax.f32 %v3562, 0.0
    %v3819 = vmax.f32 %v3563, 0.0
    %v3820 = vmax.f32 %v3564, 0.0
    %v3821 = vmax.f32 %v3565, 0.0
    %v3822 = vmax.f32 %v3566, 0.0
    %v3823 = vmax.f32 %v3567, 0.0
    %v3824 = vmax.f32 %v3568, 0.0
    %v3825 = vmax.f32 %v3569, 0.0
    %v3826 = vmax.f32 %v3570, 0.0
    %v3827 = vmax.f32 %v3571, 0.0
    %v3828 = vmax.f32 %v3572, 0.0
    %v3829 = vmax.f32 %v3573, 0.0
    %v3830 = vmax.f32 %v3574, 0.0
    %v3831 = vmax.f32 %v3575, 0.0
    %v3832 = vmax.f32 %v3576, 0.0
    %v3833 = vmax.f32 %v3577, 0.0
    %v3834 = vmax.f32 %v3578, 0.0
    %v3835 = vmax.f32 %v3579, 0.0
    %v3836 = vmax.f32 %v3580, 0.0
    %v3837 = vmax.f32 %v3581, 0.0
    %v3838 = vmax.f32 %v3582, 0.0
    %v3839 = vmax.f32 %v3583, 0.0
    %v3840 = vmax.f32 %v3584, 0.0
    %v3841 = vmax.f32 %v3585, 0.0
    %v3842 = vmax.f32 %v3586, 0.0
    %v3843 = vmax.f32 %v3587, 0.0
    %v3844 = vmax.f32 %v3588, 0.0
    %v3845 = vmax.f32 %v3589, 0.0
    %v3846 = vmax.f32 %v3590, 0.0
    %v3847 = vmax.f32 %v3591, 0.0
    %v3848 = vmax.f32 %v3592, 0.0
    %v3849 = vmax.f32 %v3593, 0.0
    %v3850 = vmax.f32 %v3594, 0.0
    %v3851 = vmax.f32 %v3595, 0.0
    %v3852 = vmax.f32 %v3596, 0.0
    %v3853 = vmax.f32 %v3597, 0.0
    %v3854 = vmax.f32 %v3598, 0.0
    %v3855 = vmax.f32 %v3599, 0.0
    %v3856 = vmax.f32 %v3600, 0.0
    %v3857 = vmax.f32 %v3601, 0.0
    %v3858 = vmax.f32 %v3602, 0.0
    %v3859 = vmax.f32 %v3603, 0.0
    %v3860 = vmax.f32 %v3604, 0.0
    %v3861 = vmax.f32 %v3605, 0.0
    %v3862 = vmax.f32 %v3606, 0.0
    %v3863 = vmax.f32 %v3607, 0.0
    %v3864 = vmax.f32 %v3608, 0.0
    %v3865 = vmax.f32 %v3609, 0.0
    %v3866 = vmax.f32 %v3610, 0.0
    %v3867 = vmax.f32 %v3611, 0.0
    %v3868 = vmax.f32 %v3612, 0.0
    %v3869 = vpack.c.bf16 %v3613, %v3613
    %v3870 = vpack.c.bf16 %v3614, %v3614
    %v3871 = vpack.c.bf16 %v3615, %v3615
    %v3872 = vpack.c.bf16 %v3616, %v3616
    %v3873 = vpack.c.bf16 %v3617, %v3617
    %v3874 = vpack.c.bf16 %v3618, %v3618
    %v3875 = vpack.c.bf16 %v3619, %v3619
    %v3876 = vpack.c.bf16 %v3620, %v3620
    %v3877 = vpack.c.bf16 %v3621, %v3621
    %v3878 = vpack.c.bf16 %v3622, %v3622
    %v3879 = vpack.c.bf16 %v3623, %v3623
    %v3880 = vpack.c.bf16 %v3624, %v3624
    %v3881 = vpack.c.bf16 %v3625, %v3625
    %v3882 = vpack.c.bf16 %v3626, %v3626
    %v3883 = vpack.c.bf16 %v3627, %v3627
    %v3884 = vpack.c.bf16 %v3628, %v3628
    %v3885 = vpack.c.bf16 %v3629, %v3629
    %v3886 = vpack.c.bf16 %v3630, %v3630
    %v3887 = vpack.c.bf16 %v3631, %v3631
    %v3888 = vpack.c.bf16 %v3632, %v3632
    %v3889 = vpack.c.bf16 %v3633, %v3633
    %v3890 = vpack.c.bf16 %v3634, %v3634
    %v3891 = vpack.c.bf16 %v3635, %v3635
    %v3892 = vpack.c.bf16 %v3636, %v3636
    %v3893 = vpack.c.bf16 %v3637, %v3637
    %v3894 = vpack.c.bf16 %v3638, %v3638
    %v3895 = vpack.c.bf16 %v3639, %v3639
    %v3896 = vpack.c.bf16 %v3640, %v3640
    %v3897 = vpack.c.bf16 %v3641, %v3641
    %v3898 = vpack.c.bf16 %v3642, %v3642
    %v3899 = vpack.c.bf16 %v3643, %v3643
    %v3900 = vpack.c.bf16 %v3644, %v3644
    %v3901 = vpack.c.bf16 %v3645, %v3645
    %v3902 = vpack.c.bf16 %v3646, %v3646
    %v3903 = vpack.c.bf16 %v3647, %v3647
    %v3904 = vpack.c.bf16 %v3648, %v3648
    %v3905 = vpack.c.bf16 %v3649, %v3649
    %v3906 = vpack.c.bf16 %v3650, %v3650
    %v3907 = vpack.c.bf16 %v3651, %v3651
    %v3908 = vpack.c.bf16 %v3652, %v3652
    %v3909 = vpack.c.bf16 %v3653, %v3653
    %v3910 = vpack.c.bf16 %v3654, %v3654
    %v3911 = vpack.c.bf16 %v3655, %v3655
    %v3912 = vpack.c.bf16 %v3656, %v3656
    %v3913 = vpack.c.bf16 %v3657, %v3657
    %v3914 = vpack.c.bf16 %v3658, %v3658
    %v3915 = vpack.c.bf16 %v3659, %v3659
    %v3916 = vpack.c.bf16 %v3660, %v3660
    %v3917 = vpack.c.bf16 %v3661, %v3661
    %v3918 = vpack.c.bf16 %v3662, %v3662
    %v3919 = vpack.c.bf16 %v3663, %v3663
    %v3920 = vpack.c.bf16 %v3664, %v3664
    %v3921 = vpack.c.bf16 %v3665, %v3665
    %v3922 = vpack.c.bf16 %v3666, %v3666
    %v3923 = vpack.c.bf16 %v3667, %v3667
    %v3924 = vpack.c.bf16 %v3668, %v3668
    %v3925 = vpack.c.bf16 %v3669, %v3669
    %v3926 = vpack.c.bf16 %v3670, %v3670
    %v3927 = vpack.c.bf16 %v3671, %v3671
    %v3928 = vpack.c.bf16 %v3672, %v3672
    %v3929 = vpack.c.bf16 %v3673, %v3673
    %v3930 = vpack.c.bf16 %v3674, %v3674
    %v3931 = vpack.c.bf16 %v3675, %v3675
    %v3932 = vpack.c.bf16 %v3676, %v3676
    %v3933 = vpack.c.bf16 %v3677, %v3677
    %v3934 = vpack.c.bf16 %v3678, %v3678
    %v3935 = vpack.c.bf16 %v3679, %v3679
    %v3936 = vpack.c.bf16 %v3680, %v3680
    %v3937 = vpack.c.bf16 %v3681, %v3681
    %v3938 = vpack.c.bf16 %v3682, %v3682
    %v3939 = vpack.c.bf16 %v3683, %v3683
    %v3940 = vpack.c.bf16 %v3684, %v3684
    %v3941 = vpack.c.bf16 %v3685, %v3685
    %v3942 = vpack.c.bf16 %v3686, %v3686
    %v3943 = vpack.c.bf16 %v3687, %v3687
    %v3944 = vpack.c.bf16 %v3688, %v3688
    %v3945 = vpack.c.bf16 %v3689, %v3689
    %v3946 = vpack.c.bf16 %v3690, %v3690
    %v3947 = vpack.c.bf16 %v3691, %v3691
    %v3948 = vpack.c.bf16 %v3692, %v3692
    %v3949 = vpack.c.bf16 %v3693, %v3693
    %v3950 = vpack.c.bf16 %v3694, %v3694
    %v3951 = vpack.c.bf16 %v3695, %v3695
    %v3952 = vpack.c.bf16 %v3696, %v3696
    %v3953 = vpack.c.bf16 %v3697, %v3697
    %v3954 = vpack.c.bf16 %v3698, %v3698
    %v3955 = vpack.c.bf16 %v3699, %v3699
    %v3956 = vpack.c.bf16 %v3700, %v3700
    %v3957 = vpack.c.bf16 %v3701, %v3701
    %v3958 = vpack.c.bf16 %v3702, %v3702
    %v3959 = vpack.c.bf16 %v3703, %v3703
    %v3960 = vpack.c.bf16 %v3704, %v3704
    %v3961 = vpack.c.bf16 %v3705, %v3705
    %v3962 = vpack.c.bf16 %v3706, %v3706
    %v3963 = vpack.c.bf16 %v3707, %v3707
    %v3964 = vpack.c.bf16 %v3708, %v3708
    %v3965 = vpack.c.bf16 %v3709, %v3709
    %v3966 = vpack.c.bf16 %v3710, %v3710
    %v3967 = vpack.c.bf16 %v3711, %v3711
    %v3968 = vpack.c.bf16 %v3712, %v3712
    %v3969 = vpack.c.bf16 %v3713, %v3713
    %v3970 = vpack.c.bf16 %v3714, %v3714
    %v3971 = vpack.c.bf16 %v3715, %v3715
    %v3972 = vpack.c.bf16 %v3716, %v3716
    %v3973 = vpack.c.bf16 %v3717, %v3717
    %v3974 = vpack.c.bf16 %v3718, %v3718
    %v3975 = vpack.c.bf16 %v3719, %v3719
    %v3976 = vpack.c.bf16 %v3720, %v3720
    %v3977 = vpack.c.bf16 %v3721, %v3721
    %v3978 = vpack.c.bf16 %v3722, %v3722
    %v3979 = vpack.c.bf16 %v3723, %v3723
    %v3980 = vpack.c.bf16 %v3724, %v3724
    %v3981 = vpack.c.bf16 %v3725, %v3725
    %v3982 = vpack.c.bf16 %v3726, %v3726
    %v3983 = vpack.c.bf16 %v3727, %v3727
    %v3984 = vpack.c.bf16 %v3728, %v3728
    %v3985 = vpack.c.bf16 %v3729, %v3729
    %v3986 = vpack.c.bf16 %v3730, %v3730
    %v3987 = vpack.c.bf16 %v3731, %v3731
    %v3988 = vpack.c.bf16 %v3732, %v3732
    %v3989 = vpack.c.bf16 %v3733, %v3733
    %v3990 = vpack.c.bf16 %v3734, %v3734
    %v3991 = vpack.c.bf16 %v3735, %v3735
    %v3992 = vpack.c.bf16 %v3736, %v3736
    %v3993 = vpack.c.bf16 %v3737, %v3737
    %v3994 = vpack.c.bf16 %v3738, %v3738
    %v3995 = vpack.c.bf16 %v3739, %v3739
    %v3996 = vpack.c.bf16 %v3740, %v3740
    %v3997 = vpack.c.bf16 %v3741, %v3741
    %v3998 = vpack.c.bf16 %v3742, %v3742
    %v3999 = vpack.c.bf16 %v3743, %v3743
    %v4000 = vpack.c.bf16 %v3744, %v3744
    %v4001 = vpack.c.bf16 %v3745, %v3745
    %v4002 = vpack.c.bf16 %v3746, %v3746
    %v4003 = vpack.c.bf16 %v3747, %v3747
    %v4004 = vpack.c.bf16 %v3748, %v3748
    %v4005 = vpack.c.bf16 %v3749, %v3749
    %v4006 = vpack.c.bf16 %v3750, %v3750
    %v4007 = vpack.c.bf16 %v3751, %v3751
    %v4008 = vpack.c.bf16 %v3752, %v3752
    %v4009 = vpack.c.bf16 %v3753, %v3753
    %v4010 = vpack.c.bf16 %v3754, %v3754
    %v4011 = vpack.c.bf16 %v3755, %v3755
    %v4012 = vpack.c.bf16 %v3756, %v3756
    %v4013 = vpack.c.bf16 %v3757, %v3757
    %v4014 = vpack.c.bf16 %v3758, %v3758
    %v4015 = vpack.c.bf16 %v3759, %v3759
    %v4016 = vpack.c.bf16 %v3760, %v3760
    %v4017 = vpack.c.bf16 %v3761, %v3761
    %v4018 = vpack.c.bf16 %v3762, %v3762
    %v4019 = vpack.c.bf16 %v3763, %v3763
    %v4020 = vpack.c.bf16 %v3764, %v3764
    %v4021 = vpack.c.bf16 %v3765, %v3765
    %v4022 = vpack.c.bf16 %v3766, %v3766
    %v4023 = vpack.c.bf16 %v3767, %v3767
    %v4024 = vpack.c.bf16 %v3768, %v3768
    %v4025 = vpack.c.bf16 %v3769, %v3769
    %v4026 = vpack.c.bf16 %v3770, %v3770
    %v4027 = vpack.c.bf16 %v3771, %v3771
    %v4028 = vpack.c.bf16 %v3772, %v3772
    %v4029 = vpack.c.bf16 %v3773, %v3773
    %v4030 = vpack.c.bf16 %v3774, %v3774
    %v4031 = vpack.c.bf16 %v3775, %v3775
    %v4032 = vpack.c.bf16 %v3776, %v3776
    %v4033 = vpack.c.bf16 %v3777, %v3777
    %v4034 = vpack.c.bf16 %v3778, %v3778
    %v4035 = vpack.c.bf16 %v3779, %v3779
    %v4036 = vpack.c.bf16 %v3780, %v3780
    %v4037 = vpack.c.bf16 %v3781, %v3781
    %v4038 = vpack.c.bf16 %v3782, %v3782
    %v4039 = vpack.c.bf16 %v3783, %v3783
    %v4040 = vpack.c.bf16 %v3784, %v3784
    %v4041 = vpack.c.bf16 %v3785, %v3785
    %v4042 = vpack.c.bf16 %v3786, %v3786
    %v4043 = vpack.c.bf16 %v3787, %v3787
    %v4044 = vpack.c.bf16 %v3788, %v3788
    %v4045 = vpack.c.bf16 %v3789, %v3789
    %v4046 = vpack.c.bf16 %v3790, %v3790
    %v4047 = vpack.c.bf16 %v3791, %v3791
    %v4048 = vpack.c.bf16 %v3792, %v3792
    %v4049 = vpack.c.bf16 %v3793, %v3793
    %v4050 = vpack.c.bf16 %v3794, %v3794
    %v4051 = vpack.c.bf16 %v3795, %v3795
    %v4052 = vpack.c.bf16 %v3796, %v3796
    %v4053 = vpack.c.bf16 %v3797, %v3797
    %v4054 = vpack.c.bf16 %v3798, %v3798
    %v4055 = vpack.c.bf16 %v3799, %v3799
    %v4056 = vpack.c.bf16 %v3800, %v3800
    %v4057 = vpack.c.bf16 %v3801, %v3801
    %v4058 = vpack.c.bf16 %v3802, %v3802
    %v4059 = vpack.c.bf16 %v3803, %v3803
    %v4060 = vpack.c.bf16 %v3804, %v3804
    %v4061 = vpack.c.bf16 %v3805, %v3805
    %v4062 = vpack.c.bf16 %v3806, %v3806
    %v4063 = vpack.c.bf16 %v3807, %v3807
    %v4064 = vpack.c.bf16 %v3808, %v3808
    %v4065 = vpack.c.bf16 %v3809, %v3809
    %v4066 = vpack.c.bf16 %v3810, %v3810
    %v4067 = vpack.c.bf16 %v3811, %v3811
    %v4068 = vpack.c.bf16 %v3812, %v3812
    %v4069 = vpack.c.bf16 %v3813, %v3813
    %v4070 = vpack.c.bf16 %v3814, %v3814
    %v4071 = vpack.c.bf16 %v3815, %v3815
    %v4072 = vpack.c.bf16 %v3816, %v3816
    %v4073 = vpack.c.bf16 %v3817, %v3817
    %v4074 = vpack.c.bf16 %v3818, %v3818
    %v4075 = vpack.c.bf16 %v3819, %v3819
    %v4076 = vpack.c.bf16 %v3820, %v3820
    %v4077 = vpack.c.bf16 %v3821, %v3821
    %v4078 = vpack.c.bf16 %v3822, %v3822
    %v4079 = vpack.c.bf16 %v3823, %v3823
    %v4080 = vpack.c.bf16 %v3824, %v3824
    %v4081 = vpack.c.bf16 %v3825, %v3825
    %v4082 = vpack.c.bf16 %v3826, %v3826
    %v4083 = vpack.c.bf16 %v3827, %v3827
    %v4084 = vpack.c.bf16 %v3828, %v3828
    %v4085 = vpack.c.bf16 %v3829, %v3829
    %v4086 = vpack.c.bf16 %v3830, %v3830
    %v4087 = vpack.c.bf16 %v3831, %v3831
    %v4088 = vpack.c.bf16 %v3832, %v3832
    %v4089 = vpack.c.bf16 %v3833, %v3833
    %v4090 = vpack.c.bf16 %v3834, %v3834
    %v4091 = vpack.c.bf16 %v3835, %v3835
    %v4092 = vpack.c.bf16 %v3836, %v3836
    %v4093 = vpack.c.bf16 %v3837, %v3837
    %v4094 = vpack.c.bf16 %v3838, %v3838
    %v4095 = vpack.c.bf16 %v3839, %v3839
    %v4096 = vpack.c.bf16 %v3840, %v3840
    %v4097 = vpack.c.bf16 %v3841, %v3841
    %v4098 = vpack.c.bf16 %v3842, %v3842
    %v4099 = vpack.c.bf16 %v3843, %v3843
    %v4100 = vpack.c.bf16 %v3844, %v3844
    %v4101 = vpack.c.bf16 %v3845, %v3845
    %v4102 = vpack.c.bf16 %v3846, %v3846
    %v4103 = vpack.c.bf16 %v3847, %v3847
    %v4104 = vpack.c.bf16 %v3848, %v3848
    %v4105 = vpack.c.bf16 %v3849, %v3849
    %v4106 = vpack.c.bf16 %v3850, %v3850
    %v4107 = vpack.c.bf16 %v3851, %v3851
    %v4108 = vpack.c.bf16 %v3852, %v3852
    %v4109 = vpack.c.bf16 %v3853, %v3853
    %v4110 = vpack.c.bf16 %v3854, %v3854
    %v4111 = vpack.c.bf16 %v3855, %v3855
    %v4112 = vpack.c.bf16 %v3856, %v3856
    %v4113 = vpack.c.bf16 %v3857, %v3857
    %v4114 = vpack.c.bf16 %v3858, %v3858
    %v4115 = vpack.c.bf16 %v3859, %v3859
    %v4116 = vpack.c.bf16 %v3860, %v3860
    %v4117 = vpack.c.bf16 %v3861, %v3861
    %v4118 = vpack.c.bf16 %v3862, %v3862
    %v4119 = vpack.c.bf16 %v3863, %v3863
    %v4120 = vpack.c.bf16 %v3864, %v3864
    %v4121 = vpack.c.bf16 %v3865, %v3865
    %v4122 = vpack.c.bf16 %v3866, %v3866
    %v4123 = vpack.c.bf16 %v3867, %v3867
    %v4124 = vpack.c.bf16 %v3868, %v3868
    %4125 = vst [vmem:[#allocation7] sm:$0xf] %v3869
    %4126 = vst [vmem:[#allocation7 + $0x4] sm:$0xf] %v3870
    %4127 = vst [vmem:[#allocation7 + $0x8] sm:$0xf] %v3871
    %4128 = vst [vmem:[#allocation7 + $0xc] sm:$0xf] %v3872
    %4129 = vst [vmem:[#allocation7 + $0x10] sm:$0xf] %v3873
    %4130 = vst [vmem:[#allocation7 + $0x14] sm:$0xf] %v3874
    %4131 = vst [vmem:[#allocation7 + $0x18] sm:$0xf] %v3875
    %4132 = vst [vmem:[#allocation7 + $0x1c] sm:$0xf] %v3876
    %4133 = vst [vmem:[#allocation7 + $0x20] sm:$0xf] %v3877
    %4134 = vst [vmem:[#allocation7 + $0x24] sm:$0xf] %v3878
    %4135 = vst [vmem:[#allocation7 + $0x28] sm:$0xf] %v3879
    %4136 = vst [vmem:[#allocation7 + $0x2c] sm:$0xf] %v3880
    %4137 = vst [vmem:[#allocation7 + $0x30] sm:$0xf] %v3881
    %4138 = vst [vmem:[#allocation7 + $0x34] sm:$0xf] %v3882
    %4139 = vst [vmem:[#allocation7 + $0x38] sm:$0xf] %v3883
    %4140 = vst [vmem:[#allocation7 + $0x3c] sm:$0xf] %v3884
    %4141 = vst [vmem:[#allocation7 + $0x40] sm:$0xf] %v3885
    %4142 = vst [vmem:[#allocation7 + $0x44] sm:$0xf] %v3886
    %4143 = vst [vmem:[#allocation7 + $0x48] sm:$0xf] %v3887
    %4144 = vst [vmem:[#allocation7 + $0x4c] sm:$0xf] %v3888
    %4145 = vst [vmem:[#allocation7 + $0x50] sm:$0xf] %v3889
    %4146 = vst [vmem:[#allocation7 + $0x54] sm:$0xf] %v3890
    %4147 = vst [vmem:[#allocation7 + $0x58] sm:$0xf] %v3891
    %4148 = vst [vmem:[#allocation7 + $0x5c] sm:$0xf] %v3892
    %4149 = vst [vmem:[#allocation7 + $0x60] sm:$0xf] %v3893
    %4150 = vst [vmem:[#allocation7 + $0x64] sm:$0xf] %v3894
    %4151 = vst [vmem:[#allocation7 + $0x68] sm:$0xf] %v3895
    %4152 = vst [vmem:[#allocation7 + $0x6c] sm:$0xf] %v3896
    %4153 = vst [vmem:[#allocation7 + $0x70] sm:$0xf] %v3897
    %4154 = vst [vmem:[#allocation7 + $0x74] sm:$0xf] %v3898
    %4155 = vst [vmem:[#allocation7 + $0x78] sm:$0xf] %v3899
    %4156 = vst [vmem:[#allocation7 + $0x7c] sm:$0xf] %v3900
    %4157 = vst [vmem:[#allocation7 + $0x80] sm:$0xf] %v3901
    %4158 = vst [vmem:[#allocation7 + $0x84] sm:$0xf] %v3902
    %4159 = vst [vmem:[#allocation7 + $0x88] sm:$0xf] %v3903
    %4160 = vst [vmem:[#allocation7 + $0x8c] sm:$0xf] %v3904
    %4161 = vst [vmem:[#allocation7 + $0x90] sm:$0xf] %v3905
    %4162 = vst [vmem:[#allocation7 + $0x94] sm:$0xf] %v3906
    %4163 = vst [vmem:[#allocation7 + $0x98] sm:$0xf] %v3907
    %4164 = vst [vmem:[#allocation7 + $0x9c] sm:$0xf] %v3908
    %4165 = vst [vmem:[#allocation7 + $0xa0] sm:$0xf] %v3909
    %4166 = vst [vmem:[#allocation7 + $0xa4] sm:$0xf] %v3910
    %4167 = vst [vmem:[#allocation7 + $0xa8] sm:$0xf] %v3911
    %4168 = vst [vmem:[#allocation7 + $0xac] sm:$0xf] %v3912
    %4169 = vst [vmem:[#allocation7 + $0xb0] sm:$0xf] %v3913
    %4170 = vst [vmem:[#allocation7 + $0xb4] sm:$0xf] %v3914
    %4171 = vst [vmem:[#allocation7 + $0xb8] sm:$0xf] %v3915
    %4172 = vst [vmem:[#allocation7 + $0xbc] sm:$0xf] %v3916
    %4173 = vst [vmem:[#allocation7 + $0xc0] sm:$0xf] %v3917
    %4174 = vst [vmem:[#allocation7 + $0xc4] sm:$0xf] %v3918
    %4175 = vst [vmem:[#allocation7 + $0xc8] sm:$0xf] %v3919
    %4176 = vst [vmem:[#allocation7 + $0xcc] sm:$0xf] %v3920
    %4177 = vst [vmem:[#allocation7 + $0xd0] sm:$0xf] %v3921
    %4178 = vst [vmem:[#allocation7 + $0xd4] sm:$0xf] %v3922
    %4179 = vst [vmem:[#allocation7 + $0xd8] sm:$0xf] %v3923
    %4180 = vst [vmem:[#allocation7 + $0xdc] sm:$0xf] %v3924
    %4181 = vst [vmem:[#allocation7 + $0xe0] sm:$0xf] %v3925
    %4182 = vst [vmem:[#allocation7 + $0xe4] sm:$0xf] %v3926
    %4183 = vst [vmem:[#allocation7 + $0xe8] sm:$0xf] %v3927
    %4184 = vst [vmem:[#allocation7 + $0xec] sm:$0xf] %v3928
    %4185 = vst [vmem:[#allocation7 + $0xf0] sm:$0xf] %v3929
    %4186 = vst [vmem:[#allocation7 + $0xf4] sm:$0xf] %v3930
    %4187 = vst [vmem:[#allocation7 + $0xf8] sm:$0xf] %v3931
    %4188 = vst [vmem:[#allocation7 + $0xfc] sm:$0xf] %v3932
    %4189 = vst [vmem:[#allocation7 + $0x100] sm:$0xf] %v3933
    %4190 = vst [vmem:[#allocation7 + $0x104] sm:$0xf] %v3934
    %4191 = vst [vmem:[#allocation7 + $0x108] sm:$0xf] %v3935
    %4192 = vst [vmem:[#allocation7 + $0x10c] sm:$0xf] %v3936
    %4193 = vst [vmem:[#allocation7 + $0x110] sm:$0xf] %v3937
    %4194 = vst [vmem:[#allocation7 + $0x114] sm:$0xf] %v3938
    %4195 = vst [vmem:[#allocation7 + $0x118] sm:$0xf] %v3939
    %4196 = vst [vmem:[#allocation7 + $0x11c] sm:$0xf] %v3940
    %4197 = vst [vmem:[#allocation7 + $0x120] sm:$0xf] %v3941
    %4198 = vst [vmem:[#allocation7 + $0x124] sm:$0xf] %v3942
    %4199 = vst [vmem:[#allocation7 + $0x128] sm:$0xf] %v3943
    %4200 = vst [vmem:[#allocation7 + $0x12c] sm:$0xf] %v3944
    %4201 = vst [vmem:[#allocation7 + $0x130] sm:$0xf] %v3945
    %4202 = vst [vmem:[#allocation7 + $0x134] sm:$0xf] %v3946
    %4203 = vst [vmem:[#allocation7 + $0x138] sm:$0xf] %v3947
    %4204 = vst [vmem:[#allocation7 + $0x13c] sm:$0xf] %v3948
    %4205 = vst [vmem:[#allocation7 + $0x140] sm:$0xf] %v3949
    %4206 = vst [vmem:[#allocation7 + $0x144] sm:$0xf] %v3950
    %4207 = vst [vmem:[#allocation7 + $0x148] sm:$0xf] %v3951
    %4208 = vst [vmem:[#allocation7 + $0x14c] sm:$0xf] %v3952
    %4209 = vst [vmem:[#allocation7 + $0x150] sm:$0xf] %v3953
    %4210 = vst [vmem:[#allocation7 + $0x154] sm:$0xf] %v3954
    %4211 = vst [vmem:[#allocation7 + $0x158] sm:$0xf] %v3955
    %4212 = vst [vmem:[#allocation7 + $0x15c] sm:$0xf] %v3956
    %4213 = vst [vmem:[#allocation7 + $0x160] sm:$0xf] %v3957
    %4214 = vst [vmem:[#allocation7 + $0x164] sm:$0xf] %v3958
    %4215 = vst [vmem:[#allocation7 + $0x168] sm:$0xf] %v3959
    %4216 = vst [vmem:[#allocation7 + $0x16c] sm:$0xf] %v3960
    %4217 = vst [vmem:[#allocation7 + $0x170] sm:$0xf] %v3961
    %4218 = vst [vmem:[#allocation7 + $0x174] sm:$0xf] %v3962
    %4219 = vst [vmem:[#allocation7 + $0x178] sm:$0xf] %v3963
    %4220 = vst [vmem:[#allocation7 + $0x17c] sm:$0xf] %v3964
    %4221 = vst [vmem:[#allocation7 + $0x180] sm:$0xf] %v3965
    %4222 = vst [vmem:[#allocation7 + $0x184] sm:$0xf] %v3966
    %4223 = vst [vmem:[#allocation7 + $0x188] sm:$0xf] %v3967
    %4224 = vst [vmem:[#allocation7 + $0x18c] sm:$0xf] %v3968
    %4225 = vst [vmem:[#allocation7 + $0x190] sm:$0xf] %v3969
    %4226 = vst [vmem:[#allocation7 + $0x194] sm:$0xf] %v3970
    %4227 = vst [vmem:[#allocation7 + $0x198] sm:$0xf] %v3971
    %4228 = vst [vmem:[#allocation7 + $0x19c] sm:$0xf] %v3972
    %4229 = vst [vmem:[#allocation7 + $0x1a0] sm:$0xf] %v3973
    %4230 = vst [vmem:[#allocation7 + $0x1a4] sm:$0xf] %v3974
    %4231 = vst [vmem:[#allocation7 + $0x1a8] sm:$0xf] %v3975
    %4232 = vst [vmem:[#allocation7 + $0x1ac] sm:$0xf] %v3976
    %4233 = vst [vmem:[#allocation7 + $0x1b0] sm:$0xf] %v3977
    %4234 = vst [vmem:[#allocation7 + $0x1b4] sm:$0xf] %v3978
    %4235 = vst [vmem:[#allocation7 + $0x1b8] sm:$0xf] %v3979
    %4236 = vst [vmem:[#allocation7 + $0x1bc] sm:$0xf] %v3980
    %4237 = vst [vmem:[#allocation7 + $0x1c0] sm:$0xf] %v3981
    %4238 = vst [vmem:[#allocation7 + $0x1c4] sm:$0xf] %v3982
    %4239 = vst [vmem:[#allocation7 + $0x1c8] sm:$0xf] %v3983
    %4240 = vst [vmem:[#allocation7 + $0x1cc] sm:$0xf] %v3984
    %4241 = vst [vmem:[#allocation7 + $0x1d0] sm:$0xf] %v3985
    %4242 = vst [vmem:[#allocation7 + $0x1d4] sm:$0xf] %v3986
    %4243 = vst [vmem:[#allocation7 + $0x1d8] sm:$0xf] %v3987
    %4244 = vst [vmem:[#allocation7 + $0x1dc] sm:$0xf] %v3988
    %4245 = vst [vmem:[#allocation7 + $0x1e0] sm:$0xf] %v3989
    %4246 = vst [vmem:[#allocation7 + $0x1e4] sm:$0xf] %v3990
    %4247 = vst [vmem:[#allocation7 + $0x1e8] sm:$0xf] %v3991
    %4248 = vst [vmem:[#allocation7 + $0x1ec] sm:$0xf] %v3992
    %4249 = vst [vmem:[#allocation7 + $0x1f0] sm:$0xf] %v3993
    %4250 = vst [vmem:[#allocation7 + $0x1f4] sm:$0xf] %v3994
    %4251 = vst [vmem:[#allocation7 + $0x1f8] sm:$0xf] %v3995
    %4252 = vst [vmem:[#allocation7 + $0x1fc] sm:$0xf] %v3996
    %4253 = vst [vmem:[#allocation7 + $0x200] sm:$0xf] %v3997
    %4254 = vst [vmem:[#allocation7 + $0x204] sm:$0xf] %v3998
    %4255 = vst [vmem:[#allocation7 + $0x208] sm:$0xf] %v3999
    %4256 = vst [vmem:[#allocation7 + $0x20c] sm:$0xf] %v4000
    %4257 = vst [vmem:[#allocation7 + $0x210] sm:$0xf] %v4001
    %4258 = vst [vmem:[#allocation7 + $0x214] sm:$0xf] %v4002
    %4259 = vst [vmem:[#allocation7 + $0x218] sm:$0xf] %v4003
    %4260 = vst [vmem:[#allocation7 + $0x21c] sm:$0xf] %v4004
    %4261 = vst [vmem:[#allocation7 + $0x220] sm:$0xf] %v4005
    %4262 = vst [vmem:[#allocation7 + $0x224] sm:$0xf] %v4006
    %4263 = vst [vmem:[#allocation7 + $0x228] sm:$0xf] %v4007
    %4264 = vst [vmem:[#allocation7 + $0x22c] sm:$0xf] %v4008
    %4265 = vst [vmem:[#allocation7 + $0x230] sm:$0xf] %v4009
    %4266 = vst [vmem:[#allocation7 + $0x234] sm:$0xf] %v4010
    %4267 = vst [vmem:[#allocation7 + $0x238] sm:$0xf] %v4011
    %4268 = vst [vmem:[#allocation7 + $0x23c] sm:$0xf] %v4012
    %4269 = vst [vmem:[#allocation7 + $0x240] sm:$0xf] %v4013
    %4270 = vst [vmem:[#allocation7 + $0x244] sm:$0xf] %v4014
    %4271 = vst [vmem:[#allocation7 + $0x248] sm:$0xf] %v4015
    %4272 = vst [vmem:[#allocation7 + $0x24c] sm:$0xf] %v4016
    %4273 = vst [vmem:[#allocation7 + $0x250] sm:$0xf] %v4017
    %4274 = vst [vmem:[#allocation7 + $0x254] sm:$0xf] %v4018
    %4275 = vst [vmem:[#allocation7 + $0x258] sm:$0xf] %v4019
    %4276 = vst [vmem:[#allocation7 + $0x25c] sm:$0xf] %v4020
    %4277 = vst [vmem:[#allocation7 + $0x260] sm:$0xf] %v4021
    %4278 = vst [vmem:[#allocation7 + $0x264] sm:$0xf] %v4022
    %4279 = vst [vmem:[#allocation7 + $0x268] sm:$0xf] %v4023
    %4280 = vst [vmem:[#allocation7 + $0x26c] sm:$0xf] %v4024
    %4281 = vst [vmem:[#allocation7 + $0x270] sm:$0xf] %v4025
    %4282 = vst [vmem:[#allocation7 + $0x274] sm:$0xf] %v4026
    %4283 = vst [vmem:[#allocation7 + $0x278] sm:$0xf] %v4027
    %4284 = vst [vmem:[#allocation7 + $0x27c] sm:$0xf] %v4028
    %4285 = vst [vmem:[#allocation7 + $0x280] sm:$0xf] %v4029
    %4286 = vst [vmem:[#allocation7 + $0x284] sm:$0xf] %v4030
    %4287 = vst [vmem:[#allocation7 + $0x288] sm:$0xf] %v4031
    %4288 = vst [vmem:[#allocation7 + $0x28c] sm:$0xf] %v4032
    %4289 = vst [vmem:[#allocation7 + $0x290] sm:$0xf] %v4033
    %4290 = vst [vmem:[#allocation7 + $0x294] sm:$0xf] %v4034
    %4291 = vst [vmem:[#allocation7 + $0x298] sm:$0xf] %v4035
    %4292 = vst [vmem:[#allocation7 + $0x29c] sm:$0xf] %v4036
    %4293 = vst [vmem:[#allocation7 + $0x2a0] sm:$0xf] %v4037
    %4294 = vst [vmem:[#allocation7 + $0x2a4] sm:$0xf] %v4038
    %4295 = vst [vmem:[#allocation7 + $0x2a8] sm:$0xf] %v4039
    %4296 = vst [vmem:[#allocation7 + $0x2ac] sm:$0xf] %v4040
    %4297 = vst [vmem:[#allocation7 + $0x2b0] sm:$0xf] %v4041
    %4298 = vst [vmem:[#allocation7 + $0x2b4] sm:$0xf] %v4042
    %4299 = vst [vmem:[#allocation7 + $0x2b8] sm:$0xf] %v4043
    %4300 = vst [vmem:[#allocation7 + $0x2bc] sm:$0xf] %v4044
    %4301 = vst [vmem:[#allocation7 + $0x2c0] sm:$0xf] %v4045
    %4302 = vst [vmem:[#allocation7 + $0x2c4] sm:$0xf] %v4046
    %4303 = vst [vmem:[#allocation7 + $0x2c8] sm:$0xf] %v4047
    %4304 = vst [vmem:[#allocation7 + $0x2cc] sm:$0xf] %v4048
    %4305 = vst [vmem:[#allocation7 + $0x2d0] sm:$0xf] %v4049
    %4306 = vst [vmem:[#allocation7 + $0x2d4] sm:$0xf] %v4050
    %4307 = vst [vmem:[#allocation7 + $0x2d8] sm:$0xf] %v4051
    %4308 = vst [vmem:[#allocation7 + $0x2dc] sm:$0xf] %v4052
    %4309 = vst [vmem:[#allocation7 + $0x2e0] sm:$0xf] %v4053
    %4310 = vst [vmem:[#allocation7 + $0x2e4] sm:$0xf] %v4054
    %4311 = vst [vmem:[#allocation7 + $0x2e8] sm:$0xf] %v4055
    %4312 = vst [vmem:[#allocation7 + $0x2ec] sm:$0xf] %v4056
    %4313 = vst [vmem:[#allocation7 + $0x2f0] sm:$0xf] %v4057
    %4314 = vst [vmem:[#allocation7 + $0x2f4] sm:$0xf] %v4058
    %4315 = vst [vmem:[#allocation7 + $0x2f8] sm:$0xf] %v4059
    %4316 = vst [vmem:[#allocation7 + $0x2fc] sm:$0xf] %v4060
    %4317 = vst [vmem:[#allocation7 + $0x300] sm:$0xf] %v4061
    %4318 = vst [vmem:[#allocation7 + $0x304] sm:$0xf] %v4062
    %4319 = vst [vmem:[#allocation7 + $0x308] sm:$0xf] %v4063
    %4320 = vst [vmem:[#allocation7 + $0x30c] sm:$0xf] %v4064
    %4321 = vst [vmem:[#allocation7 + $0x310] sm:$0xf] %v4065
    %4322 = vst [vmem:[#allocation7 + $0x314] sm:$0xf] %v4066
    %4323 = vst [vmem:[#allocation7 + $0x318] sm:$0xf] %v4067
    %4324 = vst [vmem:[#allocation7 + $0x31c] sm:$0xf] %v4068
    %4325 = vst [vmem:[#allocation7 + $0x320] sm:$0xf] %v4069
    %4326 = vst [vmem:[#allocation7 + $0x324] sm:$0xf] %v4070
    %4327 = vst [vmem:[#allocation7 + $0x328] sm:$0xf] %v4071
    %4328 = vst [vmem:[#allocation7 + $0x32c] sm:$0xf] %v4072
    %4329 = vst [vmem:[#allocation7 + $0x330] sm:$0xf] %v4073
    %4330 = vst [vmem:[#allocation7 + $0x334] sm:$0xf] %v4074
    %4331 = vst [vmem:[#allocation7 + $0x338] sm:$0xf] %v4075
    %4332 = vst [vmem:[#allocation7 + $0x33c] sm:$0xf] %v4076
    %4333 = vst [vmem:[#allocation7 + $0x340] sm:$0xf] %v4077
    %4334 = vst [vmem:[#allocation7 + $0x344] sm:$0xf] %v4078
    %4335 = vst [vmem:[#allocation7 + $0x348] sm:$0xf] %v4079
    %4336 = vst [vmem:[#allocation7 + $0x34c] sm:$0xf] %v4080
    %4337 = vst [vmem:[#allocation7 + $0x350] sm:$0xf] %v4081
    %4338 = vst [vmem:[#allocation7 + $0x354] sm:$0xf] %v4082
    %4339 = vst [vmem:[#allocation7 + $0x358] sm:$0xf] %v4083
    %4340 = vst [vmem:[#allocation7 + $0x35c] sm:$0xf] %v4084
    %4341 = vst [vmem:[#allocation7 + $0x360] sm:$0xf] %v4085
    %4342 = vst [vmem:[#allocation7 + $0x364] sm:$0xf] %v4086
    %4343 = vst [vmem:[#allocation7 + $0x368] sm:$0xf] %v4087
    %4344 = vst [vmem:[#allocation7 + $0x36c] sm:$0xf] %v4088
    %4345 = vst [vmem:[#allocation7 + $0x370] sm:$0xf] %v4089
    %4346 = vst [vmem:[#allocation7 + $0x374] sm:$0xf] %v4090
    %4347 = vst [vmem:[#allocation7 + $0x378] sm:$0xf] %v4091
    %4348 = vst [vmem:[#allocation7 + $0x37c] sm:$0xf] %v4092
    %4349 = vst [vmem:[#allocation7 + $0x380] sm:$0xf] %v4093
    %4350 = vst [vmem:[#allocation7 + $0x384] sm:$0xf] %v4094
    %4351 = vst [vmem:[#allocation7 + $0x388] sm:$0xf] %v4095
    %4352 = vst [vmem:[#allocation7 + $0x38c] sm:$0xf] %v4096
    %4353 = vst [vmem:[#allocation7 + $0x390] sm:$0xf] %v4097
    %4354 = vst [vmem:[#allocation7 + $0x394] sm:$0xf] %v4098
    %4355 = vst [vmem:[#allocation7 + $0x398] sm:$0xf] %v4099
    %4356 = vst [vmem:[#allocation7 + $0x39c] sm:$0xf] %v4100
    %4357 = vst [vmem:[#allocation7 + $0x3a0] sm:$0xf] %v4101
    %4358 = vst [vmem:[#allocation7 + $0x3a4] sm:$0xf] %v4102
    %4359 = vst [vmem:[#allocation7 + $0x3a8] sm:$0xf] %v4103
    %4360 = vst [vmem:[#allocation7 + $0x3ac] sm:$0xf] %v4104
    %4361 = vst [vmem:[#allocation7 + $0x3b0] sm:$0xf] %v4105
    %4362 = vst [vmem:[#allocation7 + $0x3b4] sm:$0xf] %v4106
    %4363 = vst [vmem:[#allocation7 + $0x3b8] sm:$0xf] %v4107
    %4364 = vst [vmem:[#allocation7 + $0x3bc] sm:$0xf] %v4108
    %4365 = vst [vmem:[#allocation7 + $0x3c0] sm:$0xf] %v4109
    %4366 = vst [vmem:[#allocation7 + $0x3c4] sm:$0xf] %v4110
    %4367 = vst [vmem:[#allocation7 + $0x3c8] sm:$0xf] %v4111
    %4368 = vst [vmem:[#allocation7 + $0x3cc] sm:$0xf] %v4112
    %4369 = vst [vmem:[#allocation7 + $0x3d0] sm:$0xf] %v4113
    %4370 = vst [vmem:[#allocation7 + $0x3d4] sm:$0xf] %v4114
    %4371 = vst [vmem:[#allocation7 + $0x3d8] sm:$0xf] %v4115
    %4372 = vst [vmem:[#allocation7 + $0x3dc] sm:$0xf] %v4116
    %4373 = vst [vmem:[#allocation7 + $0x3e0] sm:$0xf] %v4117
    %4374 = vst [vmem:[#allocation7 + $0x3e4] sm:$0xf] %v4118
    %4375 = vst [vmem:[#allocation7 + $0x3e8] sm:$0xf] %v4119
    %4376 = vst [vmem:[#allocation7 + $0x3ec] sm:$0xf] %v4120
    %4377 = vst [vmem:[#allocation7 + $0x3f0] sm:$0xf] %v4121
    %4378 = vst [vmem:[#allocation7 + $0x3f4] sm:$0xf] %v4122
    %4379 = vst [vmem:[#allocation7 + $0x3f8] sm:$0xf] %v4123
    %4380 = vst [vmem:[#allocation7 + $0x3fc] sm:$0xf] %v4124
    // Predicated region
    $region26: #{tpu_custom_call.1} parent=1 // pred_check
      _
    $region27: #{tpu_custom_call.1} parent=1 // pred_check_branch
      %4382 = sbr.rel (0) target = $region29
    $region28: #{tpu_custom_call.1} parent=1 // pred_region
      %4384 = vsyncadd [#allocation4], 0
      %s4385 = sshll.u32 [#allocation7], 4
      %s4386 = int_to_ptr.vmem [resolvable:$true] %s4385
      %s4387 = sshll.u32 %s4, 4
      %s4388 = int_to_ptr.hbm [resolvable:$true] %s4387
      %4393 = dma.vmem_to_hbm [thread:$0]  %s4386, 16384, %s4388, [#allocation4], 64, 64, 4
    $region29: #{tpu_custom_call.1} parent=1 // pred_fallthru
      _
    // Predicated region
    $region30: #{tpu_custom_call.1} parent=1 // pred_check
      _
    $region31: #{tpu_custom_call.1} parent=1 // pred_check_branch
      %4395 = sbr.rel (0) target = $region33
    $region32: #{tpu_custom_call.1} parent=1 // pred_region
      %4397 = dma.done [#allocation4], 16384
    $region33: #{tpu_custom_call.1} parent=1 // pred_fallthru
      _
    %4398 = vsyncpa [#allocation3], 1
    %4399 = vsyncpa [#allocation6], 1
    %4400 = vsyncpa [#allocation4], 1

</llo_original>
